<compile_context>
chip_gen: v6e
topology: v6e:2x2x1
jax: 0.10.0
libtpu: 0.0.40
codegen_flags: <defaults>
</compile_context>

<pallas_src>
import jax
import jax.numpy as jnp
from jax import lax
from jax.experimental import pallas as pl
from jax.experimental.pallas import tpu as pltpu

# ----------------------- small QWen config -----------------------
VOCAB = 150
VOCAB_PAD = 256                       # padded to a multiple of 128 (lane-dense logits)
HIDDEN = 256                          # config.hidden_size
NUM_HEADS = 2                         # config.num_attention_heads
HEAD_DIM = HIDDEN // NUM_HEADS        # 128  (real QWen head_dim)
INTERMEDIATE_CFG = 512                # config.intermediate_size
MLP_INTER = INTERMEDIATE_CFG // 2     # QWenMLP uses intermediate_size // 2
NUM_LAYERS = 2                        # config.num_hidden_layers
SEQ = 8
EPS = 1e-6                            # config.layer_norm_epsilon
ROPE_THETA = 10000.0
SCALE = HEAD_DIM ** -0.5


def _rmsnorm(x, w):
    var = jnp.mean(x * x, axis=-1, keepdims=True)
    return x * lax.rsqrt(var + EPS) * w


# ----------------------- fused Pallas kernel -----------------------
def qwen_fused_kernel(h_ref, cos_ref, sin_ref,
                      ln1_ref, wqkv_ref, bqkv_ref, wo_ref,
                      ln2_ref, wgu_ref, wd_ref,
                      lnf_ref, lmw_ref,
                      logits_ref):
    h = h_ref[...]                                   # (S, H) f32 hidden carry
    cos = cos_ref[...]                               # (S, D)  [cos | cos]
    sin = sin_ref[...]                               # (S, D)  sign-baked [-sin | sin]

    # causal additive mask — layer-invariant, built once per call
    row = lax.broadcasted_iota(jnp.int32, (SEQ, SEQ), 0)
    col = lax.broadcasted_iota(jnp.int32, (SEQ, SEQ), 1)
    neg = jnp.where(col <= row, 0.0, -1e30).astype(jnp.float32)

    def rope(x):                                     # x: (S, D); rotate-half via XLU roll
        return x * cos + pltpu.roll(x, HEAD_DIM // 2, 1) * sin

    for l in range(NUM_LAYERS):                      # static unroll (2 layers)
        residual = h

        # --- ln_1 + packed QKV projection (c_attn, bias=True): one MXU push ---
        xn = _rmsnorm(h, ln1_ref[l])
        qkv = jnp.dot(xn.astype(jnp.bfloat16), wqkv_ref[l],
                      preferred_element_type=jnp.float32) + bqkv_ref[l]   # (S, 3H) f32

        # --- per-head causal attention; all slices 128-lane aligned ---
        ctx_parts = []
        for n in range(NUM_HEADS):
            q = rope(qkv[:, n * HEAD_DIM:(n + 1) * HEAD_DIM])
            k = rope(qkv[:, HIDDEN + n * HEAD_DIM:HIDDEN + (n + 1) * HEAD_DIM])
            v = qkv[:, 2 * HIDDEN + n * HEAD_DIM:2 * HIDDEN + (n + 1) * HEAD_DIM]

            s = lax.dot_general(q, k, (((1,), (1,)), ((), ())),
                                preferred_element_type=jnp.float32) * SCALE + neg
            s = s - jnp.max(s, axis=-1, keepdims=True)
            p = jnp.exp(s)
            # approx reciprocal rides the EUP slot; ~1e-3 rel. unnormalization is
            # acceptable for inference parity.
            p = p * pl.reciprocal(jnp.sum(p, axis=-1, keepdims=True), approx=True)
            ctx_parts.append(jnp.dot(p, v, preferred_element_type=jnp.float32))

        ctx = jnp.concatenate(ctx_parts, axis=1)     # (S, H) lane-dense context

        # --- attention output projection (c_proj, no bias): single H-contraction ---
        attn = jnp.dot(ctx.astype(jnp.bfloat16), wo_ref[l],
                       preferred_element_type=jnp.float32)
        h1 = residual + attn

        # --- ln_2 + fused gate|up MLP + down projection + residual ---
        xn2 = _rmsnorm(h1, ln2_ref[l])
        gu = jnp.dot(xn2.astype(jnp.bfloat16), wgu_ref[l],
                     preferred_element_type=jnp.float32)                  # (S, 2*I)
        gate = gu[:, :MLP_INTER]
        up = gu[:, MLP_INTER:]
        act = gate * jax.nn.sigmoid(gate) * up                            # SiluAndMul
        h = h1 + jnp.dot(act.astype(jnp.bfloat16), wd_ref[l],
                         preferred_element_type=jnp.float32)

    # --- ln_f + lm_head (lane-dense padded-vocab logits) ---
    xf = _rmsnorm(h, lnf_ref[...])
    logits_ref[...] = jnp.dot(xf.astype(jnp.bfloat16), lmw_ref[...],
                              preferred_element_type=jnp.float32)


# ----------------------- wrapper -----------------------
def fused_qwen(hidden, cos_full, sin_signed, p):
    # No grid: every operand is a single full-array VMEM block (total ~2 MiB),
    # far below the default scoped-VMEM limit on all generations.
    return pl.pallas_call(
        qwen_fused_kernel,
        out_shape=jax.ShapeDtypeStruct((SEQ, VOCAB_PAD), jnp.float32),
    )(hidden, cos_full, sin_signed,
      p["ln1"], p["wqkv"], p["bqkv"], p["wo"],
      p["ln2"], p["wgu"], p["wd"],
      p["ln_f"], p["lm_head"])


def qwen_forward(input_ids, positions, params):
    # embedding lookup (wte) — gather, plain-JAX glue
    hidden = params["wte"][input_ids].astype(jnp.float32)                 # (S, H)

    # rotary tables (neox rotate-half); sign baked into sin so the in-kernel
    # rotation is a single XLU roll + two VPU multiplies.
    inv_freq = 1.0 / (ROPE_THETA ** (jnp.arange(0, HEAD_DIM, 2, dtype=jnp.float32)
                                     / HEAD_DIM))
    freqs = positions.astype(jnp.float32)[:, None] * inv_freq[None, :]    # (S, D/2)
    cos = jnp.cos(freqs)
    sin = jnp.sin(freqs)
    cos_full = jnp.concatenate([cos, cos], axis=-1)                       # (S, D)
    sin_signed = jnp.concatenate([-sin, sin], axis=-1)                    # (S, D)

    return fused_qwen(hidden, cos_full, sin_signed, params)


# ----------------------- deterministic parameter init -----------------------
def init_params(key):
    keys = jax.random.split(key, 2 + NUM_LAYERS)

    def rnd(k, shape, scale=0.02):
        return scale * jax.random.normal(k, shape, dtype=jnp.float32)

    lm_head = rnd(keys[1], (HIDDEN, VOCAB_PAD))
    # zero padded-vocab columns so pad logits are exactly 0 (downstream sampling
    # must still mask/ignore ids >= VOCAB).
    vocab_mask = (jnp.arange(VOCAB_PAD) < VOCAB).astype(jnp.float32)
    lm_head = lm_head * vocab_mask[None, :]

    stacks = {k: [] for k in ("wqkv", "bqkv", "wo", "wgu", "wd")}
    for i in range(NUM_LAYERS):
        ks = jax.random.split(keys[2 + i], 5)
        stacks["wqkv"].append(rnd(ks[0], (HIDDEN, 3 * HIDDEN)))   # [q | k | v], head-major
        stacks["bqkv"].append(rnd(ks[1], (1, 3 * HIDDEN)))
        stacks["wo"].append(rnd(ks[2], (HIDDEN, HIDDEN)))
        stacks["wgu"].append(rnd(ks[3], (HIDDEN, 2 * MLP_INTER))) # [gate | up]
        stacks["wd"].append(rnd(ks[4], (MLP_INTER, HIDDEN)))

    params = {
        "wte": rnd(keys[0], (VOCAB_PAD, HIDDEN)),
        "lm_head": lm_head.astype(jnp.bfloat16),
        "ln_f": jnp.ones((1, HIDDEN), jnp.float32),
        "ln1": jnp.ones((NUM_LAYERS, 1, HIDDEN), jnp.float32),
        "ln2": jnp.ones((NUM_LAYERS, 1, HIDDEN), jnp.float32),
    }
    for name, vals in stacks.items():
        arr = jnp.stack(vals, axis=0)
        if name != "bqkv":
            arr = arr.astype(jnp.bfloat16)     # MXU-only operands in bf16
        params[name] = arr
    return params


if __name__ == "__main__":
    root = jax.random.PRNGKey(0)
    k_params, k_ids = jax.random.split(root)

    params = init_params(k_params)
    input_ids = jax.random.randint(k_ids, (SEQ,), 0, VOCAB, dtype=jnp.int32)
    positions = jnp.arange(SEQ, dtype=jnp.int32)

    logits = jax.jit(qwen_forward)(input_ids, positions, params)
    logits = jax.block_until_ready(logits)

    assert logits.shape == (SEQ, VOCAB_PAD) and logits.dtype == jnp.float32
    assert bool(jnp.all(jnp.isfinite(logits)))
    print("KERNEL_OK")
</pallas_src>

<mosaic_0001>
module attributes {stable_mosaic.version = 11 : i64} {
  func.func @qwen_fused_kernel(%arg0: memref<8x256xf32, #tpu.memory_space<vmem>>, %arg1: memref<8x128xf32, #tpu.memory_space<vmem>>, %arg2: memref<8x128xf32, #tpu.memory_space<vmem>>, %arg3: memref<2x1x256xf32, #tpu.memory_space<vmem>>, %arg4: memref<2x256x768xbf16, #tpu.memory_space<vmem>>, %arg5: memref<2x1x768xf32, #tpu.memory_space<vmem>>, %arg6: memref<2x256x256xbf16, #tpu.memory_space<vmem>>, %arg7: memref<2x1x256xf32, #tpu.memory_space<vmem>>, %arg8: memref<2x256x512xbf16, #tpu.memory_space<vmem>>, %arg9: memref<2x256x256xbf16, #tpu.memory_space<vmem>>, %arg10: memref<1x256xf32, #tpu.memory_space<vmem>>, %arg11: memref<256x256xbf16, #tpu.memory_space<vmem>>, %arg12: memref<8x256xf32, #tpu.memory_space<vmem>>) attributes {dimension_semantics = [], scalar_prefetch = 0 : i64, scratch_operands = 0 : i64, tpu.core_type = #tpu.core_type<tc>} {
    %c0 = arith.constant 0 : index
    %c0_0 = arith.constant 0 : index
    %0 = vector.load %arg0[%c0, %c0_0] : memref<8x256xf32, #tpu.memory_space<vmem>>, vector<8x256xf32>
    %c0_1 = arith.constant 0 : index
    %c0_2 = arith.constant 0 : index
    %1 = vector.load %arg1[%c0_1, %c0_2] : memref<8x128xf32, #tpu.memory_space<vmem>>, vector<8x128xf32>
    %c0_3 = arith.constant 0 : index
    %c0_4 = arith.constant 0 : index
    %2 = vector.load %arg2[%c0_3, %c0_4] : memref<8x128xf32, #tpu.memory_space<vmem>>, vector<8x128xf32>
    %3 = tpu.iota {dimensions = array<i32: 0>} : vector<8x8xi32>
    %4 = tpu.iota {dimensions = array<i32: 1>} : vector<8x8xi32>
    %5 = arith.cmpi sle, %4, %3 : vector<8x8xi32>
    %cst = arith.constant 0.000000e+00 : f32
    %cst_5 = arith.constant -1.000000e+30 : f32
    %6 = vector.broadcast %cst : f32 to vector<8x8xf32>
    %7 = vector.broadcast %cst_5 : f32 to vector<8x8xf32>
    %8 = arith.select %5, %6, %7 : vector<8x8xi1>, vector<8x8xf32>
    %c0_6 = arith.constant 0 : index
    %c0_7 = arith.constant 0 : index
    %c0_8 = arith.constant 0 : index
    %9 = vector.load %arg3[%c0_6, %c0_7, %c0_8] : memref<2x1x256xf32, #tpu.memory_space<vmem>>, vector<1x1x256xf32>
    %10 = vector.shape_cast %9 : vector<1x1x256xf32> to vector<1x256xf32>
    %11 = arith.mulf %0, %0 : vector<8x256xf32>
    %cst_9 = arith.constant dense<0.000000e+00> : vector<8xf32>
    %12 = vector.multi_reduction <add>, %11, %cst_9 [1] : vector<8x256xf32> to vector<8xf32>
    %13 = vector.shape_cast %12 : vector<8xf32> to vector<8x1xf32>
    %cst_10 = arith.constant 2.560000e+02 : f32
    %14 = vector.broadcast %cst_10 : f32 to vector<8x1xf32>
    %15 = arith.divf %13, %14 : vector<8x1xf32>
    %cst_11 = arith.constant 9.99999997E-7 : f32
    %16 = vector.broadcast %cst_11 : f32 to vector<8x1xf32>
    %17 = arith.addf %15, %16 : vector<8x1xf32>
    %18 = math.rsqrt %17 : vector<8x1xf32>
    %19 = vector.broadcast %18 : vector<8x1xf32> to vector<8x256xf32>
    %20 = arith.mulf %0, %19 : vector<8x256xf32>
    %21 = vector.broadcast %10 : vector<1x256xf32> to vector<8x256xf32>
    %22 = arith.mulf %20, %21 : vector<8x256xf32>
    %23 = arith.truncf %22 : vector<8x256xf32> to vector<8x256xbf16>
    %c0_12 = arith.constant 0 : index
    %c0_13 = arith.constant 0 : index
    %c0_14 = arith.constant 0 : index
    %24 = vector.load %arg4[%c0_12, %c0_13, %c0_14] : memref<2x256x768xbf16, #tpu.memory_space<vmem>>, vector<1x256x768xbf16>
    %25 = vector.shape_cast %24 : vector<1x256x768xbf16> to vector<256x768xbf16>
    %cst_15 = arith.constant dense<0.000000e+00> : vector<8x768xf32>
    %26 = tpu.matmul %23, %25, %cst_15 {dimension_numbers = #tpu.dot_dimension_numbers<[1], [0], [0], [1], [0, 0, 1, 1], [], []>} : vector<8x256xbf16>, vector<256x768xbf16>, vector<8x768xf32> -> vector<8x768xf32>
    %c0_16 = arith.constant 0 : index
    %c0_17 = arith.constant 0 : index
    %c0_18 = arith.constant 0 : index
    %27 = vector.load %arg5[%c0_16, %c0_17, %c0_18] : memref<2x1x768xf32, #tpu.memory_space<vmem>>, vector<1x1x768xf32>
    %28 = vector.shape_cast %27 : vector<1x1x768xf32> to vector<1x768xf32>
    %29 = vector.broadcast %28 : vector<1x768xf32> to vector<8x768xf32>
    %30 = arith.addf %26, %29 : vector<8x768xf32>
    %31 = vector.extract_strided_slice %30 {offsets = [0, 0], sizes = [8, 128], strides = [1, 1]} : vector<8x768xf32> to vector<8x128xf32>
    %32 = arith.mulf %31, %1 : vector<8x128xf32>
    %c64_i32 = arith.constant 64 : i32
    %33 = tpu.dynamic_rotate %31 by %c64_i32 dim 1 : vector<8x128xf32>, i32 -> vector<8x128xf32>
    %34 = arith.mulf %33, %2 : vector<8x128xf32>
    %35 = arith.addf %32, %34 : vector<8x128xf32>
    %36 = vector.extract_strided_slice %30 {offsets = [0, 256], sizes = [8, 128], strides = [1, 1]} : vector<8x768xf32> to vector<8x128xf32>
    %37 = arith.mulf %36, %1 : vector<8x128xf32>
    %c64_i32_19 = arith.constant 64 : i32
    %38 = tpu.dynamic_rotate %36 by %c64_i32_19 dim 1 : vector<8x128xf32>, i32 -> vector<8x128xf32>
    %39 = arith.mulf %38, %2 : vector<8x128xf32>
    %40 = arith.addf %37, %39 : vector<8x128xf32>
    %41 = vector.extract_strided_slice %30 {offsets = [0, 512], sizes = [8, 128], strides = [1, 1]} : vector<8x768xf32> to vector<8x128xf32>
    %cst_20 = arith.constant dense<0.000000e+00> : vector<8x8xf32>
    %42 = tpu.matmul %35, %40, %cst_20 {dimension_numbers = #tpu.dot_dimension_numbers<[1], [1], [0], [0], [0, 0, 1, 0], [], []>} : vector<8x128xf32>, vector<8x128xf32>, vector<8x8xf32> -> vector<8x8xf32>
    %cst_21 = arith.constant 0.0883883461 : f32
    %43 = vector.broadcast %cst_21 : f32 to vector<8x8xf32>
    %44 = arith.mulf %42, %43 : vector<8x8xf32>
    %45 = arith.addf %44, %8 : vector<8x8xf32>
    %cst_22 = arith.constant dense<0xFF800000> : vector<8xf32>
    %46 = vector.multi_reduction <maximumf>, %45, %cst_22 [1] : vector<8x8xf32> to vector<8xf32>
    %47 = vector.shape_cast %46 : vector<8xf32> to vector<8x1xf32>
    %48 = vector.broadcast %47 : vector<8x1xf32> to vector<8x8xf32>
    %49 = arith.subf %45, %48 : vector<8x8xf32>
    %50 = math.exp %49 : vector<8x8xf32>
    %cst_23 = arith.constant dense<0.000000e+00> : vector<8xf32>
    %51 = vector.multi_reduction <add>, %50, %cst_23 [1] : vector<8x8xf32> to vector<8xf32>
    %52 = vector.shape_cast %51 : vector<8xf32> to vector<8x1xf32>
    %53 = tpu.reciprocal %52 {approx = true} : vector<8x1xf32> -> vector<8x1xf32>
    %54 = vector.broadcast %53 : vector<8x1xf32> to vector<8x8xf32>
    %55 = arith.mulf %50, %54 : vector<8x8xf32>
    %cst_24 = arith.constant dense<0.000000e+00> : vector<8x128xf32>
    %56 = tpu.matmul %55, %41, %cst_24 {dimension_numbers = #tpu.dot_dimension_numbers<[1], [0], [0], [1], [0, 0, 1, 1], [], []>} : vector<8x8xf32>, vector<8x128xf32>, vector<8x128xf32> -> vector<8x128xf32>
    %57 = vector.extract_strided_slice %30 {offsets = [0, 128], sizes = [8, 128], strides = [1, 1]} : vector<8x768xf32> to vector<8x128xf32>
    %58 = arith.mulf %57, %1 : vector<8x128xf32>
    %c64_i32_25 = arith.constant 64 : i32
    %59 = tpu.dynamic_rotate %57 by %c64_i32_25 dim 1 : vector<8x128xf32>, i32 -> vector<8x128xf32>
    %60 = arith.mulf %59, %2 : vector<8x128xf32>
    %61 = arith.addf %58, %60 : vector<8x128xf32>
    %62 = vector.extract_strided_slice %30 {offsets = [0, 384], sizes = [8, 128], strides = [1, 1]} : vector<8x768xf32> to vector<8x128xf32>
    %63 = arith.mulf %62, %1 : vector<8x128xf32>
    %c64_i32_26 = arith.constant 64 : i32
    %64 = tpu.dynamic_rotate %62 by %c64_i32_26 dim 1 : vector<8x128xf32>, i32 -> vector<8x128xf32>
    %65 = arith.mulf %64, %2 : vector<8x128xf32>
    %66 = arith.addf %63, %65 : vector<8x128xf32>
    %67 = vector.extract_strided_slice %30 {offsets = [0, 640], sizes = [8, 128], strides = [1, 1]} : vector<8x768xf32> to vector<8x128xf32>
    %cst_27 = arith.constant dense<0.000000e+00> : vector<8x8xf32>
    %68 = tpu.matmul %61, %66, %cst_27 {dimension_numbers = #tpu.dot_dimension_numbers<[1], [1], [0], [0], [0, 0, 1, 0], [], []>} : vector<8x128xf32>, vector<8x128xf32>, vector<8x8xf32> -> vector<8x8xf32>
    %cst_28 = arith.constant 0.0883883461 : f32
    %69 = vector.broadcast %cst_28 : f32 to vector<8x8xf32>
    %70 = arith.mulf %68, %69 : vector<8x8xf32>
    %71 = arith.addf %70, %8 : vector<8x8xf32>
    %cst_29 = arith.constant dense<0xFF800000> : vector<8xf32>
    %72 = vector.multi_reduction <maximumf>, %71, %cst_29 [1] : vector<8x8xf32> to vector<8xf32>
    %73 = vector.shape_cast %72 : vector<8xf32> to vector<8x1xf32>
    %74 = vector.broadcast %73 : vector<8x1xf32> to vector<8x8xf32>
    %75 = arith.subf %71, %74 : vector<8x8xf32>
    %76 = math.exp %75 : vector<8x8xf32>
    %cst_30 = arith.constant dense<0.000000e+00> : vector<8xf32>
    %77 = vector.multi_reduction <add>, %76, %cst_30 [1] : vector<8x8xf32> to vector<8xf32>
    %78 = vector.shape_cast %77 : vector<8xf32> to vector<8x1xf32>
    %79 = tpu.reciprocal %78 {approx = true} : vector<8x1xf32> -> vector<8x1xf32>
    %80 = vector.broadcast %79 : vector<8x1xf32> to vector<8x8xf32>
    %81 = arith.mulf %76, %80 : vector<8x8xf32>
    %cst_31 = arith.constant dense<0.000000e+00> : vector<8x128xf32>
    %82 = tpu.matmul %81, %67, %cst_31 {dimension_numbers = #tpu.dot_dimension_numbers<[1], [0], [0], [1], [0, 0, 1, 1], [], []>} : vector<8x8xf32>, vector<8x128xf32>, vector<8x128xf32> -> vector<8x128xf32>
    %83 = tpu.concatenate %56, %82 in 1 : vector<8x128xf32>, vector<8x128xf32> -> vector<8x256xf32>
    %84 = arith.truncf %83 : vector<8x256xf32> to vector<8x256xbf16>
    %c0_32 = arith.constant 0 : index
    %c0_33 = arith.constant 0 : index
    %c0_34 = arith.constant 0 : index
    %85 = vector.load %arg6[%c0_32, %c0_33, %c0_34] : memref<2x256x256xbf16, #tpu.memory_space<vmem>>, vector<1x256x256xbf16>
    %86 = vector.shape_cast %85 : vector<1x256x256xbf16> to vector<256x256xbf16>
    %cst_35 = arith.constant dense<0.000000e+00> : vector<8x256xf32>
    %87 = tpu.matmul %84, %86, %cst_35 {dimension_numbers = #tpu.dot_dimension_numbers<[1], [0], [0], [1], [0, 0, 1, 1], [], []>} : vector<8x256xbf16>, vector<256x256xbf16>, vector<8x256xf32> -> vector<8x256xf32>
    %88 = arith.addf %0, %87 : vector<8x256xf32>
    %c0_36 = arith.constant 0 : index
    %c0_37 = arith.constant 0 : index
    %c0_38 = arith.constant 0 : index
    %89 = vector.load %arg7[%c0_36, %c0_37, %c0_38] : memref<2x1x256xf32, #tpu.memory_space<vmem>>, vector<1x1x256xf32>
    %90 = vector.shape_cast %89 : vector<1x1x256xf32> to vector<1x256xf32>
    %91 = arith.mulf %88, %88 : vector<8x256xf32>
    %cst_39 = arith.constant dense<0.000000e+00> : vector<8xf32>
    %92 = vector.multi_reduction <add>, %91, %cst_39 [1] : vector<8x256xf32> to vector<8xf32>
    %93 = vector.shape_cast %92 : vector<8xf32> to vector<8x1xf32>
    %cst_40 = arith.constant 2.560000e+02 : f32
    %94 = vector.broadcast %cst_40 : f32 to vector<8x1xf32>
    %95 = arith.divf %93, %94 : vector<8x1xf32>
    %cst_41 = arith.constant 9.99999997E-7 : f32
    %96 = vector.broadcast %cst_41 : f32 to vector<8x1xf32>
    %97 = arith.addf %95, %96 : vector<8x1xf32>
    %98 = math.rsqrt %97 : vector<8x1xf32>
    %99 = vector.broadcast %98 : vector<8x1xf32> to vector<8x256xf32>
    %100 = arith.mulf %88, %99 : vector<8x256xf32>
    %101 = vector.broadcast %90 : vector<1x256xf32> to vector<8x256xf32>
    %102 = arith.mulf %100, %101 : vector<8x256xf32>
    %103 = arith.truncf %102 : vector<8x256xf32> to vector<8x256xbf16>
    %c0_42 = arith.constant 0 : index
    %c0_43 = arith.constant 0 : index
    %c0_44 = arith.constant 0 : index
    %104 = vector.load %arg8[%c0_42, %c0_43, %c0_44] : memref<2x256x512xbf16, #tpu.memory_space<vmem>>, vector<1x256x512xbf16>
    %105 = vector.shape_cast %104 : vector<1x256x512xbf16> to vector<256x512xbf16>
    %cst_45 = arith.constant dense<0.000000e+00> : vector<8x512xf32>
    %106 = tpu.matmul %103, %105, %cst_45 {dimension_numbers = #tpu.dot_dimension_numbers<[1], [0], [0], [1], [0, 0, 1, 1], [], []>} : vector<8x256xbf16>, vector<256x512xbf16>, vector<8x512xf32> -> vector<8x512xf32>
    %107 = vector.extract_strided_slice %106 {offsets = [0, 0], sizes = [8, 256], strides = [1, 1]} : vector<8x512xf32> to vector<8x256xf32>
    %108 = vector.extract_strided_slice %106 {offsets = [0, 256], sizes = [8, 256], strides = [1, 1]} : vector<8x512xf32> to vector<8x256xf32>
    %109 = arith.negf %107 : vector<8x256xf32>
    %110 = math.exp %109 : vector<8x256xf32>
    %cst_46 = arith.constant 1.000000e+00 : f32
    %111 = vector.broadcast %cst_46 : f32 to vector<8x256xf32>
    %112 = arith.addf %111, %110 : vector<8x256xf32>
    %113 = arith.divf %111, %112 : vector<8x256xf32>
    %114 = arith.mulf %107, %113 : vector<8x256xf32>
    %115 = arith.mulf %114, %108 : vector<8x256xf32>
    %116 = arith.truncf %115 : vector<8x256xf32> to vector<8x256xbf16>
    %c0_47 = arith.constant 0 : index
    %c0_48 = arith.constant 0 : index
    %c0_49 = arith.constant 0 : index
    %117 = vector.load %arg9[%c0_47, %c0_48, %c0_49] : memref<2x256x256xbf16, #tpu.memory_space<vmem>>, vector<1x256x256xbf16>
    %118 = vector.shape_cast %117 : vector<1x256x256xbf16> to vector<256x256xbf16>
    %cst_50 = arith.constant dense<0.000000e+00> : vector<8x256xf32>
    %119 = tpu.matmul %116, %118, %cst_50 {dimension_numbers = #tpu.dot_dimension_numbers<[1], [0], [0], [1], [0, 0, 1, 1], [], []>} : vector<8x256xbf16>, vector<256x256xbf16>, vector<8x256xf32> -> vector<8x256xf32>
    %120 = arith.addf %88, %119 : vector<8x256xf32>
    %c1 = arith.constant 1 : index
    %c0_51 = arith.constant 0 : index
    %c0_52 = arith.constant 0 : index
    %121 = vector.load %arg3[%c1, %c0_51, %c0_52] : memref<2x1x256xf32, #tpu.memory_space<vmem>>, vector<1x1x256xf32>
    %122 = vector.shape_cast %121 : vector<1x1x256xf32> to vector<1x256xf32>
    %123 = arith.mulf %120, %120 : vector<8x256xf32>
    %cst_53 = arith.constant dense<0.000000e+00> : vector<8xf32>
    %124 = vector.multi_reduction <add>, %123, %cst_53 [1] : vector<8x256xf32> to vector<8xf32>
    %125 = vector.shape_cast %124 : vector<8xf32> to vector<8x1xf32>
    %cst_54 = arith.constant 2.560000e+02 : f32
    %126 = vector.broadcast %cst_54 : f32 to vector<8x1xf32>
    %127 = arith.divf %125, %126 : vector<8x1xf32>
    %cst_55 = arith.constant 9.99999997E-7 : f32
    %128 = vector.broadcast %cst_55 : f32 to vector<8x1xf32>
    %129 = arith.addf %127, %128 : vector<8x1xf32>
    %130 = math.rsqrt %129 : vector<8x1xf32>
    %131 = vector.broadcast %130 : vector<8x1xf32> to vector<8x256xf32>
    %132 = arith.mulf %120, %131 : vector<8x256xf32>
    %133 = vector.broadcast %122 : vector<1x256xf32> to vector<8x256xf32>
    %134 = arith.mulf %132, %133 : vector<8x256xf32>
    %135 = arith.truncf %134 : vector<8x256xf32> to vector<8x256xbf16>
    %c1_56 = arith.constant 1 : index
    %c0_57 = arith.constant 0 : index
    %c0_58 = arith.constant 0 : index
    %136 = vector.load %arg4[%c1_56, %c0_57, %c0_58] : memref<2x256x768xbf16, #tpu.memory_space<vmem>>, vector<1x256x768xbf16>
    %137 = vector.shape_cast %136 : vector<1x256x768xbf16> to vector<256x768xbf16>
    %cst_59 = arith.constant dense<0.000000e+00> : vector<8x768xf32>
    %138 = tpu.matmul %135, %137, %cst_59 {dimension_numbers = #tpu.dot_dimension_numbers<[1], [0], [0], [1], [0, 0, 1, 1], [], []>} : vector<8x256xbf16>, vector<256x768xbf16>, vector<8x768xf32> -> vector<8x768xf32>
    %c1_60 = arith.constant 1 : index
    %c0_61 = arith.constant 0 : index
    %c0_62 = arith.constant 0 : index
    %139 = vector.load %arg5[%c1_60, %c0_61, %c0_62] : memref<2x1x768xf32, #tpu.memory_space<vmem>>, vector<1x1x768xf32>
    %140 = vector.shape_cast %139 : vector<1x1x768xf32> to vector<1x768xf32>
    %141 = vector.broadcast %140 : vector<1x768xf32> to vector<8x768xf32>
    %142 = arith.addf %138, %141 : vector<8x768xf32>
    %143 = vector.extract_strided_slice %142 {offsets = [0, 0], sizes = [8, 128], strides = [1, 1]} : vector<8x768xf32> to vector<8x128xf32>
    %144 = arith.mulf %143, %1 : vector<8x128xf32>
    %c64_i32_63 = arith.constant 64 : i32
    %145 = tpu.dynamic_rotate %143 by %c64_i32_63 dim 1 : vector<8x128xf32>, i32 -> vector<8x128xf32>
    %146 = arith.mulf %145, %2 : vector<8x128xf32>
    %147 = arith.addf %144, %146 : vector<8x128xf32>
    %148 = vector.extract_strided_slice %142 {offsets = [0, 256], sizes = [8, 128], strides = [1, 1]} : vector<8x768xf32> to vector<8x128xf32>
    %149 = arith.mulf %148, %1 : vector<8x128xf32>
    %c64_i32_64 = arith.constant 64 : i32
    %150 = tpu.dynamic_rotate %148 by %c64_i32_64 dim 1 : vector<8x128xf32>, i32 -> vector<8x128xf32>
    %151 = arith.mulf %150, %2 : vector<8x128xf32>
    %152 = arith.addf %149, %151 : vector<8x128xf32>
    %153 = vector.extract_strided_slice %142 {offsets = [0, 512], sizes = [8, 128], strides = [1, 1]} : vector<8x768xf32> to vector<8x128xf32>
    %cst_65 = arith.constant dense<0.000000e+00> : vector<8x8xf32>
    %154 = tpu.matmul %147, %152, %cst_65 {dimension_numbers = #tpu.dot_dimension_numbers<[1], [1], [0], [0], [0, 0, 1, 0], [], []>} : vector<8x128xf32>, vector<8x128xf32>, vector<8x8xf32> -> vector<8x8xf32>
    %cst_66 = arith.constant 0.0883883461 : f32
    %155 = vector.broadcast %cst_66 : f32 to vector<8x8xf32>
    %156 = arith.mulf %154, %155 : vector<8x8xf32>
    %157 = arith.addf %156, %8 : vector<8x8xf32>
    %cst_67 = arith.constant dense<0xFF800000> : vector<8xf32>
    %158 = vector.multi_reduction <maximumf>, %157, %cst_67 [1] : vector<8x8xf32> to vector<8xf32>
    %159 = vector.shape_cast %158 : vector<8xf32> to vector<8x1xf32>
    %160 = vector.broadcast %159 : vector<8x1xf32> to vector<8x8xf32>
    %161 = arith.subf %157, %160 : vector<8x8xf32>
    %162 = math.exp %161 : vector<8x8xf32>
    %cst_68 = arith.constant dense<0.000000e+00> : vector<8xf32>
    %163 = vector.multi_reduction <add>, %162, %cst_68 [1] : vector<8x8xf32> to vector<8xf32>
    %164 = vector.shape_cast %163 : vector<8xf32> to vector<8x1xf32>
    %165 = tpu.reciprocal %164 {approx = true} : vector<8x1xf32> -> vector<8x1xf32>
    %166 = vector.broadcast %165 : vector<8x1xf32> to vector<8x8xf32>
    %167 = arith.mulf %162, %166 : vector<8x8xf32>
    %cst_69 = arith.constant dense<0.000000e+00> : vector<8x128xf32>
    %168 = tpu.matmul %167, %153, %cst_69 {dimension_numbers = #tpu.dot_dimension_numbers<[1], [0], [0], [1], [0, 0, 1, 1], [], []>} : vector<8x8xf32>, vector<8x128xf32>, vector<8x128xf32> -> vector<8x128xf32>
    %169 = vector.extract_strided_slice %142 {offsets = [0, 128], sizes = [8, 128], strides = [1, 1]} : vector<8x768xf32> to vector<8x128xf32>
    %170 = arith.mulf %169, %1 : vector<8x128xf32>
    %c64_i32_70 = arith.constant 64 : i32
    %171 = tpu.dynamic_rotate %169 by %c64_i32_70 dim 1 : vector<8x128xf32>, i32 -> vector<8x128xf32>
    %172 = arith.mulf %171, %2 : vector<8x128xf32>
    %173 = arith.addf %170, %172 : vector<8x128xf32>
    %174 = vector.extract_strided_slice %142 {offsets = [0, 384], sizes = [8, 128], strides = [1, 1]} : vector<8x768xf32> to vector<8x128xf32>
    %175 = arith.mulf %174, %1 : vector<8x128xf32>
    %c64_i32_71 = arith.constant 64 : i32
    %176 = tpu.dynamic_rotate %174 by %c64_i32_71 dim 1 : vector<8x128xf32>, i32 -> vector<8x128xf32>
    %177 = arith.mulf %176, %2 : vector<8x128xf32>
    %178 = arith.addf %175, %177 : vector<8x128xf32>
    %179 = vector.extract_strided_slice %142 {offsets = [0, 640], sizes = [8, 128], strides = [1, 1]} : vector<8x768xf32> to vector<8x128xf32>
    %cst_72 = arith.constant dense<0.000000e+00> : vector<8x8xf32>
    %180 = tpu.matmul %173, %178, %cst_72 {dimension_numbers = #tpu.dot_dimension_numbers<[1], [1], [0], [0], [0, 0, 1, 0], [], []>} : vector<8x128xf32>, vector<8x128xf32>, vector<8x8xf32> -> vector<8x8xf32>
    %cst_73 = arith.constant 0.0883883461 : f32
    %181 = vector.broadcast %cst_73 : f32 to vector<8x8xf32>
    %182 = arith.mulf %180, %181 : vector<8x8xf32>
    %183 = arith.addf %182, %8 : vector<8x8xf32>
    %cst_74 = arith.constant dense<0xFF800000> : vector<8xf32>
    %184 = vector.multi_reduction <maximumf>, %183, %cst_74 [1] : vector<8x8xf32> to vector<8xf32>
    %185 = vector.shape_cast %184 : vector<8xf32> to vector<8x1xf32>
    %186 = vector.broadcast %185 : vector<8x1xf32> to vector<8x8xf32>
    %187 = arith.subf %183, %186 : vector<8x8xf32>
    %188 = math.exp %187 : vector<8x8xf32>
    %cst_75 = arith.constant dense<0.000000e+00> : vector<8xf32>
    %189 = vector.multi_reduction <add>, %188, %cst_75 [1] : vector<8x8xf32> to vector<8xf32>
    %190 = vector.shape_cast %189 : vector<8xf32> to vector<8x1xf32>
    %191 = tpu.reciprocal %190 {approx = true} : vector<8x1xf32> -> vector<8x1xf32>
    %192 = vector.broadcast %191 : vector<8x1xf32> to vector<8x8xf32>
    %193 = arith.mulf %188, %192 : vector<8x8xf32>
    %cst_76 = arith.constant dense<0.000000e+00> : vector<8x128xf32>
    %194 = tpu.matmul %193, %179, %cst_76 {dimension_numbers = #tpu.dot_dimension_numbers<[1], [0], [0], [1], [0, 0, 1, 1], [], []>} : vector<8x8xf32>, vector<8x128xf32>, vector<8x128xf32> -> vector<8x128xf32>
    %195 = tpu.concatenate %168, %194 in 1 : vector<8x128xf32>, vector<8x128xf32> -> vector<8x256xf32>
    %196 = arith.truncf %195 : vector<8x256xf32> to vector<8x256xbf16>
    %c1_77 = arith.constant 1 : index
    %c0_78 = arith.constant 0 : index
    %c0_79 = arith.constant 0 : index
    %197 = vector.load %arg6[%c1_77, %c0_78, %c0_79] : memref<2x256x256xbf16, #tpu.memory_space<vmem>>, vector<1x256x256xbf16>
    %198 = vector.shape_cast %197 : vector<1x256x256xbf16> to vector<256x256xbf16>
    %cst_80 = arith.constant dense<0.000000e+00> : vector<8x256xf32>
    %199 = tpu.matmul %196, %198, %cst_80 {dimension_numbers = #tpu.dot_dimension_numbers<[1], [0], [0], [1], [0, 0, 1, 1], [], []>} : vector<8x256xbf16>, vector<256x256xbf16>, vector<8x256xf32> -> vector<8x256xf32>
    %200 = arith.addf %120, %199 : vector<8x256xf32>
    %c1_81 = arith.constant 1 : index
    %c0_82 = arith.constant 0 : index
    %c0_83 = arith.constant 0 : index
    %201 = vector.load %arg7[%c1_81, %c0_82, %c0_83] : memref<2x1x256xf32, #tpu.memory_space<vmem>>, vector<1x1x256xf32>
    %202 = vector.shape_cast %201 : vector<1x1x256xf32> to vector<1x256xf32>
    %203 = arith.mulf %200, %200 : vector<8x256xf32>
    %cst_84 = arith.constant dense<0.000000e+00> : vector<8xf32>
    %204 = vector.multi_reduction <add>, %203, %cst_84 [1] : vector<8x256xf32> to vector<8xf32>
    %205 = vector.shape_cast %204 : vector<8xf32> to vector<8x1xf32>
    %cst_85 = arith.constant 2.560000e+02 : f32
    %206 = vector.broadcast %cst_85 : f32 to vector<8x1xf32>
    %207 = arith.divf %205, %206 : vector<8x1xf32>
    %cst_86 = arith.constant 9.99999997E-7 : f32
    %208 = vector.broadcast %cst_86 : f32 to vector<8x1xf32>
    %209 = arith.addf %207, %208 : vector<8x1xf32>
    %210 = math.rsqrt %209 : vector<8x1xf32>
    %211 = vector.broadcast %210 : vector<8x1xf32> to vector<8x256xf32>
    %212 = arith.mulf %200, %211 : vector<8x256xf32>
    %213 = vector.broadcast %202 : vector<1x256xf32> to vector<8x256xf32>
    %214 = arith.mulf %212, %213 : vector<8x256xf32>
    %215 = arith.truncf %214 : vector<8x256xf32> to vector<8x256xbf16>
    %c1_87 = arith.constant 1 : index
    %c0_88 = arith.constant 0 : index
    %c0_89 = arith.constant 0 : index
    %216 = vector.load %arg8[%c1_87, %c0_88, %c0_89] : memref<2x256x512xbf16, #tpu.memory_space<vmem>>, vector<1x256x512xbf16>
    %217 = vector.shape_cast %216 : vector<1x256x512xbf16> to vector<256x512xbf16>
    %cst_90 = arith.constant dense<0.000000e+00> : vector<8x512xf32>
    %218 = tpu.matmul %215, %217, %cst_90 {dimension_numbers = #tpu.dot_dimension_numbers<[1], [0], [0], [1], [0, 0, 1, 1], [], []>} : vector<8x256xbf16>, vector<256x512xbf16>, vector<8x512xf32> -> vector<8x512xf32>
    %219 = vector.extract_strided_slice %218 {offsets = [0, 0], sizes = [8, 256], strides = [1, 1]} : vector<8x512xf32> to vector<8x256xf32>
    %220 = vector.extract_strided_slice %218 {offsets = [0, 256], sizes = [8, 256], strides = [1, 1]} : vector<8x512xf32> to vector<8x256xf32>
    %221 = arith.negf %219 : vector<8x256xf32>
    %222 = math.exp %221 : vector<8x256xf32>
    %cst_91 = arith.constant 1.000000e+00 : f32
    %223 = vector.broadcast %cst_91 : f32 to vector<8x256xf32>
    %224 = arith.addf %223, %222 : vector<8x256xf32>
    %225 = arith.divf %223, %224 : vector<8x256xf32>
    %226 = arith.mulf %219, %225 : vector<8x256xf32>
    %227 = arith.mulf %226, %220 : vector<8x256xf32>
    %228 = arith.truncf %227 : vector<8x256xf32> to vector<8x256xbf16>
    %c1_92 = arith.constant 1 : index
    %c0_93 = arith.constant 0 : index
    %c0_94 = arith.constant 0 : index
    %229 = vector.load %arg9[%c1_92, %c0_93, %c0_94] : memref<2x256x256xbf16, #tpu.memory_space<vmem>>, vector<1x256x256xbf16>
    %230 = vector.shape_cast %229 : vector<1x256x256xbf16> to vector<256x256xbf16>
    %cst_95 = arith.constant dense<0.000000e+00> : vector<8x256xf32>
    %231 = tpu.matmul %228, %230, %cst_95 {dimension_numbers = #tpu.dot_dimension_numbers<[1], [0], [0], [1], [0, 0, 1, 1], [], []>} : vector<8x256xbf16>, vector<256x256xbf16>, vector<8x256xf32> -> vector<8x256xf32>
    %232 = arith.addf %200, %231 : vector<8x256xf32>
    %c0_96 = arith.constant 0 : index
    %c0_97 = arith.constant 0 : index
    %233 = vector.load %arg10[%c0_96, %c0_97] : memref<1x256xf32, #tpu.memory_space<vmem>>, vector<1x256xf32>
    %234 = arith.mulf %232, %232 : vector<8x256xf32>
    %cst_98 = arith.constant dense<0.000000e+00> : vector<8xf32>
    %235 = vector.multi_reduction <add>, %234, %cst_98 [1] : vector<8x256xf32> to vector<8xf32>
    %236 = vector.shape_cast %235 : vector<8xf32> to vector<8x1xf32>
    %cst_99 = arith.constant 2.560000e+02 : f32
    %237 = vector.broadcast %cst_99 : f32 to vector<8x1xf32>
    %238 = arith.divf %236, %237 : vector<8x1xf32>
    %cst_100 = arith.constant 9.99999997E-7 : f32
    %239 = vector.broadcast %cst_100 : f32 to vector<8x1xf32>
    %240 = arith.addf %238, %239 : vector<8x1xf32>
    %241 = math.rsqrt %240 : vector<8x1xf32>
    %242 = vector.broadcast %241 : vector<8x1xf32> to vector<8x256xf32>
    %243 = arith.mulf %232, %242 : vector<8x256xf32>
    %244 = vector.broadcast %233 : vector<1x256xf32> to vector<8x256xf32>
    %245 = arith.mulf %243, %244 : vector<8x256xf32>
    %246 = arith.truncf %245 : vector<8x256xf32> to vector<8x256xbf16>
    %c0_101 = arith.constant 0 : index
    %c0_102 = arith.constant 0 : index
    %247 = vector.load %arg11[%c0_101, %c0_102] : memref<256x256xbf16, #tpu.memory_space<vmem>>, vector<256x256xbf16>
    %cst_103 = arith.constant dense<0.000000e+00> : vector<8x256xf32>
    %248 = tpu.matmul %246, %247, %cst_103 {dimension_numbers = #tpu.dot_dimension_numbers<[1], [0], [0], [1], [0, 0, 1, 1], [], []>} : vector<8x256xbf16>, vector<256x256xbf16>, vector<8x256xf32> -> vector<8x256xf32>
    %c0_104 = arith.constant 0 : index
    %c0_105 = arith.constant 0 : index
    %249 = vector.load %arg12[%c0_104, %c0_105] : memref<8x256xf32, #tpu.memory_space<vmem>>, vector<8x256xf32>
    tpu.vector_store %arg12[%c0_104, %c0_105], %248 {strides = array<i32>} : memref<8x256xf32, #tpu.memory_space<vmem>>, vector<8x256xf32>,
    return
  }
}

</mosaic_0001>

<llo_original>
// kernel: qwen_forward.1
$region0: #{qwen_forward.1}
  #allocation0 [shape = 'u32[]', space=smem, size = 0x4, offset = 0x4, fixed_abs, tag = 'smem constant byte address 0x4 - core index']
  #allocation1 [shape = 'u32[144,128]{1,0:T(1,128)}', space=vmem, size = 0x12000, scoped, tag = 'internal scratch']
  %s0 = inlined_call_operand.vmem [shape: f32[8,256], index: 0, kind: input, shape index: {}]
  %s1 = inlined_call_operand.vmem [shape: f32[8,128], index: 1, kind: input, shape index: {}]
  %s2 = inlined_call_operand.vmem [shape: f32[8,128], index: 2, kind: input, shape index: {}]
  %s3 = inlined_call_operand.vmem [shape: f32[2,1,256], index: 3, kind: input, shape index: {}]
  %s4 = inlined_call_operand.hbm [shape: bf16[2,256,768], index: 4, kind: input, shape index: {}]
  %s5 = inlined_call_operand.vmem [shape: f32[2,1,768], index: 5, kind: input, shape index: {}]
  %s6 = inlined_call_operand.hbm [shape: bf16[2,256,256], index: 6, kind: input, shape index: {}]
  %s7 = inlined_call_operand.vmem [shape: f32[2,1,256], index: 7, kind: input, shape index: {}]
  %s8 = inlined_call_operand.hbm [shape: bf16[2,256,512], index: 8, kind: input, shape index: {}]
  %s9 = inlined_call_operand.hbm [shape: bf16[2,256,256], index: 9, kind: input, shape index: {}]
  %s10 = inlined_call_operand.vmem [shape: f32[1,256], index: 10, kind: input, shape index: {}]
  %s11 = inlined_call_operand.hbm [shape: bf16[256,256], index: 11, kind: input, shape index: {}]
  %s12 = inlined_call_operand.hbm [shape: f32[8,256], index: 12, kind: output, shape index: {}]
  %s13 = sld [smem:[#allocation0]]
  $region78: #{qwen_forward.1} parent=0
    _
  %s15 = ssub.s32 1, %s13
  %s16 = scalar_select 0, %s15, %s13
  $region1: #{qwen_forward.1} parent=0
    #allocation2 [shape = 'u8[786432]{0}', space=vmem, size = 0xc0000, scoped, tag = 'input window, operand 4, single buffered']
    #allocation3 [shape = 's32[1]{0}', space=sflag, size = 0x4, scoped, tag = 'scoped memory for qwen_forward.1']
    #allocation4 [shape = 's32[1]{0}', space=sflag, size = 0x4, scoped, tag = 'scoped memory for qwen_forward.1']
    #allocation5 [shape = 'u8[262144]{0}', space=vmem, size = 0x40000, scoped, tag = 'input window, operand 6, single buffered']
    #allocation6 [shape = 's32[1]{0}', space=sflag, size = 0x4, scoped, tag = 'scoped memory for qwen_forward.1']
    #allocation7 [shape = 'u8[524288]{0}', space=vmem, size = 0x80000, scoped, tag = 'input window, operand 8, single buffered']
    #allocation8 [shape = 'u8[262144]{0}', space=vmem, size = 0x40000, scoped, tag = 'input window, operand 9, single buffered']
    #allocation9 [shape = 's32[1]{0}', space=sflag, size = 0x4, scoped, tag = 'scoped memory for qwen_forward.1']
    #allocation10 [shape = 'u8[131072]{0}', space=vmem, size = 0x20000, scoped, tag = 'input window, operand 11, single buffered']
    #allocation11 [shape = 'u8[8192]{0}', space=vmem, size = 0x2000, scoped, tag = 'output window, operand 0, single buffered']
    %17 = vsyncpa [#allocation3], 0
    %18 = vsyncpa [#allocation6], 0
    %19 = vsyncpa [#allocation9], 0
    %20 = vsyncpa [#allocation4], 0
    // Predicated region
    $region2: #{qwen_forward.1} parent=1 // pred_check
      _
    $region3: #{qwen_forward.1} parent=1 // pred_check_branch
      %22 = sbr.rel (0) target = $region5
    $region4: #{qwen_forward.1} parent=1 // pred_region
      _
    $region5: #{qwen_forward.1} parent=1 // pred_fallthru
      _
    // Predicated region
    $region6: #{qwen_forward.1} parent=1 // pred_check
      _
    $region7: #{qwen_forward.1} parent=1 // pred_check_branch
      %24 = sbr.rel (0) target = $region9
    $region8: #{qwen_forward.1} parent=1 // pred_region
      _
    $region9: #{qwen_forward.1} parent=1 // pred_fallthru
      _
    // Predicated region
    $region10: #{qwen_forward.1} parent=1 // pred_check
      _
    $region11: #{qwen_forward.1} parent=1 // pred_check_branch
      %26 = sbr.rel (0) target = $region13
    $region12: #{qwen_forward.1} parent=1 // pred_region
      _
    $region13: #{qwen_forward.1} parent=1 // pred_fallthru
      _
    // Predicated region
    $region14: #{qwen_forward.1} parent=1 // pred_check
      _
    $region15: #{qwen_forward.1} parent=1 // pred_check_branch
      %28 = sbr.rel (0) target = $region17
    $region16: #{qwen_forward.1} parent=1 // pred_region
      _
    $region17: #{qwen_forward.1} parent=1 // pred_fallthru
      _
    // Predicated region
    $region18: #{qwen_forward.1} parent=1 // pred_check
      _
    $region19: #{qwen_forward.1} parent=1 // pred_check_branch
      %30 = sbr.rel (0) target = $region21
    $region20: #{qwen_forward.1} parent=1 // pred_region
      %s32 = ssub.s32 24576, 24576
      %33 = vsyncadd [#allocation3], %s32
      %s34 = sshll.u32 [#allocation2], 4
      %s35 = int_to_ptr.vmem [resolvable:$true] %s34
      %40 = dma.hbm_to_vmem [thread:$0]  %s4, 24576, %s35, [#allocation3], 384, 384, 24
    $region21: #{qwen_forward.1} parent=1 // pred_fallthru
      _
    // Predicated region
    $region22: #{qwen_forward.1} parent=1 // pred_check
      _
    $region23: #{qwen_forward.1} parent=1 // pred_check_branch
      %42 = sbr.rel (0) target = $region25
    $region24: #{qwen_forward.1} parent=1 // pred_region
      _
    $region25: #{qwen_forward.1} parent=1 // pred_fallthru
      _
    // Predicated region
    $region26: #{qwen_forward.1} parent=1 // pred_check
      _
    $region27: #{qwen_forward.1} parent=1 // pred_check_branch
      %44 = sbr.rel (0) target = $region29
    $region28: #{qwen_forward.1} parent=1 // pred_region
      %s46 = ssub.s32 8192, 8192
      %47 = vsyncadd [#allocation6], %s46
      %s48 = sshll.u32 [#allocation5], 4
      %s49 = int_to_ptr.vmem [resolvable:$true] %s48
      %54 = dma.hbm_to_vmem [thread:$0]  %s6, 8192, %s49, [#allocation6], 128, 128, 8
    $region29: #{qwen_forward.1} parent=1 // pred_fallthru
      _
    // Predicated region
    $region30: #{qwen_forward.1} parent=1 // pred_check
      _
    $region31: #{qwen_forward.1} parent=1 // pred_check_branch
      %56 = sbr.rel (0) target = $region33
    $region32: #{qwen_forward.1} parent=1 // pred_region
      _
    $region33: #{qwen_forward.1} parent=1 // pred_fallthru
      _
    // Predicated region
    $region34: #{qwen_forward.1} parent=1 // pred_check
      _
    $region35: #{qwen_forward.1} parent=1 // pred_check_branch
      %58 = sbr.rel (0) target = $region37
    $region36: #{qwen_forward.1} parent=1 // pred_region
      %s60 = ssub.s32 16384, 16384
      %61 = vsyncadd [#allocation6], %s60
      %s62 = sshll.u32 [#allocation7], 4
      %s63 = int_to_ptr.vmem [resolvable:$true] %s62
      %68 = dma.hbm_to_vmem [thread:$0]  %s8, 16384, %s63, [#allocation6], 256, 256, 16
    $region37: #{qwen_forward.1} parent=1 // pred_fallthru
      _
    // Predicated region
    $region38: #{qwen_forward.1} parent=1 // pred_check
      _
    $region39: #{qwen_forward.1} parent=1 // pred_check_branch
      %70 = sbr.rel (0) target = $region41
    $region40: #{qwen_forward.1} parent=1 // pred_region
      %s72 = ssub.s32 8192, 8192
      %73 = vsyncadd [#allocation9], %s72
      %s74 = sshll.u32 [#allocation8], 4
      %s75 = int_to_ptr.vmem [resolvable:$true] %s74
      %80 = dma.hbm_to_vmem [thread:$0]  %s9, 8192, %s75, [#allocation9], 128, 128, 8
    $region41: #{qwen_forward.1} parent=1 // pred_fallthru
      _
    // Predicated region
    $region42: #{qwen_forward.1} parent=1 // pred_check
      _
    $region43: #{qwen_forward.1} parent=1 // pred_check_branch
      %82 = sbr.rel (0) target = $region45
    $region44: #{qwen_forward.1} parent=1 // pred_region
      _
    $region45: #{qwen_forward.1} parent=1 // pred_fallthru
      _
    // Predicated region
    $region46: #{qwen_forward.1} parent=1 // pred_check
      _
    $region47: #{qwen_forward.1} parent=1 // pred_check_branch
      %84 = sbr.rel (0) target = $region49
    $region48: #{qwen_forward.1} parent=1 // pred_region
      %s86 = ssub.s32 4096, 4096
      %87 = vsyncadd [#allocation9], %s86
      %s88 = sshll.u32 [#allocation10], 4
      %s89 = int_to_ptr.vmem [resolvable:$true] %s88
      %94 = dma.hbm_to_vmem [thread:$0]  %s11, 4096, %s89, [#allocation9], 128, 128, 8
    $region49: #{qwen_forward.1} parent=1 // pred_fallthru
      _
    // Predicated region
    $region50: #{qwen_forward.1} parent=1 // pred_check
      _
    $region51: #{qwen_forward.1} parent=1 // pred_check_branch
      %96 = sbr.rel (0) target = $region53
    $region52: #{qwen_forward.1} parent=1 // pred_region
      %97 = dma.done [#allocation3], 24576
    $region53: #{qwen_forward.1} parent=1 // pred_fallthru
      _
    // Predicated region
    $region54: #{qwen_forward.1} parent=1 // pred_check
      _
    $region55: #{qwen_forward.1} parent=1 // pred_check_branch
      %99 = sbr.rel (0) target = $region57
    $region56: #{qwen_forward.1} parent=1 // pred_region
      %100 = dma.done [#allocation6], 8192
    $region57: #{qwen_forward.1} parent=1 // pred_fallthru
      _
    // Predicated region
    $region58: #{qwen_forward.1} parent=1 // pred_check
      _
    $region59: #{qwen_forward.1} parent=1 // pred_check_branch
      %102 = sbr.rel (0) target = $region61
    $region60: #{qwen_forward.1} parent=1 // pred_region
      %103 = dma.done [#allocation6], 16384
    $region61: #{qwen_forward.1} parent=1 // pred_fallthru
      _
    // Predicated region
    $region62: #{qwen_forward.1} parent=1 // pred_check
      _
    $region63: #{qwen_forward.1} parent=1 // pred_check_branch
      %105 = sbr.rel (0) target = $region65
    $region64: #{qwen_forward.1} parent=1 // pred_region
      %106 = dma.done [#allocation9], 8192
    $region65: #{qwen_forward.1} parent=1 // pred_fallthru
      _
    // Predicated region
    $region66: #{qwen_forward.1} parent=1 // pred_check
      _
    $region67: #{qwen_forward.1} parent=1 // pred_check_branch
      %108 = sbr.rel (0) target = $region69
    $region68: #{qwen_forward.1} parent=1 // pred_region
      %109 = dma.done [#allocation9], 4096
    $region69: #{qwen_forward.1} parent=1 // pred_fallthru
      _
    %v110 = vld [vmem:[%s0] sm:$0xff]
    %v111 = vld [vmem:[%s0 + $0x8] sm:$0xff]
    %v112 = vld [vmem:[%s1] sm:$0xff]
    %v113 = vld [vmem:[%s2] sm:$0xff]
    %v114 = vlaneseq
    %v115 = vshrl.u32 %v114, 7
    %v116 = vlaneseq
    %v117 = vand.u32 %v116, 127
    %vm118 = vcmp.le.s32.totalorder %v117, %v115
    %v119 = vsel %vm118, 0.0, -1e+30
    %v120 = vld [vmem:[%s3] sm:$0x3]
    %v121 = vmul.f32 %v110, %v110
    %v122 = vmul.f32 %v111, %v111
    %v123 = vadd.f32 %v121, %v122
    %124 = vadd.xlane.f32.xlu0 %v123
    %v125 = vpop.xlane.xlu0 %124
    %v126 = vrcp.pop 256.0
    %v127 = vmul.f32 %v125, %v126
    %v128 = vadd.f32 %v127, 1e-06
    %v129 = vrsqrt.pop %v128
    %v130 = vmul.f32 %v110, %v129
    %v131 = vmul.f32 %v111, %v129
    %v133 = vlaneseq
    %v134 = vshrl.u32 %v133, 7
    %v135 = vsub.s32 0, %v134
    %v136 = vrot.slane %v120, %v135
    %v137 = vlaneseq
    %v138 = vshrl.u32 %v137, 7
    %v139 = vsub.s32 1, %v138
    %v140 = vrot.slane %v120, %v139
    %v143 = vmul.f32 %v130, %v136
    %v144 = vmul.f32 %v131, %v140
    %v145 = vpack.c.bf16 %v143, %v143
    %v146 = vpack.c.bf16 %v144, %v144
    %v147 = vld [vmem:[#allocation2] sm:$0xff]
    %v148 = vld [vmem:[#allocation2 + $0x8] sm:$0xff]
    %v149 = vld [vmem:[#allocation2 + $0x10] sm:$0xff]
    %v150 = vld [vmem:[#allocation2 + $0x18] sm:$0xff]
    %v151 = vld [vmem:[#allocation2 + $0x20] sm:$0xff]
    %v152 = vld [vmem:[#allocation2 + $0x28] sm:$0xff]
    %v153 = vld [vmem:[#allocation2 + $0x30] sm:$0xff]
    %v154 = vld [vmem:[#allocation2 + $0x38] sm:$0xff]
    %v155 = vld [vmem:[#allocation2 + $0x40] sm:$0xff]
    %v156 = vld [vmem:[#allocation2 + $0x48] sm:$0xff]
    %v157 = vld [vmem:[#allocation2 + $0x50] sm:$0xff]
    %v158 = vld [vmem:[#allocation2 + $0x58] sm:$0xff]
    %v159 = vld [vmem:[#allocation2 + $0x60] sm:$0xff]
    %v160 = vld [vmem:[#allocation2 + $0x68] sm:$0xff]
    %v161 = vld [vmem:[#allocation2 + $0x70] sm:$0xff]
    %v162 = vld [vmem:[#allocation2 + $0x78] sm:$0xff]
    %v163 = vld [vmem:[#allocation2 + $0x80] sm:$0xff]
    %v164 = vld [vmem:[#allocation2 + $0x88] sm:$0xff]
    %v165 = vld [vmem:[#allocation2 + $0x90] sm:$0xff]
    %v166 = vld [vmem:[#allocation2 + $0x98] sm:$0xff]
    %v167 = vld [vmem:[#allocation2 + $0xa0] sm:$0xff]
    %v168 = vld [vmem:[#allocation2 + $0xa8] sm:$0xff]
    %v169 = vld [vmem:[#allocation2 + $0xb0] sm:$0xff]
    %v170 = vld [vmem:[#allocation2 + $0xb8] sm:$0xff]
    %v171 = vld [vmem:[#allocation2 + $0xc0] sm:$0xff]
    %v172 = vld [vmem:[#allocation2 + $0xc8] sm:$0xff]
    %v173 = vld [vmem:[#allocation2 + $0xd0] sm:$0xff]
    %v174 = vld [vmem:[#allocation2 + $0xd8] sm:$0xff]
    %v175 = vld [vmem:[#allocation2 + $0xe0] sm:$0xff]
    %v176 = vld [vmem:[#allocation2 + $0xe8] sm:$0xff]
    %v177 = vld [vmem:[#allocation2 + $0xf0] sm:$0xff]
    %v178 = vld [vmem:[#allocation2 + $0xf8] sm:$0xff]
    %v179 = vld [vmem:[#allocation2 + $0x100] sm:$0xff]
    %v180 = vld [vmem:[#allocation2 + $0x108] sm:$0xff]
    %v181 = vld [vmem:[#allocation2 + $0x110] sm:$0xff]
    %v182 = vld [vmem:[#allocation2 + $0x118] sm:$0xff]
    %v183 = vld [vmem:[#allocation2 + $0x120] sm:$0xff]
    %v184 = vld [vmem:[#allocation2 + $0x128] sm:$0xff]
    %v185 = vld [vmem:[#allocation2 + $0x130] sm:$0xff]
    %v186 = vld [vmem:[#allocation2 + $0x138] sm:$0xff]
    %v187 = vld [vmem:[#allocation2 + $0x140] sm:$0xff]
    %v188 = vld [vmem:[#allocation2 + $0x148] sm:$0xff]
    %v189 = vld [vmem:[#allocation2 + $0x150] sm:$0xff]
    %v190 = vld [vmem:[#allocation2 + $0x158] sm:$0xff]
    %v191 = vld [vmem:[#allocation2 + $0x160] sm:$0xff]
    %v192 = vld [vmem:[#allocation2 + $0x168] sm:$0xff]
    %v193 = vld [vmem:[#allocation2 + $0x170] sm:$0xff]
    %v194 = vld [vmem:[#allocation2 + $0x178] sm:$0xff]
    %v195 = vld [vmem:[#allocation2 + $0x180] sm:$0xff]
    %v196 = vld [vmem:[#allocation2 + $0x188] sm:$0xff]
    %v197 = vld [vmem:[#allocation2 + $0x190] sm:$0xff]
    %v198 = vld [vmem:[#allocation2 + $0x198] sm:$0xff]
    %v199 = vld [vmem:[#allocation2 + $0x1a0] sm:$0xff]
    %v200 = vld [vmem:[#allocation2 + $0x1a8] sm:$0xff]
    %v201 = vld [vmem:[#allocation2 + $0x1b0] sm:$0xff]
    %v202 = vld [vmem:[#allocation2 + $0x1b8] sm:$0xff]
    %v203 = vld [vmem:[#allocation2 + $0x1c0] sm:$0xff]
    %v204 = vld [vmem:[#allocation2 + $0x1c8] sm:$0xff]
    %v205 = vld [vmem:[#allocation2 + $0x1d0] sm:$0xff]
    %v206 = vld [vmem:[#allocation2 + $0x1d8] sm:$0xff]
    %v207 = vld [vmem:[#allocation2 + $0x1e0] sm:$0xff]
    %v208 = vld [vmem:[#allocation2 + $0x1e8] sm:$0xff]
    %v209 = vld [vmem:[#allocation2 + $0x1f0] sm:$0xff]
    %v210 = vld [vmem:[#allocation2 + $0x1f8] sm:$0xff]
    %v211 = vld [vmem:[#allocation2 + $0x200] sm:$0xff]
    %v212 = vld [vmem:[#allocation2 + $0x208] sm:$0xff]
    %v213 = vld [vmem:[#allocation2 + $0x210] sm:$0xff]
    %v214 = vld [vmem:[#allocation2 + $0x218] sm:$0xff]
    %v215 = vld [vmem:[#allocation2 + $0x220] sm:$0xff]
    %v216 = vld [vmem:[#allocation2 + $0x228] sm:$0xff]
    %v217 = vld [vmem:[#allocation2 + $0x230] sm:$0xff]
    %v218 = vld [vmem:[#allocation2 + $0x238] sm:$0xff]
    %v219 = vld [vmem:[#allocation2 + $0x240] sm:$0xff]
    %v220 = vld [vmem:[#allocation2 + $0x248] sm:$0xff]
    %v221 = vld [vmem:[#allocation2 + $0x250] sm:$0xff]
    %v222 = vld [vmem:[#allocation2 + $0x258] sm:$0xff]
    %v223 = vld [vmem:[#allocation2 + $0x260] sm:$0xff]
    %v224 = vld [vmem:[#allocation2 + $0x268] sm:$0xff]
    %v225 = vld [vmem:[#allocation2 + $0x270] sm:$0xff]
    %v226 = vld [vmem:[#allocation2 + $0x278] sm:$0xff]
    %v227 = vld [vmem:[#allocation2 + $0x280] sm:$0xff]
    %v228 = vld [vmem:[#allocation2 + $0x288] sm:$0xff]
    %v229 = vld [vmem:[#allocation2 + $0x290] sm:$0xff]
    %v230 = vld [vmem:[#allocation2 + $0x298] sm:$0xff]
    %v231 = vld [vmem:[#allocation2 + $0x2a0] sm:$0xff]
    %v232 = vld [vmem:[#allocation2 + $0x2a8] sm:$0xff]
    %v233 = vld [vmem:[#allocation2 + $0x2b0] sm:$0xff]
    %v234 = vld [vmem:[#allocation2 + $0x2b8] sm:$0xff]
    %v235 = vld [vmem:[#allocation2 + $0x2c0] sm:$0xff]
    %v236 = vld [vmem:[#allocation2 + $0x2c8] sm:$0xff]
    %v237 = vld [vmem:[#allocation2 + $0x2d0] sm:$0xff]
    %v238 = vld [vmem:[#allocation2 + $0x2d8] sm:$0xff]
    %v239 = vld [vmem:[#allocation2 + $0x2e0] sm:$0xff]
    %v240 = vld [vmem:[#allocation2 + $0x2e8] sm:$0xff]
    %v241 = vld [vmem:[#allocation2 + $0x2f0] sm:$0xff]
    %v242 = vld [vmem:[#allocation2 + $0x2f8] sm:$0xff]
    %v243 = vld [vmem:[%s5] sm:$0x3f]
    %v245 = vlaneseq
    %v246 = vshrl.u32 %v245, 7
    %v247 = vsub.s32 0, %v246
    %v248 = vrot.slane %v243, %v247
    %v249 = vlaneseq
    %v250 = vshrl.u32 %v249, 7
    %v251 = vsub.s32 1, %v250
    %v252 = vrot.slane %v243, %v251
    %v253 = vlaneseq
    %v254 = vshrl.u32 %v253, 7
    %v255 = vsub.s32 2, %v254
    %v256 = vrot.slane %v243, %v255
    %v257 = vlaneseq
    %v258 = vshrl.u32 %v257, 7
    %v259 = vsub.s32 3, %v258
    %v260 = vrot.slane %v243, %v259
    %v261 = vlaneseq
    %v262 = vshrl.u32 %v261, 7
    %v263 = vsub.s32 4, %v262
    %v264 = vrot.slane %v243, %v263
    %v265 = vlaneseq
    %v266 = vshrl.u32 %v265, 7
    %v267 = vsub.s32 5, %v266
    %v268 = vrot.slane %v243, %v267
    %v371 = vunpack.c.l.b16 %v147
    %v372 = vunpack.c.h.b16 %v147
    %v373 = vunpack.c.l.b16 %v148
    %v374 = vunpack.c.h.b16 %v148
    %v375 = vunpack.c.l.b16 %v149
    %v376 = vunpack.c.h.b16 %v149
    %v377 = vunpack.c.l.b16 %v150
    %v378 = vunpack.c.h.b16 %v150
    %v379 = vunpack.c.l.b16 %v151
    %v380 = vunpack.c.h.b16 %v151
    %v381 = vunpack.c.l.b16 %v152
    %v382 = vunpack.c.h.b16 %v152
    %v383 = vunpack.c.l.b16 %v153
    %v384 = vunpack.c.h.b16 %v153
    %v385 = vunpack.c.l.b16 %v154
    %v386 = vunpack.c.h.b16 %v154
    %v387 = vunpack.c.l.b16 %v155
    %v388 = vunpack.c.h.b16 %v155
    %v389 = vunpack.c.l.b16 %v156
    %v390 = vunpack.c.h.b16 %v156
    %v391 = vunpack.c.l.b16 %v157
    %v392 = vunpack.c.h.b16 %v157
    %v393 = vunpack.c.l.b16 %v158
    %v394 = vunpack.c.h.b16 %v158
    %v395 = vunpack.c.l.b16 %v159
    %v396 = vunpack.c.h.b16 %v159
    %v397 = vunpack.c.l.b16 %v160
    %v398 = vunpack.c.h.b16 %v160
    %v399 = vunpack.c.l.b16 %v161
    %v400 = vunpack.c.h.b16 %v161
    %v401 = vunpack.c.l.b16 %v162
    %v402 = vunpack.c.h.b16 %v162
    %v403 = vunpack.c.l.b16 %v163
    %v404 = vunpack.c.h.b16 %v163
    %v405 = vunpack.c.l.b16 %v164
    %v406 = vunpack.c.h.b16 %v164
    %v407 = vunpack.c.l.b16 %v165
    %v408 = vunpack.c.h.b16 %v165
    %v409 = vunpack.c.l.b16 %v166
    %v410 = vunpack.c.h.b16 %v166
    %v411 = vunpack.c.l.b16 %v167
    %v412 = vunpack.c.h.b16 %v167
    %v413 = vunpack.c.l.b16 %v168
    %v414 = vunpack.c.h.b16 %v168
    %v415 = vunpack.c.l.b16 %v169
    %v416 = vunpack.c.h.b16 %v169
    %v417 = vunpack.c.l.b16 %v170
    %v418 = vunpack.c.h.b16 %v170
    %v419 = vunpack.c.l.b16 %v171
    %v420 = vunpack.c.h.b16 %v171
    %v421 = vunpack.c.l.b16 %v172
    %v422 = vunpack.c.h.b16 %v172
    %v423 = vunpack.c.l.b16 %v173
    %v424 = vunpack.c.h.b16 %v173
    %v425 = vunpack.c.l.b16 %v174
    %v426 = vunpack.c.h.b16 %v174
    %v427 = vunpack.c.l.b16 %v175
    %v428 = vunpack.c.h.b16 %v175
    %v429 = vunpack.c.l.b16 %v176
    %v430 = vunpack.c.h.b16 %v176
    %v431 = vunpack.c.l.b16 %v177
    %v432 = vunpack.c.h.b16 %v177
    %v433 = vunpack.c.l.b16 %v178
    %v434 = vunpack.c.h.b16 %v178
    %v435 = vunpack.c.l.b16 %v179
    %v436 = vunpack.c.h.b16 %v179
    %v437 = vunpack.c.l.b16 %v180
    %v438 = vunpack.c.h.b16 %v180
    %v439 = vunpack.c.l.b16 %v181
    %v440 = vunpack.c.h.b16 %v181
    %v441 = vunpack.c.l.b16 %v182
    %v442 = vunpack.c.h.b16 %v182
    %v443 = vunpack.c.l.b16 %v183
    %v444 = vunpack.c.h.b16 %v183
    %v445 = vunpack.c.l.b16 %v184
    %v446 = vunpack.c.h.b16 %v184
    %v447 = vunpack.c.l.b16 %v185
    %v448 = vunpack.c.h.b16 %v185
    %v449 = vunpack.c.l.b16 %v186
    %v450 = vunpack.c.h.b16 %v186
    %v451 = vunpack.c.l.b16 %v187
    %v452 = vunpack.c.h.b16 %v187
    %v453 = vunpack.c.l.b16 %v188
    %v454 = vunpack.c.h.b16 %v188
    %v455 = vunpack.c.l.b16 %v189
    %v456 = vunpack.c.h.b16 %v189
    %v457 = vunpack.c.l.b16 %v190
    %v458 = vunpack.c.h.b16 %v190
    %v459 = vunpack.c.l.b16 %v191
    %v460 = vunpack.c.h.b16 %v191
    %v461 = vunpack.c.l.b16 %v192
    %v462 = vunpack.c.h.b16 %v192
    %v463 = vunpack.c.l.b16 %v193
    %v464 = vunpack.c.h.b16 %v193
    %v465 = vunpack.c.l.b16 %v194
    %v466 = vunpack.c.h.b16 %v194
    %v467 = vunpack.c.l.b16 %v195
    %v468 = vunpack.c.h.b16 %v195
    %v469 = vunpack.c.l.b16 %v196
    %v470 = vunpack.c.h.b16 %v196
    %v471 = vunpack.c.l.b16 %v197
    %v472 = vunpack.c.h.b16 %v197
    %v473 = vunpack.c.l.b16 %v198
    %v474 = vunpack.c.h.b16 %v198
    %v475 = vunpack.c.l.b16 %v199
    %v476 = vunpack.c.h.b16 %v199
    %v477 = vunpack.c.l.b16 %v200
    %v478 = vunpack.c.h.b16 %v200
    %v479 = vunpack.c.l.b16 %v201
    %v480 = vunpack.c.h.b16 %v201
    %v481 = vunpack.c.l.b16 %v202
    %v482 = vunpack.c.h.b16 %v202
    %v483 = vunpack.c.l.b16 %v203
    %v484 = vunpack.c.h.b16 %v203
    %v485 = vunpack.c.l.b16 %v204
    %v486 = vunpack.c.h.b16 %v204
    %v487 = vunpack.c.l.b16 %v205
    %v488 = vunpack.c.h.b16 %v205
    %v489 = vunpack.c.l.b16 %v206
    %v490 = vunpack.c.h.b16 %v206
    %v491 = vunpack.c.l.b16 %v207
    %v492 = vunpack.c.h.b16 %v207
    %v493 = vunpack.c.l.b16 %v208
    %v494 = vunpack.c.h.b16 %v208
    %v495 = vunpack.c.l.b16 %v209
    %v496 = vunpack.c.h.b16 %v209
    %v497 = vunpack.c.l.b16 %v210
    %v498 = vunpack.c.h.b16 %v210
    %v499 = vunpack.c.l.b16 %v211
    %v500 = vunpack.c.h.b16 %v211
    %v501 = vunpack.c.l.b16 %v212
    %v502 = vunpack.c.h.b16 %v212
    %v503 = vunpack.c.l.b16 %v213
    %v504 = vunpack.c.h.b16 %v213
    %v505 = vunpack.c.l.b16 %v214
    %v506 = vunpack.c.h.b16 %v214
    %v507 = vunpack.c.l.b16 %v215
    %v508 = vunpack.c.h.b16 %v215
    %v509 = vunpack.c.l.b16 %v216
    %v510 = vunpack.c.h.b16 %v216
    %v511 = vunpack.c.l.b16 %v217
    %v512 = vunpack.c.h.b16 %v217
    %v513 = vunpack.c.l.b16 %v218
    %v514 = vunpack.c.h.b16 %v218
    %v515 = vunpack.c.l.b16 %v219
    %v516 = vunpack.c.h.b16 %v219
    %v517 = vunpack.c.l.b16 %v220
    %v518 = vunpack.c.h.b16 %v220
    %v519 = vunpack.c.l.b16 %v221
    %v520 = vunpack.c.h.b16 %v221
    %v521 = vunpack.c.l.b16 %v222
    %v522 = vunpack.c.h.b16 %v222
    %v523 = vunpack.c.l.b16 %v223
    %v524 = vunpack.c.h.b16 %v223
    %v525 = vunpack.c.l.b16 %v224
    %v526 = vunpack.c.h.b16 %v224
    %v527 = vunpack.c.l.b16 %v225
    %v528 = vunpack.c.h.b16 %v225
    %v529 = vunpack.c.l.b16 %v226
    %v530 = vunpack.c.h.b16 %v226
    %v531 = vunpack.c.l.b16 %v227
    %v532 = vunpack.c.h.b16 %v227
    %v533 = vunpack.c.l.b16 %v228
    %v534 = vunpack.c.h.b16 %v228
    %v535 = vunpack.c.l.b16 %v229
    %v536 = vunpack.c.h.b16 %v229
    %v537 = vunpack.c.l.b16 %v230
    %v538 = vunpack.c.h.b16 %v230
    %v539 = vunpack.c.l.b16 %v231
    %v540 = vunpack.c.h.b16 %v231
    %v541 = vunpack.c.l.b16 %v232
    %v542 = vunpack.c.h.b16 %v232
    %v543 = vunpack.c.l.b16 %v233
    %v544 = vunpack.c.h.b16 %v233
    %v545 = vunpack.c.l.b16 %v234
    %v546 = vunpack.c.h.b16 %v234
    %v547 = vunpack.c.l.b16 %v235
    %v548 = vunpack.c.h.b16 %v235
    %v549 = vunpack.c.l.b16 %v236
    %v550 = vunpack.c.h.b16 %v236
    %v551 = vunpack.c.l.b16 %v237
    %v552 = vunpack.c.h.b16 %v237
    %v553 = vunpack.c.l.b16 %v238
    %v554 = vunpack.c.h.b16 %v238
    %v555 = vunpack.c.l.b16 %v239
    %v556 = vunpack.c.h.b16 %v239
    %v557 = vunpack.c.l.b16 %v240
    %v558 = vunpack.c.h.b16 %v240
    %v559 = vunpack.c.l.b16 %v241
    %v560 = vunpack.c.h.b16 %v241
    %v561 = vunpack.c.l.b16 %v242
    %v562 = vunpack.c.h.b16 %v242
    %v563 = vpack.c.b16 %v377, %v371
    %v564 = vpack.c.b16 %v378, %v372
    %v565 = vpack.c.b16 %v379, %v373
    %v566 = vpack.c.b16 %v380, %v374
    %v567 = vpack.c.b16 %v381, %v375
    %v568 = vpack.c.b16 %v382, %v376
    %v569 = vpack.c.b16 %v389, %v383
    %v570 = vpack.c.b16 %v390, %v384
    %v571 = vpack.c.b16 %v391, %v385
    %v572 = vpack.c.b16 %v392, %v386
    %v573 = vpack.c.b16 %v393, %v387
    %v574 = vpack.c.b16 %v394, %v388
    %v575 = vpack.c.b16 %v401, %v395
    %v576 = vpack.c.b16 %v402, %v396
    %v577 = vpack.c.b16 %v403, %v397
    %v578 = vpack.c.b16 %v404, %v398
    %v579 = vpack.c.b16 %v405, %v399
    %v580 = vpack.c.b16 %v406, %v400
    %v581 = vpack.c.b16 %v413, %v407
    %v582 = vpack.c.b16 %v414, %v408
    %v583 = vpack.c.b16 %v415, %v409
    %v584 = vpack.c.b16 %v416, %v410
    %v585 = vpack.c.b16 %v417, %v411
    %v586 = vpack.c.b16 %v418, %v412
    %v587 = vpack.c.b16 %v425, %v419
    %v588 = vpack.c.b16 %v426, %v420
    %v589 = vpack.c.b16 %v427, %v421
    %v590 = vpack.c.b16 %v428, %v422
    %v591 = vpack.c.b16 %v429, %v423
    %v592 = vpack.c.b16 %v430, %v424
    %v593 = vpack.c.b16 %v437, %v431
    %v594 = vpack.c.b16 %v438, %v432
    %v595 = vpack.c.b16 %v439, %v433
    %v596 = vpack.c.b16 %v440, %v434
    %v597 = vpack.c.b16 %v441, %v435
    %v598 = vpack.c.b16 %v442, %v436
    %v599 = vpack.c.b16 %v449, %v443
    %v600 = vpack.c.b16 %v450, %v444
    %v601 = vpack.c.b16 %v451, %v445
    %v602 = vpack.c.b16 %v452, %v446
    %v603 = vpack.c.b16 %v453, %v447
    %v604 = vpack.c.b16 %v454, %v448
    %v605 = vpack.c.b16 %v461, %v455
    %v606 = vpack.c.b16 %v462, %v456
    %v607 = vpack.c.b16 %v463, %v457
    %v608 = vpack.c.b16 %v464, %v458
    %v609 = vpack.c.b16 %v465, %v459
    %v610 = vpack.c.b16 %v466, %v460
    %v611 = vpack.c.b16 %v473, %v467
    %v612 = vpack.c.b16 %v474, %v468
    %v613 = vpack.c.b16 %v475, %v469
    %v614 = vpack.c.b16 %v476, %v470
    %v615 = vpack.c.b16 %v477, %v471
    %v616 = vpack.c.b16 %v478, %v472
    %v617 = vpack.c.b16 %v485, %v479
    %v618 = vpack.c.b16 %v486, %v480
    %v619 = vpack.c.b16 %v487, %v481
    %v620 = vpack.c.b16 %v488, %v482
    %v621 = vpack.c.b16 %v489, %v483
    %v622 = vpack.c.b16 %v490, %v484
    %v623 = vpack.c.b16 %v497, %v491
    %v624 = vpack.c.b16 %v498, %v492
    %v625 = vpack.c.b16 %v499, %v493
    %v626 = vpack.c.b16 %v500, %v494
    %v627 = vpack.c.b16 %v501, %v495
    %v628 = vpack.c.b16 %v502, %v496
    %v629 = vpack.c.b16 %v509, %v503
    %v630 = vpack.c.b16 %v510, %v504
    %v631 = vpack.c.b16 %v511, %v505
    %v632 = vpack.c.b16 %v512, %v506
    %v633 = vpack.c.b16 %v513, %v507
    %v634 = vpack.c.b16 %v514, %v508
    %v635 = vpack.c.b16 %v521, %v515
    %v636 = vpack.c.b16 %v522, %v516
    %v637 = vpack.c.b16 %v523, %v517
    %v638 = vpack.c.b16 %v524, %v518
    %v639 = vpack.c.b16 %v525, %v519
    %v640 = vpack.c.b16 %v526, %v520
    %v641 = vpack.c.b16 %v533, %v527
    %v642 = vpack.c.b16 %v534, %v528
    %v643 = vpack.c.b16 %v535, %v529
    %v644 = vpack.c.b16 %v536, %v530
    %v645 = vpack.c.b16 %v537, %v531
    %v646 = vpack.c.b16 %v538, %v532
    %v647 = vpack.c.b16 %v545, %v539
    %v648 = vpack.c.b16 %v546, %v540
    %v649 = vpack.c.b16 %v547, %v541
    %v650 = vpack.c.b16 %v548, %v542
    %v651 = vpack.c.b16 %v549, %v543
    %v652 = vpack.c.b16 %v550, %v544
    %v653 = vpack.c.b16 %v557, %v551
    %v654 = vpack.c.b16 %v558, %v552
    %v655 = vpack.c.b16 %v559, %v553
    %v656 = vpack.c.b16 %v560, %v554
    %v657 = vpack.c.b16 %v561, %v555
    %v658 = vpack.c.b16 %v562, %v556
    %755 = vmatprep.subr.bf16.mxu0 %v606
    %756 = vmatpush1.bf16.msra.mxu0 %v605
    %757 = vmatprep.subr.bf16.mxu0 %v600
    %758 = vmatpush1.bf16.msra.mxu0 %v599
    %759 = vmatprep.subr.bf16.mxu0 %v594
    %760 = vmatpush1.bf16.msra.mxu0 %v593
    %761 = vmatprep.subr.bf16.mxu0 %v588
    %762 = vmatpush1.bf16.msra.mxu0 %v587
    %763 = vmatprep.subr.bf16.mxu0 %v582
    %764 = vmatpush1.bf16.msra.mxu0 %v581
    %765 = vmatprep.subr.bf16.mxu0 %v576
    %766 = vmatpush1.bf16.msra.mxu0 %v575
    %767 = vmatprep.subr.bf16.mxu0 %v570
    %768 = vmatpush1.bf16.msra.mxu0 %v569
    %769 = vmatprep.subr.bf16.mxu0 %v564
    %770 = vmatpush1.bf16.msra.mxu0 %v563
    %771 = vmatprep.subr.bf16.mxu0 %v654
    %772 = vmatpush2.bf16.msra.mxu0 %v653
    %773 = vmatprep.subr.bf16.mxu0 %v648
    %774 = vmatpush2.bf16.msra.mxu0 %v647
    %775 = vmatprep.subr.bf16.mxu0 %v642
    %776 = vmatpush2.bf16.msra.mxu0 %v641
    %777 = vmatprep.subr.bf16.mxu0 %v636
    %778 = vmatpush2.bf16.msra.mxu0 %v635
    %779 = vmatprep.subr.bf16.mxu0 %v630
    %780 = vmatpush2.bf16.msra.mxu0 %v629
    %781 = vmatprep.subr.bf16.mxu0 %v624
    %782 = vmatpush2.bf16.msra.mxu0 %v623
    %783 = vmatprep.subr.bf16.mxu0 %v618
    %784 = vmatpush2.bf16.msra.mxu0 %v617
    %785 = vmatprep.subr.bf16.mxu0 %v612
    %786 = vmatpush2.bf16.msra.mxu0 %v611
    %787 = vmatprep.mubr.bf16.mxu0 %v146
    %788 = vmatmul.mubr.bf16.gmra.mxu0 %v145
    %v789 = vpop.f32.mrf.mxu0
    %v790 = vadd.f32 %v248, %v789
    %v791 = vpop.f32.mrf.mxu0
    %v792 = vadd.f32 %v252, %v791
    %v793 = vpop.f32.mrf.mxu0
    %v794 = vpop.f32.mrf.mxu0
    %795 = vdwg.mxu0
    %796 = vmatprep.subr.bf16.mxu0 %v608
    %797 = vmatpush1.bf16.msra.mxu0 %v607
    %798 = vmatprep.subr.bf16.mxu0 %v602
    %799 = vmatpush1.bf16.msra.mxu0 %v601
    %800 = vmatprep.subr.bf16.mxu0 %v596
    %801 = vmatpush1.bf16.msra.mxu0 %v595
    %802 = vmatprep.subr.bf16.mxu0 %v590
    %803 = vmatpush1.bf16.msra.mxu0 %v589
    %804 = vmatprep.subr.bf16.mxu0 %v584
    %805 = vmatpush1.bf16.msra.mxu0 %v583
    %806 = vmatprep.subr.bf16.mxu0 %v578
    %807 = vmatpush1.bf16.msra.mxu0 %v577
    %808 = vmatprep.subr.bf16.mxu0 %v572
    %809 = vmatpush1.bf16.msra.mxu0 %v571
    %810 = vmatprep.subr.bf16.mxu0 %v566
    %811 = vmatpush1.bf16.msra.mxu0 %v565
    %812 = vmatprep.subr.bf16.mxu0 %v656
    %813 = vmatpush2.bf16.msra.mxu0 %v655
    %814 = vmatprep.subr.bf16.mxu0 %v650
    %815 = vmatpush2.bf16.msra.mxu0 %v649
    %816 = vmatprep.subr.bf16.mxu0 %v644
    %817 = vmatpush2.bf16.msra.mxu0 %v643
    %818 = vmatprep.subr.bf16.mxu0 %v638
    %819 = vmatpush2.bf16.msra.mxu0 %v637
    %820 = vmatprep.subr.bf16.mxu0 %v632
    %821 = vmatpush2.bf16.msra.mxu0 %v631
    %822 = vmatprep.subr.bf16.mxu0 %v626
    %823 = vmatpush2.bf16.msra.mxu0 %v625
    %824 = vmatprep.subr.bf16.mxu0 %v620
    %825 = vmatpush2.bf16.msra.mxu0 %v619
    %826 = vmatprep.subr.bf16.mxu0 %v614
    %827 = vmatpush2.bf16.msra.mxu0 %v613
    %828 = vmatprep.mubr.bf16.mxu0 %v146
    %829 = vmatmul.mubr.bf16.gmra.mxu0 %v145
    %v830 = vpop.f32.mrf.mxu0
    %v831 = vadd.f32 %v256, %v830
    %v832 = vpop.f32.mrf.mxu0
    %v833 = vadd.f32 %v260, %v832
    %v834 = vpop.f32.mrf.mxu0
    %v835 = vpop.f32.mrf.mxu0
    %836 = vdwg.mxu0
    %837 = vmatprep.subr.bf16.mxu0 %v610
    %838 = vmatpush1.bf16.msra.mxu0 %v609
    %839 = vmatprep.subr.bf16.mxu0 %v604
    %840 = vmatpush1.bf16.msra.mxu0 %v603
    %841 = vmatprep.subr.bf16.mxu0 %v598
    %842 = vmatpush1.bf16.msra.mxu0 %v597
    %843 = vmatprep.subr.bf16.mxu0 %v592
    %844 = vmatpush1.bf16.msra.mxu0 %v591
    %845 = vmatprep.subr.bf16.mxu0 %v586
    %846 = vmatpush1.bf16.msra.mxu0 %v585
    %847 = vmatprep.subr.bf16.mxu0 %v580
    %848 = vmatpush1.bf16.msra.mxu0 %v579
    %849 = vmatprep.subr.bf16.mxu0 %v574
    %850 = vmatpush1.bf16.msra.mxu0 %v573
    %851 = vmatprep.subr.bf16.mxu0 %v568
    %852 = vmatpush1.bf16.msra.mxu0 %v567
    %853 = vmatprep.subr.bf16.mxu0 %v658
    %854 = vmatpush2.bf16.msra.mxu0 %v657
    %855 = vmatprep.subr.bf16.mxu0 %v652
    %856 = vmatpush2.bf16.msra.mxu0 %v651
    %857 = vmatprep.subr.bf16.mxu0 %v646
    %858 = vmatpush2.bf16.msra.mxu0 %v645
    %859 = vmatprep.subr.bf16.mxu0 %v640
    %860 = vmatpush2.bf16.msra.mxu0 %v639
    %861 = vmatprep.subr.bf16.mxu0 %v634
    %862 = vmatpush2.bf16.msra.mxu0 %v633
    %863 = vmatprep.subr.bf16.mxu0 %v628
    %864 = vmatpush2.bf16.msra.mxu0 %v627
    %865 = vmatprep.subr.bf16.mxu0 %v622
    %866 = vmatpush2.bf16.msra.mxu0 %v621
    %867 = vmatprep.subr.bf16.mxu0 %v616
    %868 = vmatpush2.bf16.msra.mxu0 %v615
    %869 = vmatprep.mubr.bf16.mxu0 %v146
    %870 = vmatmul.mubr.bf16.gmra.mxu0 %v145
    %v871 = vpop.f32.mrf.mxu0
    %v872 = vadd.f32 %v264, %v871
    %v873 = vpop.f32.mrf.mxu0
    %v874 = vadd.f32 %v268, %v873
    %v875 = vpop.f32.mrf.mxu0
    %v876 = vpop.f32.mrf.mxu0
    %877 = vdwg.mxu0
    %v878 = vmul.f32 %v790, %v112
    %879 = vrot.lane.b32.xlu0 %v790, 64
    %v880 = vpop.permute.xlu0 %879
    %v881 = vmul.f32 %v880, %v113
    %v882 = vadd.f32 %v878, %v881
    %v883 = vmul.f32 %v831, %v112
    %884 = vrot.lane.b32.xlu0 %v831, 64
    %v885 = vpop.permute.xlu0 %884
    %v886 = vmul.f32 %v885, %v113
    %v887 = vadd.f32 %v883, %v886
    %888 = vmatprep.subr.mxu0 0.0
    %889 = vmatpush1.xpose.msra.mxu0 0.0
    %890 = vmatprep.subr.mxu0 0.0
    %891 = vmatpush1.xpose.msra.mxu0 0.0
    %892 = vmatprep.subr.mxu0 0.0
    %893 = vmatpush1.xpose.msra.mxu0 0.0
    %894 = vmatprep.subr.mxu0 0.0
    %895 = vmatpush1.xpose.msra.mxu0 0.0
    %896 = vmatprep.subr.mxu0 0.0
    %897 = vmatpush1.xpose.msra.mxu0 0.0
    %898 = vmatprep.subr.mxu0 0.0
    %899 = vmatpush1.xpose.msra.mxu0 0.0
    %900 = vmatprep.subr.mxu0 0.0
    %901 = vmatpush1.xpose.msra.mxu0 0.0
    %902 = vmatprep.subr.mxu0 0.0
    %903 = vmatpush1.xpose.msra.mxu0 0.0
    %904 = vmatprep.subr.mxu0 0.0
    %905 = vmatpush1.xpose.msra.mxu0 0.0
    %906 = vmatprep.subr.mxu0 0.0
    %907 = vmatpush1.xpose.msra.mxu0 0.0
    %908 = vmatprep.subr.mxu0 0.0
    %909 = vmatpush1.xpose.msra.mxu0 0.0
    %910 = vmatprep.subr.mxu0 0.0
    %911 = vmatpush1.xpose.msra.mxu0 0.0
    %912 = vmatprep.subr.mxu0 0.0
    %913 = vmatpush1.xpose.msra.mxu0 0.0
    %914 = vmatprep.subr.mxu0 0.0
    %915 = vmatpush1.xpose.msra.mxu0 0.0
    %916 = vmatprep.subr.mxu0 0.0
    %917 = vmatpush1.xpose.msra.mxu0 0.0
    %918 = vmatprep.subr.mxu0 0.0
    %919 = vmatpush1.xpose.msra.mxu0 %v887
    %920 = vmatprep.subr.mxu0 0.0
    %921 = vmatpush2.xpose.msra.mxu0 0.0
    %922 = vmatprep.subr.mxu0 0.0
    %923 = vmatpush2.xpose.msra.mxu0 0.0
    %924 = vmatprep.subr.mxu0 0.0
    %925 = vmatpush2.xpose.msra.mxu0 0.0
    %926 = vmatprep.subr.mxu0 0.0
    %927 = vmatpush2.xpose.msra.mxu0 0.0
    %928 = vmatprep.subr.mxu0 0.0
    %929 = vmatpush2.xpose.msra.mxu0 0.0
    %930 = vmatprep.subr.mxu0 0.0
    %931 = vmatpush2.xpose.msra.mxu0 0.0
    %932 = vmatprep.subr.mxu0 0.0
    %933 = vmatpush2.xpose.msra.mxu0 0.0
    %934 = vmatprep.subr.mxu0 0.0
    %935 = vmatpush2.xpose.msra.mxu0 0.0
    %936 = vmatprep.subr.mxu0 0.0
    %937 = vmatpush2.xpose.msra.mxu0 0.0
    %938 = vmatprep.subr.mxu0 0.0
    %939 = vmatpush2.xpose.msra.mxu0 0.0
    %940 = vmatprep.subr.mxu0 0.0
    %941 = vmatpush2.xpose.msra.mxu0 0.0
    %942 = vmatprep.subr.mxu0 0.0
    %943 = vmatpush2.xpose.msra.mxu0 0.0
    %944 = vmatprep.subr.mxu0 0.0
    %945 = vmatpush2.xpose.msra.mxu0 0.0
    %946 = vmatprep.subr.mxu0 0.0
    %947 = vmatpush2.xpose.msra.mxu0 0.0
    %948 = vmatprep.subr.mxu0 0.0
    %949 = vmatpush2.xpose.msra.mxu0 0.0
    %950 = vmatprep.subr.mxu0 0.0
    %951 = vmatpush2.xpose.msra.mxu0 0.0
    %952 = vmatprep.mubr.f32.mxu0 0.0
    %953 = vmatmul.mubr.f32.gmra.mxu0 %v882
    %v954 = vpop.f32.mrf.mxu0
    %v955 = vadd.f32 0.0, %v954
    %v956 = vpop.f32.mrf.mxu0
    %957 = vdwg.mxu0
    %v958 = vmul.f32 %v955, 0.088388346
    %v959 = vadd.f32 %v958, %v119
    %vm960 = vcmask 64512
    %v961 = vsel %vm960, %v959, -inf
    %962 = vmax.xlane.f32.xlu0 %v961
    %v963 = vpop.xlane.xlu0 %962
    %v964 = vsub.f32 %v959, %v963
    %v965 = vmul.f32 %v964, 1.442695
    %v966 = vpow.pop %v965
    %v967 = vsel %vm960, %v966, 0.0
    %968 = vadd.xlane.f32.xlu0 %v967
    %v969 = vpop.xlane.xlu0 %968
    %v970 = vrcp.pop %v969
    %v971 = vmul.f32 %v966, %v970
    %v973 = vsel %vm960, %v971, 0
    %975 = vmatprep.subr.mxu0 0.0
    %976 = vmatpush1.msra.mxu0 0.0
    %977 = vmatprep.subr.mxu0 0.0
    %978 = vmatpush1.msra.mxu0 0.0
    %979 = vmatprep.subr.mxu0 0.0
    %980 = vmatpush1.msra.mxu0 0.0
    %981 = vmatprep.subr.mxu0 0.0
    %982 = vmatpush1.msra.mxu0 0.0
    %983 = vmatprep.subr.mxu0 0.0
    %984 = vmatpush1.msra.mxu0 0.0
    %985 = vmatprep.subr.mxu0 0.0
    %986 = vmatpush1.msra.mxu0 0.0
    %987 = vmatprep.subr.mxu0 0.0
    %988 = vmatpush1.msra.mxu0 0.0
    %989 = vmatprep.subr.mxu0 0.0
    %990 = vmatpush1.msra.mxu0 0.0
    %991 = vmatprep.subr.mxu0 0.0
    %992 = vmatpush1.msra.mxu0 0.0
    %993 = vmatprep.subr.mxu0 0.0
    %994 = vmatpush1.msra.mxu0 0.0
    %995 = vmatprep.subr.mxu0 0.0
    %996 = vmatpush1.msra.mxu0 0.0
    %997 = vmatprep.subr.mxu0 0.0
    %998 = vmatpush1.msra.mxu0 0.0
    %999 = vmatprep.subr.mxu0 0.0
    %1000 = vmatpush1.msra.mxu0 0.0
    %1001 = vmatprep.subr.mxu0 0.0
    %1002 = vmatpush1.msra.mxu0 0.0
    %1003 = vmatprep.subr.mxu0 0.0
    %1004 = vmatpush1.msra.mxu0 0.0
    %1005 = vmatprep.subr.mxu0 0.0
    %1006 = vmatpush1.msra.mxu0 %v872
    %1007 = vmatprep.subr.mxu0 0.0
    %1008 = vmatpush2.msra.mxu0 0.0
    %1009 = vmatprep.subr.mxu0 0.0
    %1010 = vmatpush2.msra.mxu0 0.0
    %1011 = vmatprep.subr.mxu0 0.0
    %1012 = vmatpush2.msra.mxu0 0.0
    %1013 = vmatprep.subr.mxu0 0.0
    %1014 = vmatpush2.msra.mxu0 0.0
    %1015 = vmatprep.subr.mxu0 0.0
    %1016 = vmatpush2.msra.mxu0 0.0
    %1017 = vmatprep.subr.mxu0 0.0
    %1018 = vmatpush2.msra.mxu0 0.0
    %1019 = vmatprep.subr.mxu0 0.0
    %1020 = vmatpush2.msra.mxu0 0.0
    %1021 = vmatprep.subr.mxu0 0.0
    %1022 = vmatpush2.msra.mxu0 0.0
    %1023 = vmatprep.subr.mxu0 0.0
    %1024 = vmatpush2.msra.mxu0 0.0
    %1025 = vmatprep.subr.mxu0 0.0
    %1026 = vmatpush2.msra.mxu0 0.0
    %1027 = vmatprep.subr.mxu0 0.0
    %1028 = vmatpush2.msra.mxu0 0.0
    %1029 = vmatprep.subr.mxu0 0.0
    %1030 = vmatpush2.msra.mxu0 0.0
    %1031 = vmatprep.subr.mxu0 0.0
    %1032 = vmatpush2.msra.mxu0 0.0
    %1033 = vmatprep.subr.mxu0 0.0
    %1034 = vmatpush2.msra.mxu0 0.0
    %1035 = vmatprep.subr.mxu0 0.0
    %1036 = vmatpush2.msra.mxu0 0.0
    %1037 = vmatprep.subr.mxu0 0.0
    %1038 = vmatpush2.msra.mxu0 0.0
    %1039 = vmatprep.mubr.f32.mxu0 0.0
    %1040 = vmatmul.mubr.f32.gmra.mxu0 %v973
    %v1041 = vpop.f32.mrf.mxu0
    %v1042 = vadd.f32 0.0, %v1041
    %v1043 = vpop.f32.mrf.mxu0
    %1044 = vdwg.mxu0
    %v1045 = vmul.f32 %v792, %v112
    %1046 = vrot.lane.b32.xlu0 %v792, 64
    %v1047 = vpop.permute.xlu0 %1046
    %v1048 = vmul.f32 %v1047, %v113
    %v1049 = vadd.f32 %v1045, %v1048
    %v1050 = vmul.f32 %v833, %v112
    %1051 = vrot.lane.b32.xlu0 %v833, 64
    %v1052 = vpop.permute.xlu0 %1051
    %v1053 = vmul.f32 %v1052, %v113
    %v1054 = vadd.f32 %v1050, %v1053
    %1055 = vmatprep.subr.mxu0 0.0
    %1056 = vmatpush1.xpose.msra.mxu0 0.0
    %1057 = vmatprep.subr.mxu0 0.0
    %1058 = vmatpush1.xpose.msra.mxu0 0.0
    %1059 = vmatprep.subr.mxu0 0.0
    %1060 = vmatpush1.xpose.msra.mxu0 0.0
    %1061 = vmatprep.subr.mxu0 0.0
    %1062 = vmatpush1.xpose.msra.mxu0 0.0
    %1063 = vmatprep.subr.mxu0 0.0
    %1064 = vmatpush1.xpose.msra.mxu0 0.0
    %1065 = vmatprep.subr.mxu0 0.0
    %1066 = vmatpush1.xpose.msra.mxu0 0.0
    %1067 = vmatprep.subr.mxu0 0.0
    %1068 = vmatpush1.xpose.msra.mxu0 0.0
    %1069 = vmatprep.subr.mxu0 0.0
    %1070 = vmatpush1.xpose.msra.mxu0 0.0
    %1071 = vmatprep.subr.mxu0 0.0
    %1072 = vmatpush1.xpose.msra.mxu0 0.0
    %1073 = vmatprep.subr.mxu0 0.0
    %1074 = vmatpush1.xpose.msra.mxu0 0.0
    %1075 = vmatprep.subr.mxu0 0.0
    %1076 = vmatpush1.xpose.msra.mxu0 0.0
    %1077 = vmatprep.subr.mxu0 0.0
    %1078 = vmatpush1.xpose.msra.mxu0 0.0
    %1079 = vmatprep.subr.mxu0 0.0
    %1080 = vmatpush1.xpose.msra.mxu0 0.0
    %1081 = vmatprep.subr.mxu0 0.0
    %1082 = vmatpush1.xpose.msra.mxu0 0.0
    %1083 = vmatprep.subr.mxu0 0.0
    %1084 = vmatpush1.xpose.msra.mxu0 0.0
    %1085 = vmatprep.subr.mxu0 0.0
    %1086 = vmatpush1.xpose.msra.mxu0 %v1054
    %1087 = vmatprep.subr.mxu0 0.0
    %1088 = vmatpush2.xpose.msra.mxu0 0.0
    %1089 = vmatprep.subr.mxu0 0.0
    %1090 = vmatpush2.xpose.msra.mxu0 0.0
    %1091 = vmatprep.subr.mxu0 0.0
    %1092 = vmatpush2.xpose.msra.mxu0 0.0
    %1093 = vmatprep.subr.mxu0 0.0
    %1094 = vmatpush2.xpose.msra.mxu0 0.0
    %1095 = vmatprep.subr.mxu0 0.0
    %1096 = vmatpush2.xpose.msra.mxu0 0.0
    %1097 = vmatprep.subr.mxu0 0.0
    %1098 = vmatpush2.xpose.msra.mxu0 0.0
    %1099 = vmatprep.subr.mxu0 0.0
    %1100 = vmatpush2.xpose.msra.mxu0 0.0
    %1101 = vmatprep.subr.mxu0 0.0
    %1102 = vmatpush2.xpose.msra.mxu0 0.0
    %1103 = vmatprep.subr.mxu0 0.0
    %1104 = vmatpush2.xpose.msra.mxu0 0.0
    %1105 = vmatprep.subr.mxu0 0.0
    %1106 = vmatpush2.xpose.msra.mxu0 0.0
    %1107 = vmatprep.subr.mxu0 0.0
    %1108 = vmatpush2.xpose.msra.mxu0 0.0
    %1109 = vmatprep.subr.mxu0 0.0
    %1110 = vmatpush2.xpose.msra.mxu0 0.0
    %1111 = vmatprep.subr.mxu0 0.0
    %1112 = vmatpush2.xpose.msra.mxu0 0.0
    %1113 = vmatprep.subr.mxu0 0.0
    %1114 = vmatpush2.xpose.msra.mxu0 0.0
    %1115 = vmatprep.subr.mxu0 0.0
    %1116 = vmatpush2.xpose.msra.mxu0 0.0
    %1117 = vmatprep.subr.mxu0 0.0
    %1118 = vmatpush2.xpose.msra.mxu0 0.0
    %1119 = vmatprep.mubr.f32.mxu0 0.0
    %1120 = vmatmul.mubr.f32.gmra.mxu0 %v1049
    %v1121 = vpop.f32.mrf.mxu0
    %v1122 = vadd.f32 0.0, %v1121
    %v1123 = vpop.f32.mrf.mxu0
    %1124 = vdwg.mxu0
    %v1125 = vmul.f32 %v1122, 0.088388346
    %v1126 = vadd.f32 %v1125, %v119
    %v1127 = vsel %vm960, %v1126, -inf
    %1128 = vmax.xlane.f32.xlu0 %v1127
    %v1129 = vpop.xlane.xlu0 %1128
    %v1130 = vsub.f32 %v1126, %v1129
    %v1131 = vmul.f32 %v1130, 1.442695
    %v1132 = vpow.pop %v1131
    %v1133 = vsel %vm960, %v1132, 0.0
    %1134 = vadd.xlane.f32.xlu0 %v1133
    %v1135 = vpop.xlane.xlu0 %1134
    %v1136 = vrcp.pop %v1135
    %v1137 = vmul.f32 %v1132, %v1136
    %v1139 = vsel %vm960, %v1137, 0
    %1141 = vmatprep.subr.mxu0 0.0
    %1142 = vmatpush1.msra.mxu0 0.0
    %1143 = vmatprep.subr.mxu0 0.0
    %1144 = vmatpush1.msra.mxu0 0.0
    %1145 = vmatprep.subr.mxu0 0.0
    %1146 = vmatpush1.msra.mxu0 0.0
    %1147 = vmatprep.subr.mxu0 0.0
    %1148 = vmatpush1.msra.mxu0 0.0
    %1149 = vmatprep.subr.mxu0 0.0
    %1150 = vmatpush1.msra.mxu0 0.0
    %1151 = vmatprep.subr.mxu0 0.0
    %1152 = vmatpush1.msra.mxu0 0.0
    %1153 = vmatprep.subr.mxu0 0.0
    %1154 = vmatpush1.msra.mxu0 0.0
    %1155 = vmatprep.subr.mxu0 0.0
    %1156 = vmatpush1.msra.mxu0 0.0
    %1157 = vmatprep.subr.mxu0 0.0
    %1158 = vmatpush1.msra.mxu0 0.0
    %1159 = vmatprep.subr.mxu0 0.0
    %1160 = vmatpush1.msra.mxu0 0.0
    %1161 = vmatprep.subr.mxu0 0.0
    %1162 = vmatpush1.msra.mxu0 0.0
    %1163 = vmatprep.subr.mxu0 0.0
    %1164 = vmatpush1.msra.mxu0 0.0
    %1165 = vmatprep.subr.mxu0 0.0
    %1166 = vmatpush1.msra.mxu0 0.0
    %1167 = vmatprep.subr.mxu0 0.0
    %1168 = vmatpush1.msra.mxu0 0.0
    %1169 = vmatprep.subr.mxu0 0.0
    %1170 = vmatpush1.msra.mxu0 0.0
    %1171 = vmatprep.subr.mxu0 0.0
    %1172 = vmatpush1.msra.mxu0 %v874
    %1173 = vmatprep.subr.mxu0 0.0
    %1174 = vmatpush2.msra.mxu0 0.0
    %1175 = vmatprep.subr.mxu0 0.0
    %1176 = vmatpush2.msra.mxu0 0.0
    %1177 = vmatprep.subr.mxu0 0.0
    %1178 = vmatpush2.msra.mxu0 0.0
    %1179 = vmatprep.subr.mxu0 0.0
    %1180 = vmatpush2.msra.mxu0 0.0
    %1181 = vmatprep.subr.mxu0 0.0
    %1182 = vmatpush2.msra.mxu0 0.0
    %1183 = vmatprep.subr.mxu0 0.0
    %1184 = vmatpush2.msra.mxu0 0.0
    %1185 = vmatprep.subr.mxu0 0.0
    %1186 = vmatpush2.msra.mxu0 0.0
    %1187 = vmatprep.subr.mxu0 0.0
    %1188 = vmatpush2.msra.mxu0 0.0
    %1189 = vmatprep.subr.mxu0 0.0
    %1190 = vmatpush2.msra.mxu0 0.0
    %1191 = vmatprep.subr.mxu0 0.0
    %1192 = vmatpush2.msra.mxu0 0.0
    %1193 = vmatprep.subr.mxu0 0.0
    %1194 = vmatpush2.msra.mxu0 0.0
    %1195 = vmatprep.subr.mxu0 0.0
    %1196 = vmatpush2.msra.mxu0 0.0
    %1197 = vmatprep.subr.mxu0 0.0
    %1198 = vmatpush2.msra.mxu0 0.0
    %1199 = vmatprep.subr.mxu0 0.0
    %1200 = vmatpush2.msra.mxu0 0.0
    %1201 = vmatprep.subr.mxu0 0.0
    %1202 = vmatpush2.msra.mxu0 0.0
    %1203 = vmatprep.subr.mxu0 0.0
    %1204 = vmatpush2.msra.mxu0 0.0
    %1205 = vmatprep.mubr.f32.mxu0 0.0
    %1206 = vmatmul.mubr.f32.gmra.mxu0 %v1139
    %v1207 = vpop.f32.mrf.mxu0
    %v1208 = vadd.f32 0.0, %v1207
    %v1209 = vpop.f32.mrf.mxu0
    %1210 = vdwg.mxu0
    %v1211 = vpack.c.bf16 %v1042, %v1042
    %v1212 = vpack.c.bf16 %v1208, %v1208
    %v1213 = vld [vmem:[#allocation5] sm:$0xff]
    %v1214 = vld [vmem:[#allocation5 + $0x8] sm:$0xff]
    %v1215 = vld [vmem:[#allocation5 + $0x10] sm:$0xff]
    %v1216 = vld [vmem:[#allocation5 + $0x18] sm:$0xff]
    %v1217 = vld [vmem:[#allocation5 + $0x20] sm:$0xff]
    %v1218 = vld [vmem:[#allocation5 + $0x28] sm:$0xff]
    %v1219 = vld [vmem:[#allocation5 + $0x30] sm:$0xff]
    %v1220 = vld [vmem:[#allocation5 + $0x38] sm:$0xff]
    %v1221 = vld [vmem:[#allocation5 + $0x40] sm:$0xff]
    %v1222 = vld [vmem:[#allocation5 + $0x48] sm:$0xff]
    %v1223 = vld [vmem:[#allocation5 + $0x50] sm:$0xff]
    %v1224 = vld [vmem:[#allocation5 + $0x58] sm:$0xff]
    %v1225 = vld [vmem:[#allocation5 + $0x60] sm:$0xff]
    %v1226 = vld [vmem:[#allocation5 + $0x68] sm:$0xff]
    %v1227 = vld [vmem:[#allocation5 + $0x70] sm:$0xff]
    %v1228 = vld [vmem:[#allocation5 + $0x78] sm:$0xff]
    %v1229 = vld [vmem:[#allocation5 + $0x80] sm:$0xff]
    %v1230 = vld [vmem:[#allocation5 + $0x88] sm:$0xff]
    %v1231 = vld [vmem:[#allocation5 + $0x90] sm:$0xff]
    %v1232 = vld [vmem:[#allocation5 + $0x98] sm:$0xff]
    %v1233 = vld [vmem:[#allocation5 + $0xa0] sm:$0xff]
    %v1234 = vld [vmem:[#allocation5 + $0xa8] sm:$0xff]
    %v1235 = vld [vmem:[#allocation5 + $0xb0] sm:$0xff]
    %v1236 = vld [vmem:[#allocation5 + $0xb8] sm:$0xff]
    %v1237 = vld [vmem:[#allocation5 + $0xc0] sm:$0xff]
    %v1238 = vld [vmem:[#allocation5 + $0xc8] sm:$0xff]
    %v1239 = vld [vmem:[#allocation5 + $0xd0] sm:$0xff]
    %v1240 = vld [vmem:[#allocation5 + $0xd8] sm:$0xff]
    %v1241 = vld [vmem:[#allocation5 + $0xe0] sm:$0xff]
    %v1242 = vld [vmem:[#allocation5 + $0xe8] sm:$0xff]
    %v1243 = vld [vmem:[#allocation5 + $0xf0] sm:$0xff]
    %v1244 = vld [vmem:[#allocation5 + $0xf8] sm:$0xff]
    %v1277 = vunpack.c.l.b16 %v1213
    %v1278 = vunpack.c.h.b16 %v1213
    %v1279 = vunpack.c.l.b16 %v1214
    %v1280 = vunpack.c.h.b16 %v1214
    %v1281 = vunpack.c.l.b16 %v1215
    %v1282 = vunpack.c.h.b16 %v1215
    %v1283 = vunpack.c.l.b16 %v1216
    %v1284 = vunpack.c.h.b16 %v1216
    %v1285 = vunpack.c.l.b16 %v1217
    %v1286 = vunpack.c.h.b16 %v1217
    %v1287 = vunpack.c.l.b16 %v1218
    %v1288 = vunpack.c.h.b16 %v1218
    %v1289 = vunpack.c.l.b16 %v1219
    %v1290 = vunpack.c.h.b16 %v1219
    %v1291 = vunpack.c.l.b16 %v1220
    %v1292 = vunpack.c.h.b16 %v1220
    %v1293 = vunpack.c.l.b16 %v1221
    %v1294 = vunpack.c.h.b16 %v1221
    %v1295 = vunpack.c.l.b16 %v1222
    %v1296 = vunpack.c.h.b16 %v1222
    %v1297 = vunpack.c.l.b16 %v1223
    %v1298 = vunpack.c.h.b16 %v1223
    %v1299 = vunpack.c.l.b16 %v1224
    %v1300 = vunpack.c.h.b16 %v1224
    %v1301 = vunpack.c.l.b16 %v1225
    %v1302 = vunpack.c.h.b16 %v1225
    %v1303 = vunpack.c.l.b16 %v1226
    %v1304 = vunpack.c.h.b16 %v1226
    %v1305 = vunpack.c.l.b16 %v1227
    %v1306 = vunpack.c.h.b16 %v1227
    %v1307 = vunpack.c.l.b16 %v1228
    %v1308 = vunpack.c.h.b16 %v1228
    %v1309 = vunpack.c.l.b16 %v1229
    %v1310 = vunpack.c.h.b16 %v1229
    %v1311 = vunpack.c.l.b16 %v1230
    %v1312 = vunpack.c.h.b16 %v1230
    %v1313 = vunpack.c.l.b16 %v1231
    %v1314 = vunpack.c.h.b16 %v1231
    %v1315 = vunpack.c.l.b16 %v1232
    %v1316 = vunpack.c.h.b16 %v1232
    %v1317 = vunpack.c.l.b16 %v1233
    %v1318 = vunpack.c.h.b16 %v1233
    %v1319 = vunpack.c.l.b16 %v1234
    %v1320 = vunpack.c.h.b16 %v1234
    %v1321 = vunpack.c.l.b16 %v1235
    %v1322 = vunpack.c.h.b16 %v1235
    %v1323 = vunpack.c.l.b16 %v1236
    %v1324 = vunpack.c.h.b16 %v1236
    %v1325 = vunpack.c.l.b16 %v1237
    %v1326 = vunpack.c.h.b16 %v1237
    %v1327 = vunpack.c.l.b16 %v1238
    %v1328 = vunpack.c.h.b16 %v1238
    %v1329 = vunpack.c.l.b16 %v1239
    %v1330 = vunpack.c.h.b16 %v1239
    %v1331 = vunpack.c.l.b16 %v1240
    %v1332 = vunpack.c.h.b16 %v1240
    %v1333 = vunpack.c.l.b16 %v1241
    %v1334 = vunpack.c.h.b16 %v1241
    %v1335 = vunpack.c.l.b16 %v1242
    %v1336 = vunpack.c.h.b16 %v1242
    %v1337 = vunpack.c.l.b16 %v1243
    %v1338 = vunpack.c.h.b16 %v1243
    %v1339 = vunpack.c.l.b16 %v1244
    %v1340 = vunpack.c.h.b16 %v1244
    %v1341 = vpack.c.b16 %v1279, %v1277
    %v1342 = vpack.c.b16 %v1280, %v1278
    %v1343 = vpack.c.b16 %v1283, %v1281
    %v1344 = vpack.c.b16 %v1284, %v1282
    %v1345 = vpack.c.b16 %v1287, %v1285
    %v1346 = vpack.c.b16 %v1288, %v1286
    %v1347 = vpack.c.b16 %v1291, %v1289
    %v1348 = vpack.c.b16 %v1292, %v1290
    %v1349 = vpack.c.b16 %v1295, %v1293
    %v1350 = vpack.c.b16 %v1296, %v1294
    %v1351 = vpack.c.b16 %v1299, %v1297
    %v1352 = vpack.c.b16 %v1300, %v1298
    %v1353 = vpack.c.b16 %v1303, %v1301
    %v1354 = vpack.c.b16 %v1304, %v1302
    %v1355 = vpack.c.b16 %v1307, %v1305
    %v1356 = vpack.c.b16 %v1308, %v1306
    %v1357 = vpack.c.b16 %v1311, %v1309
    %v1358 = vpack.c.b16 %v1312, %v1310
    %v1359 = vpack.c.b16 %v1315, %v1313
    %v1360 = vpack.c.b16 %v1316, %v1314
    %v1361 = vpack.c.b16 %v1319, %v1317
    %v1362 = vpack.c.b16 %v1320, %v1318
    %v1363 = vpack.c.b16 %v1323, %v1321
    %v1364 = vpack.c.b16 %v1324, %v1322
    %v1365 = vpack.c.b16 %v1327, %v1325
    %v1366 = vpack.c.b16 %v1328, %v1326
    %v1367 = vpack.c.b16 %v1331, %v1329
    %v1368 = vpack.c.b16 %v1332, %v1330
    %v1369 = vpack.c.b16 %v1335, %v1333
    %v1370 = vpack.c.b16 %v1336, %v1334
    %v1371 = vpack.c.b16 %v1339, %v1337
    %v1372 = vpack.c.b16 %v1340, %v1338
    %1405 = vmatprep.subr.bf16.mxu0 %v1356
    %1406 = vmatpush1.bf16.msra.mxu0 %v1355
    %1407 = vmatprep.subr.bf16.mxu0 %v1354
    %1408 = vmatpush1.bf16.msra.mxu0 %v1353
    %1409 = vmatprep.subr.bf16.mxu0 %v1352
    %1410 = vmatpush1.bf16.msra.mxu0 %v1351
    %1411 = vmatprep.subr.bf16.mxu0 %v1350
    %1412 = vmatpush1.bf16.msra.mxu0 %v1349
    %1413 = vmatprep.subr.bf16.mxu0 %v1348
    %1414 = vmatpush1.bf16.msra.mxu0 %v1347
    %1415 = vmatprep.subr.bf16.mxu0 %v1346
    %1416 = vmatpush1.bf16.msra.mxu0 %v1345
    %1417 = vmatprep.subr.bf16.mxu0 %v1344
    %1418 = vmatpush1.bf16.msra.mxu0 %v1343
    %1419 = vmatprep.subr.bf16.mxu0 %v1342
    %1420 = vmatpush1.bf16.msra.mxu0 %v1341
    %1421 = vmatprep.subr.bf16.mxu0 %v1372
    %1422 = vmatpush2.bf16.msra.mxu0 %v1371
    %1423 = vmatprep.subr.bf16.mxu0 %v1370
    %1424 = vmatpush2.bf16.msra.mxu0 %v1369
    %1425 = vmatprep.subr.bf16.mxu0 %v1368
    %1426 = vmatpush2.bf16.msra.mxu0 %v1367
    %1427 = vmatprep.subr.bf16.mxu0 %v1366
    %1428 = vmatpush2.bf16.msra.mxu0 %v1365
    %1429 = vmatprep.subr.bf16.mxu0 %v1364
    %1430 = vmatpush2.bf16.msra.mxu0 %v1363
    %1431 = vmatprep.subr.bf16.mxu0 %v1362
    %1432 = vmatpush2.bf16.msra.mxu0 %v1361
    %1433 = vmatprep.subr.bf16.mxu0 %v1360
    %1434 = vmatpush2.bf16.msra.mxu0 %v1359
    %1435 = vmatprep.subr.bf16.mxu0 %v1358
    %1436 = vmatpush2.bf16.msra.mxu0 %v1357
    %1437 = vmatprep.mubr.bf16.mxu0 %v1212
    %1438 = vmatmul.mubr.bf16.gmra.mxu0 %v1211
    %v1439 = vpop.f32.mrf.mxu0
    %v1440 = vadd.f32 0.0, %v1439
    %v1441 = vpop.f32.mrf.mxu0
    %v1442 = vadd.f32 0.0, %v1441
    %v1443 = vpop.f32.mrf.mxu0
    %v1444 = vpop.f32.mrf.mxu0
    %1445 = vdwg.mxu0
    %v1446 = vadd.f32 %v110, %v1440
    %v1447 = vadd.f32 %v111, %v1442
    %v1448 = vld [vmem:[%s7] sm:$0x3]
    %v1449 = vmul.f32 %v1446, %v1446
    %v1450 = vmul.f32 %v1447, %v1447
    %v1451 = vadd.f32 %v1449, %v1450
    %1452 = vadd.xlane.f32.xlu0 %v1451
    %v1453 = vpop.xlane.xlu0 %1452
    %v1454 = vmul.f32 %v1453, %v126
    %v1455 = vadd.f32 %v1454, 1e-06
    %v1456 = vrsqrt.pop %v1455
    %v1457 = vmul.f32 %v1446, %v1456
    %v1458 = vmul.f32 %v1447, %v1456
    %v1460 = vlaneseq
    %v1461 = vshrl.u32 %v1460, 7
    %v1462 = vsub.s32 0, %v1461
    %v1463 = vrot.slane %v1448, %v1462
    %v1464 = vlaneseq
    %v1465 = vshrl.u32 %v1464, 7
    %v1466 = vsub.s32 1, %v1465
    %v1467 = vrot.slane %v1448, %v1466
    %v1470 = vmul.f32 %v1457, %v1463
    %v1471 = vmul.f32 %v1458, %v1467
    %v1472 = vpack.c.bf16 %v1470, %v1470
    %v1473 = vpack.c.bf16 %v1471, %v1471
    %v1474 = vld [vmem:[#allocation7] sm:$0xff]
    %v1475 = vld [vmem:[#allocation7 + $0x8] sm:$0xff]
    %v1476 = vld [vmem:[#allocation7 + $0x10] sm:$0xff]
    %v1477 = vld [vmem:[#allocation7 + $0x18] sm:$0xff]
    %v1478 = vld [vmem:[#allocation7 + $0x20] sm:$0xff]
    %v1479 = vld [vmem:[#allocation7 + $0x28] sm:$0xff]
    %v1480 = vld [vmem:[#allocation7 + $0x30] sm:$0xff]
    %v1481 = vld [vmem:[#allocation7 + $0x38] sm:$0xff]
    %v1482 = vld [vmem:[#allocation7 + $0x40] sm:$0xff]
    %v1483 = vld [vmem:[#allocation7 + $0x48] sm:$0xff]
    %v1484 = vld [vmem:[#allocation7 + $0x50] sm:$0xff]
    %v1485 = vld [vmem:[#allocation7 + $0x58] sm:$0xff]
    %v1486 = vld [vmem:[#allocation7 + $0x60] sm:$0xff]
    %v1487 = vld [vmem:[#allocation7 + $0x68] sm:$0xff]
    %v1488 = vld [vmem:[#allocation7 + $0x70] sm:$0xff]
    %v1489 = vld [vmem:[#allocation7 + $0x78] sm:$0xff]
    %v1490 = vld [vmem:[#allocation7 + $0x80] sm:$0xff]
    %v1491 = vld [vmem:[#allocation7 + $0x88] sm:$0xff]
    %v1492 = vld [vmem:[#allocation7 + $0x90] sm:$0xff]
    %v1493 = vld [vmem:[#allocation7 + $0x98] sm:$0xff]
    %v1494 = vld [vmem:[#allocation7 + $0xa0] sm:$0xff]
    %v1495 = vld [vmem:[#allocation7 + $0xa8] sm:$0xff]
    %v1496 = vld [vmem:[#allocation7 + $0xb0] sm:$0xff]
    %v1497 = vld [vmem:[#allocation7 + $0xb8] sm:$0xff]
    %v1498 = vld [vmem:[#allocation7 + $0xc0] sm:$0xff]
    %v1499 = vld [vmem:[#allocation7 + $0xc8] sm:$0xff]
    %v1500 = vld [vmem:[#allocation7 + $0xd0] sm:$0xff]
    %v1501 = vld [vmem:[#allocation7 + $0xd8] sm:$0xff]
    %v1502 = vld [vmem:[#allocation7 + $0xe0] sm:$0xff]
    %v1503 = vld [vmem:[#allocation7 + $0xe8] sm:$0xff]
    %v1504 = vld [vmem:[#allocation7 + $0xf0] sm:$0xff]
    %v1505 = vld [vmem:[#allocation7 + $0xf8] sm:$0xff]
    %v1506 = vld [vmem:[#allocation7 + $0x100] sm:$0xff]
    %v1507 = vld [vmem:[#allocation7 + $0x108] sm:$0xff]
    %v1508 = vld [vmem:[#allocation7 + $0x110] sm:$0xff]
    %v1509 = vld [vmem:[#allocation7 + $0x118] sm:$0xff]
    %v1510 = vld [vmem:[#allocation7 + $0x120] sm:$0xff]
    %v1511 = vld [vmem:[#allocation7 + $0x128] sm:$0xff]
    %v1512 = vld [vmem:[#allocation7 + $0x130] sm:$0xff]
    %v1513 = vld [vmem:[#allocation7 + $0x138] sm:$0xff]
    %v1514 = vld [vmem:[#allocation7 + $0x140] sm:$0xff]
    %v1515 = vld [vmem:[#allocation7 + $0x148] sm:$0xff]
    %v1516 = vld [vmem:[#allocation7 + $0x150] sm:$0xff]
    %v1517 = vld [vmem:[#allocation7 + $0x158] sm:$0xff]
    %v1518 = vld [vmem:[#allocation7 + $0x160] sm:$0xff]
    %v1519 = vld [vmem:[#allocation7 + $0x168] sm:$0xff]
    %v1520 = vld [vmem:[#allocation7 + $0x170] sm:$0xff]
    %v1521 = vld [vmem:[#allocation7 + $0x178] sm:$0xff]
    %v1522 = vld [vmem:[#allocation7 + $0x180] sm:$0xff]
    %v1523 = vld [vmem:[#allocation7 + $0x188] sm:$0xff]
    %v1524 = vld [vmem:[#allocation7 + $0x190] sm:$0xff]
    %v1525 = vld [vmem:[#allocation7 + $0x198] sm:$0xff]
    %v1526 = vld [vmem:[#allocation7 + $0x1a0] sm:$0xff]
    %v1527 = vld [vmem:[#allocation7 + $0x1a8] sm:$0xff]
    %v1528 = vld [vmem:[#allocation7 + $0x1b0] sm:$0xff]
    %v1529 = vld [vmem:[#allocation7 + $0x1b8] sm:$0xff]
    %v1530 = vld [vmem:[#allocation7 + $0x1c0] sm:$0xff]
    %v1531 = vld [vmem:[#allocation7 + $0x1c8] sm:$0xff]
    %v1532 = vld [vmem:[#allocation7 + $0x1d0] sm:$0xff]
    %v1533 = vld [vmem:[#allocation7 + $0x1d8] sm:$0xff]
    %v1534 = vld [vmem:[#allocation7 + $0x1e0] sm:$0xff]
    %v1535 = vld [vmem:[#allocation7 + $0x1e8] sm:$0xff]
    %v1536 = vld [vmem:[#allocation7 + $0x1f0] sm:$0xff]
    %v1537 = vld [vmem:[#allocation7 + $0x1f8] sm:$0xff]
    %v1602 = vunpack.c.l.b16 %v1474
    %v1603 = vunpack.c.h.b16 %v1474
    %v1604 = vunpack.c.l.b16 %v1475
    %v1605 = vunpack.c.h.b16 %v1475
    %v1606 = vunpack.c.l.b16 %v1476
    %v1607 = vunpack.c.h.b16 %v1476
    %v1608 = vunpack.c.l.b16 %v1477
    %v1609 = vunpack.c.h.b16 %v1477
    %v1610 = vunpack.c.l.b16 %v1478
    %v1611 = vunpack.c.h.b16 %v1478
    %v1612 = vunpack.c.l.b16 %v1479
    %v1613 = vunpack.c.h.b16 %v1479
    %v1614 = vunpack.c.l.b16 %v1480
    %v1615 = vunpack.c.h.b16 %v1480
    %v1616 = vunpack.c.l.b16 %v1481
    %v1617 = vunpack.c.h.b16 %v1481
    %v1618 = vunpack.c.l.b16 %v1482
    %v1619 = vunpack.c.h.b16 %v1482
    %v1620 = vunpack.c.l.b16 %v1483
    %v1621 = vunpack.c.h.b16 %v1483
    %v1622 = vunpack.c.l.b16 %v1484
    %v1623 = vunpack.c.h.b16 %v1484
    %v1624 = vunpack.c.l.b16 %v1485
    %v1625 = vunpack.c.h.b16 %v1485
    %v1626 = vunpack.c.l.b16 %v1486
    %v1627 = vunpack.c.h.b16 %v1486
    %v1628 = vunpack.c.l.b16 %v1487
    %v1629 = vunpack.c.h.b16 %v1487
    %v1630 = vunpack.c.l.b16 %v1488
    %v1631 = vunpack.c.h.b16 %v1488
    %v1632 = vunpack.c.l.b16 %v1489
    %v1633 = vunpack.c.h.b16 %v1489
    %v1634 = vunpack.c.l.b16 %v1490
    %v1635 = vunpack.c.h.b16 %v1490
    %v1636 = vunpack.c.l.b16 %v1491
    %v1637 = vunpack.c.h.b16 %v1491
    %v1638 = vunpack.c.l.b16 %v1492
    %v1639 = vunpack.c.h.b16 %v1492
    %v1640 = vunpack.c.l.b16 %v1493
    %v1641 = vunpack.c.h.b16 %v1493
    %v1642 = vunpack.c.l.b16 %v1494
    %v1643 = vunpack.c.h.b16 %v1494
    %v1644 = vunpack.c.l.b16 %v1495
    %v1645 = vunpack.c.h.b16 %v1495
    %v1646 = vunpack.c.l.b16 %v1496
    %v1647 = vunpack.c.h.b16 %v1496
    %v1648 = vunpack.c.l.b16 %v1497
    %v1649 = vunpack.c.h.b16 %v1497
    %v1650 = vunpack.c.l.b16 %v1498
    %v1651 = vunpack.c.h.b16 %v1498
    %v1652 = vunpack.c.l.b16 %v1499
    %v1653 = vunpack.c.h.b16 %v1499
    %v1654 = vunpack.c.l.b16 %v1500
    %v1655 = vunpack.c.h.b16 %v1500
    %v1656 = vunpack.c.l.b16 %v1501
    %v1657 = vunpack.c.h.b16 %v1501
    %v1658 = vunpack.c.l.b16 %v1502
    %v1659 = vunpack.c.h.b16 %v1502
    %v1660 = vunpack.c.l.b16 %v1503
    %v1661 = vunpack.c.h.b16 %v1503
    %v1662 = vunpack.c.l.b16 %v1504
    %v1663 = vunpack.c.h.b16 %v1504
    %v1664 = vunpack.c.l.b16 %v1505
    %v1665 = vunpack.c.h.b16 %v1505
    %v1666 = vunpack.c.l.b16 %v1506
    %v1667 = vunpack.c.h.b16 %v1506
    %v1668 = vunpack.c.l.b16 %v1507
    %v1669 = vunpack.c.h.b16 %v1507
    %v1670 = vunpack.c.l.b16 %v1508
    %v1671 = vunpack.c.h.b16 %v1508
    %v1672 = vunpack.c.l.b16 %v1509
    %v1673 = vunpack.c.h.b16 %v1509
    %v1674 = vunpack.c.l.b16 %v1510
    %v1675 = vunpack.c.h.b16 %v1510
    %v1676 = vunpack.c.l.b16 %v1511
    %v1677 = vunpack.c.h.b16 %v1511
    %v1678 = vunpack.c.l.b16 %v1512
    %v1679 = vunpack.c.h.b16 %v1512
    %v1680 = vunpack.c.l.b16 %v1513
    %v1681 = vunpack.c.h.b16 %v1513
    %v1682 = vunpack.c.l.b16 %v1514
    %v1683 = vunpack.c.h.b16 %v1514
    %v1684 = vunpack.c.l.b16 %v1515
    %v1685 = vunpack.c.h.b16 %v1515
    %v1686 = vunpack.c.l.b16 %v1516
    %v1687 = vunpack.c.h.b16 %v1516
    %v1688 = vunpack.c.l.b16 %v1517
    %v1689 = vunpack.c.h.b16 %v1517
    %v1690 = vunpack.c.l.b16 %v1518
    %v1691 = vunpack.c.h.b16 %v1518
    %v1692 = vunpack.c.l.b16 %v1519
    %v1693 = vunpack.c.h.b16 %v1519
    %v1694 = vunpack.c.l.b16 %v1520
    %v1695 = vunpack.c.h.b16 %v1520
    %v1696 = vunpack.c.l.b16 %v1521
    %v1697 = vunpack.c.h.b16 %v1521
    %v1698 = vunpack.c.l.b16 %v1522
    %v1699 = vunpack.c.h.b16 %v1522
    %v1700 = vunpack.c.l.b16 %v1523
    %v1701 = vunpack.c.h.b16 %v1523
    %v1702 = vunpack.c.l.b16 %v1524
    %v1703 = vunpack.c.h.b16 %v1524
    %v1704 = vunpack.c.l.b16 %v1525
    %v1705 = vunpack.c.h.b16 %v1525
    %v1706 = vunpack.c.l.b16 %v1526
    %v1707 = vunpack.c.h.b16 %v1526
    %v1708 = vunpack.c.l.b16 %v1527
    %v1709 = vunpack.c.h.b16 %v1527
    %v1710 = vunpack.c.l.b16 %v1528
    %v1711 = vunpack.c.h.b16 %v1528
    %v1712 = vunpack.c.l.b16 %v1529
    %v1713 = vunpack.c.h.b16 %v1529
    %v1714 = vunpack.c.l.b16 %v1530
    %v1715 = vunpack.c.h.b16 %v1530
    %v1716 = vunpack.c.l.b16 %v1531
    %v1717 = vunpack.c.h.b16 %v1531
    %v1718 = vunpack.c.l.b16 %v1532
    %v1719 = vunpack.c.h.b16 %v1532
    %v1720 = vunpack.c.l.b16 %v1533
    %v1721 = vunpack.c.h.b16 %v1533
    %v1722 = vunpack.c.l.b16 %v1534
    %v1723 = vunpack.c.h.b16 %v1534
    %v1724 = vunpack.c.l.b16 %v1535
    %v1725 = vunpack.c.h.b16 %v1535
    %v1726 = vunpack.c.l.b16 %v1536
    %v1727 = vunpack.c.h.b16 %v1536
    %v1728 = vunpack.c.l.b16 %v1537
    %v1729 = vunpack.c.h.b16 %v1537
    %v1730 = vpack.c.b16 %v1606, %v1602
    %v1731 = vpack.c.b16 %v1607, %v1603
    %v1732 = vpack.c.b16 %v1608, %v1604
    %v1733 = vpack.c.b16 %v1609, %v1605
    %v1734 = vpack.c.b16 %v1614, %v1610
    %v1735 = vpack.c.b16 %v1615, %v1611
    %v1736 = vpack.c.b16 %v1616, %v1612
    %v1737 = vpack.c.b16 %v1617, %v1613
    %v1738 = vpack.c.b16 %v1622, %v1618
    %v1739 = vpack.c.b16 %v1623, %v1619
    %v1740 = vpack.c.b16 %v1624, %v1620
    %v1741 = vpack.c.b16 %v1625, %v1621
    %v1742 = vpack.c.b16 %v1630, %v1626
    %v1743 = vpack.c.b16 %v1631, %v1627
    %v1744 = vpack.c.b16 %v1632, %v1628
    %v1745 = vpack.c.b16 %v1633, %v1629
    %v1746 = vpack.c.b16 %v1638, %v1634
    %v1747 = vpack.c.b16 %v1639, %v1635
    %v1748 = vpack.c.b16 %v1640, %v1636
    %v1749 = vpack.c.b16 %v1641, %v1637
    %v1750 = vpack.c.b16 %v1646, %v1642
    %v1751 = vpack.c.b16 %v1647, %v1643
    %v1752 = vpack.c.b16 %v1648, %v1644
    %v1753 = vpack.c.b16 %v1649, %v1645
    %v1754 = vpack.c.b16 %v1654, %v1650
    %v1755 = vpack.c.b16 %v1655, %v1651
    %v1756 = vpack.c.b16 %v1656, %v1652
    %v1757 = vpack.c.b16 %v1657, %v1653
    %v1758 = vpack.c.b16 %v1662, %v1658
    %v1759 = vpack.c.b16 %v1663, %v1659
    %v1760 = vpack.c.b16 %v1664, %v1660
    %v1761 = vpack.c.b16 %v1665, %v1661
    %v1762 = vpack.c.b16 %v1670, %v1666
    %v1763 = vpack.c.b16 %v1671, %v1667
    %v1764 = vpack.c.b16 %v1672, %v1668
    %v1765 = vpack.c.b16 %v1673, %v1669
    %v1766 = vpack.c.b16 %v1678, %v1674
    %v1767 = vpack.c.b16 %v1679, %v1675
    %v1768 = vpack.c.b16 %v1680, %v1676
    %v1769 = vpack.c.b16 %v1681, %v1677
    %v1770 = vpack.c.b16 %v1686, %v1682
    %v1771 = vpack.c.b16 %v1687, %v1683
    %v1772 = vpack.c.b16 %v1688, %v1684
    %v1773 = vpack.c.b16 %v1689, %v1685
    %v1774 = vpack.c.b16 %v1694, %v1690
    %v1775 = vpack.c.b16 %v1695, %v1691
    %v1776 = vpack.c.b16 %v1696, %v1692
    %v1777 = vpack.c.b16 %v1697, %v1693
    %v1778 = vpack.c.b16 %v1702, %v1698
    %v1779 = vpack.c.b16 %v1703, %v1699
    %v1780 = vpack.c.b16 %v1704, %v1700
    %v1781 = vpack.c.b16 %v1705, %v1701
    %v1782 = vpack.c.b16 %v1710, %v1706
    %v1783 = vpack.c.b16 %v1711, %v1707
    %v1784 = vpack.c.b16 %v1712, %v1708
    %v1785 = vpack.c.b16 %v1713, %v1709
    %v1786 = vpack.c.b16 %v1718, %v1714
    %v1787 = vpack.c.b16 %v1719, %v1715
    %v1788 = vpack.c.b16 %v1720, %v1716
    %v1789 = vpack.c.b16 %v1721, %v1717
    %v1790 = vpack.c.b16 %v1726, %v1722
    %v1791 = vpack.c.b16 %v1727, %v1723
    %v1792 = vpack.c.b16 %v1728, %v1724
    %v1793 = vpack.c.b16 %v1729, %v1725
    %1858 = vmatprep.subr.bf16.mxu0 %v1759
    %1859 = vmatpush1.bf16.msra.mxu0 %v1758
    %1860 = vmatprep.subr.bf16.mxu0 %v1755
    %1861 = vmatpush1.bf16.msra.mxu0 %v1754
    %1862 = vmatprep.subr.bf16.mxu0 %v1751
    %1863 = vmatpush1.bf16.msra.mxu0 %v1750
    %1864 = vmatprep.subr.bf16.mxu0 %v1747
    %1865 = vmatpush1.bf16.msra.mxu0 %v1746
    %1866 = vmatprep.subr.bf16.mxu0 %v1743
    %1867 = vmatpush1.bf16.msra.mxu0 %v1742
    %1868 = vmatprep.subr.bf16.mxu0 %v1739
    %1869 = vmatpush1.bf16.msra.mxu0 %v1738
    %1870 = vmatprep.subr.bf16.mxu0 %v1735
    %1871 = vmatpush1.bf16.msra.mxu0 %v1734
    %1872 = vmatprep.subr.bf16.mxu0 %v1731
    %1873 = vmatpush1.bf16.msra.mxu0 %v1730
    %1874 = vmatprep.subr.bf16.mxu0 %v1791
    %1875 = vmatpush2.bf16.msra.mxu0 %v1790
    %1876 = vmatprep.subr.bf16.mxu0 %v1787
    %1877 = vmatpush2.bf16.msra.mxu0 %v1786
    %1878 = vmatprep.subr.bf16.mxu0 %v1783
    %1879 = vmatpush2.bf16.msra.mxu0 %v1782
    %1880 = vmatprep.subr.bf16.mxu0 %v1779
    %1881 = vmatpush2.bf16.msra.mxu0 %v1778
    %1882 = vmatprep.subr.bf16.mxu0 %v1775
    %1883 = vmatpush2.bf16.msra.mxu0 %v1774
    %1884 = vmatprep.subr.bf16.mxu0 %v1771
    %1885 = vmatpush2.bf16.msra.mxu0 %v1770
    %1886 = vmatprep.subr.bf16.mxu0 %v1767
    %1887 = vmatpush2.bf16.msra.mxu0 %v1766
    %1888 = vmatprep.subr.bf16.mxu0 %v1763
    %1889 = vmatpush2.bf16.msra.mxu0 %v1762
    %1890 = vmatprep.mubr.bf16.mxu0 %v1473
    %1891 = vmatmul.mubr.bf16.gmra.mxu0 %v1472
    %v1892 = vpop.f32.mrf.mxu0
    %v1893 = vadd.f32 0.0, %v1892
    %v1894 = vpop.f32.mrf.mxu0
    %v1895 = vadd.f32 0.0, %v1894
    %v1896 = vpop.f32.mrf.mxu0
    %v1897 = vpop.f32.mrf.mxu0
    %1898 = vdwg.mxu0
    %1899 = vmatprep.subr.bf16.mxu0 %v1761
    %1900 = vmatpush1.bf16.msra.mxu0 %v1760
    %1901 = vmatprep.subr.bf16.mxu0 %v1757
    %1902 = vmatpush1.bf16.msra.mxu0 %v1756
    %1903 = vmatprep.subr.bf16.mxu0 %v1753
    %1904 = vmatpush1.bf16.msra.mxu0 %v1752
    %1905 = vmatprep.subr.bf16.mxu0 %v1749
    %1906 = vmatpush1.bf16.msra.mxu0 %v1748
    %1907 = vmatprep.subr.bf16.mxu0 %v1745
    %1908 = vmatpush1.bf16.msra.mxu0 %v1744
    %1909 = vmatprep.subr.bf16.mxu0 %v1741
    %1910 = vmatpush1.bf16.msra.mxu0 %v1740
    %1911 = vmatprep.subr.bf16.mxu0 %v1737
    %1912 = vmatpush1.bf16.msra.mxu0 %v1736
    %1913 = vmatprep.subr.bf16.mxu0 %v1733
    %1914 = vmatpush1.bf16.msra.mxu0 %v1732
    %1915 = vmatprep.subr.bf16.mxu0 %v1793
    %1916 = vmatpush2.bf16.msra.mxu0 %v1792
    %1917 = vmatprep.subr.bf16.mxu0 %v1789
    %1918 = vmatpush2.bf16.msra.mxu0 %v1788
    %1919 = vmatprep.subr.bf16.mxu0 %v1785
    %1920 = vmatpush2.bf16.msra.mxu0 %v1784
    %1921 = vmatprep.subr.bf16.mxu0 %v1781
    %1922 = vmatpush2.bf16.msra.mxu0 %v1780
    %1923 = vmatprep.subr.bf16.mxu0 %v1777
    %1924 = vmatpush2.bf16.msra.mxu0 %v1776
    %1925 = vmatprep.subr.bf16.mxu0 %v1773
    %1926 = vmatpush2.bf16.msra.mxu0 %v1772
    %1927 = vmatprep.subr.bf16.mxu0 %v1769
    %1928 = vmatpush2.bf16.msra.mxu0 %v1768
    %1929 = vmatprep.subr.bf16.mxu0 %v1765
    %1930 = vmatpush2.bf16.msra.mxu0 %v1764
    %1931 = vmatprep.mubr.bf16.mxu0 %v1473
    %1932 = vmatmul.mubr.bf16.gmra.mxu0 %v1472
    %v1933 = vpop.f32.mrf.mxu0
    %v1934 = vadd.f32 0.0, %v1933
    %v1935 = vpop.f32.mrf.mxu0
    %v1936 = vadd.f32 0.0, %v1935
    %v1937 = vpop.f32.mrf.mxu0
    %v1938 = vpop.f32.mrf.mxu0
    %1939 = vdwg.mxu0
    %v1940 = vxor.u32 %v1893, 2147483648
    %v1941 = vxor.u32 %v1895, 2147483648
    %v1942 = vmul.f32 %v1940, 1.442695
    %v1943 = vpow.pop %v1942
    %v1944 = vmul.f32 %v1941, 1.442695
    %v1945 = vpow.pop %v1944
    %v1946 = vadd.f32 %v1943, 1.0
    %v1947 = vadd.f32 %v1945, 1.0
    %v1948 = vrcp.pop %v1946
    %v1949 = vmul.f32 1.0, %v1948
    %v1950 = vrcp.pop %v1947
    %v1951 = vmul.f32 1.0, %v1950
    %v1952 = vmul.f32 %v1893, %v1949
    %v1953 = vmul.f32 %v1895, %v1951
    %v1954 = vmul.f32 %v1952, %v1934
    %v1955 = vmul.f32 %v1953, %v1936
    %v1956 = vpack.c.bf16 %v1954, %v1954
    %v1957 = vpack.c.bf16 %v1955, %v1955
    %v1958 = vld [vmem:[#allocation8] sm:$0xff]
    %v1959 = vld [vmem:[#allocation8 + $0x8] sm:$0xff]
    %v1960 = vld [vmem:[#allocation8 + $0x10] sm:$0xff]
    %v1961 = vld [vmem:[#allocation8 + $0x18] sm:$0xff]
    %v1962 = vld [vmem:[#allocation8 + $0x20] sm:$0xff]
    %v1963 = vld [vmem:[#allocation8 + $0x28] sm:$0xff]
    %v1964 = vld [vmem:[#allocation8 + $0x30] sm:$0xff]
    %v1965 = vld [vmem:[#allocation8 + $0x38] sm:$0xff]
    %v1966 = vld [vmem:[#allocation8 + $0x40] sm:$0xff]
    %v1967 = vld [vmem:[#allocation8 + $0x48] sm:$0xff]
    %v1968 = vld [vmem:[#allocation8 + $0x50] sm:$0xff]
    %v1969 = vld [vmem:[#allocation8 + $0x58] sm:$0xff]
    %v1970 = vld [vmem:[#allocation8 + $0x60] sm:$0xff]
    %v1971 = vld [vmem:[#allocation8 + $0x68] sm:$0xff]
    %v1972 = vld [vmem:[#allocation8 + $0x70] sm:$0xff]
    %v1973 = vld [vmem:[#allocation8 + $0x78] sm:$0xff]
    %v1974 = vld [vmem:[#allocation8 + $0x80] sm:$0xff]
    %v1975 = vld [vmem:[#allocation8 + $0x88] sm:$0xff]
    %v1976 = vld [vmem:[#allocation8 + $0x90] sm:$0xff]
    %v1977 = vld [vmem:[#allocation8 + $0x98] sm:$0xff]
    %v1978 = vld [vmem:[#allocation8 + $0xa0] sm:$0xff]
    %v1979 = vld [vmem:[#allocation8 + $0xa8] sm:$0xff]
    %v1980 = vld [vmem:[#allocation8 + $0xb0] sm:$0xff]
    %v1981 = vld [vmem:[#allocation8 + $0xb8] sm:$0xff]
    %v1982 = vld [vmem:[#allocation8 + $0xc0] sm:$0xff]
    %v1983 = vld [vmem:[#allocation8 + $0xc8] sm:$0xff]
    %v1984 = vld [vmem:[#allocation8 + $0xd0] sm:$0xff]
    %v1985 = vld [vmem:[#allocation8 + $0xd8] sm:$0xff]
    %v1986 = vld [vmem:[#allocation8 + $0xe0] sm:$0xff]
    %v1987 = vld [vmem:[#allocation8 + $0xe8] sm:$0xff]
    %v1988 = vld [vmem:[#allocation8 + $0xf0] sm:$0xff]
    %v1989 = vld [vmem:[#allocation8 + $0xf8] sm:$0xff]
    %v2022 = vunpack.c.l.b16 %v1958
    %v2023 = vunpack.c.h.b16 %v1958
    %v2024 = vunpack.c.l.b16 %v1959
    %v2025 = vunpack.c.h.b16 %v1959
    %v2026 = vunpack.c.l.b16 %v1960
    %v2027 = vunpack.c.h.b16 %v1960
    %v2028 = vunpack.c.l.b16 %v1961
    %v2029 = vunpack.c.h.b16 %v1961
    %v2030 = vunpack.c.l.b16 %v1962
    %v2031 = vunpack.c.h.b16 %v1962
    %v2032 = vunpack.c.l.b16 %v1963
    %v2033 = vunpack.c.h.b16 %v1963
    %v2034 = vunpack.c.l.b16 %v1964
    %v2035 = vunpack.c.h.b16 %v1964
    %v2036 = vunpack.c.l.b16 %v1965
    %v2037 = vunpack.c.h.b16 %v1965
    %v2038 = vunpack.c.l.b16 %v1966
    %v2039 = vunpack.c.h.b16 %v1966
    %v2040 = vunpack.c.l.b16 %v1967
    %v2041 = vunpack.c.h.b16 %v1967
    %v2042 = vunpack.c.l.b16 %v1968
    %v2043 = vunpack.c.h.b16 %v1968
    %v2044 = vunpack.c.l.b16 %v1969
    %v2045 = vunpack.c.h.b16 %v1969
    %v2046 = vunpack.c.l.b16 %v1970
    %v2047 = vunpack.c.h.b16 %v1970
    %v2048 = vunpack.c.l.b16 %v1971
    %v2049 = vunpack.c.h.b16 %v1971
    %v2050 = vunpack.c.l.b16 %v1972
    %v2051 = vunpack.c.h.b16 %v1972
    %v2052 = vunpack.c.l.b16 %v1973
    %v2053 = vunpack.c.h.b16 %v1973
    %v2054 = vunpack.c.l.b16 %v1974
    %v2055 = vunpack.c.h.b16 %v1974
    %v2056 = vunpack.c.l.b16 %v1975
    %v2057 = vunpack.c.h.b16 %v1975
    %v2058 = vunpack.c.l.b16 %v1976
    %v2059 = vunpack.c.h.b16 %v1976
    %v2060 = vunpack.c.l.b16 %v1977
    %v2061 = vunpack.c.h.b16 %v1977
    %v2062 = vunpack.c.l.b16 %v1978
    %v2063 = vunpack.c.h.b16 %v1978
    %v2064 = vunpack.c.l.b16 %v1979
    %v2065 = vunpack.c.h.b16 %v1979
    %v2066 = vunpack.c.l.b16 %v1980
    %v2067 = vunpack.c.h.b16 %v1980
    %v2068 = vunpack.c.l.b16 %v1981
    %v2069 = vunpack.c.h.b16 %v1981
    %v2070 = vunpack.c.l.b16 %v1982
    %v2071 = vunpack.c.h.b16 %v1982
    %v2072 = vunpack.c.l.b16 %v1983
    %v2073 = vunpack.c.h.b16 %v1983
    %v2074 = vunpack.c.l.b16 %v1984
    %v2075 = vunpack.c.h.b16 %v1984
    %v2076 = vunpack.c.l.b16 %v1985
    %v2077 = vunpack.c.h.b16 %v1985
    %v2078 = vunpack.c.l.b16 %v1986
    %v2079 = vunpack.c.h.b16 %v1986
    %v2080 = vunpack.c.l.b16 %v1987
    %v2081 = vunpack.c.h.b16 %v1987
    %v2082 = vunpack.c.l.b16 %v1988
    %v2083 = vunpack.c.h.b16 %v1988
    %v2084 = vunpack.c.l.b16 %v1989
    %v2085 = vunpack.c.h.b16 %v1989
    %v2086 = vpack.c.b16 %v2024, %v2022
    %v2087 = vpack.c.b16 %v2025, %v2023
    %v2088 = vpack.c.b16 %v2028, %v2026
    %v2089 = vpack.c.b16 %v2029, %v2027
    %v2090 = vpack.c.b16 %v2032, %v2030
    %v2091 = vpack.c.b16 %v2033, %v2031
    %v2092 = vpack.c.b16 %v2036, %v2034
    %v2093 = vpack.c.b16 %v2037, %v2035
    %v2094 = vpack.c.b16 %v2040, %v2038
    %v2095 = vpack.c.b16 %v2041, %v2039
    %v2096 = vpack.c.b16 %v2044, %v2042
    %v2097 = vpack.c.b16 %v2045, %v2043
    %v2098 = vpack.c.b16 %v2048, %v2046
    %v2099 = vpack.c.b16 %v2049, %v2047
    %v2100 = vpack.c.b16 %v2052, %v2050
    %v2101 = vpack.c.b16 %v2053, %v2051
    %v2102 = vpack.c.b16 %v2056, %v2054
    %v2103 = vpack.c.b16 %v2057, %v2055
    %v2104 = vpack.c.b16 %v2060, %v2058
    %v2105 = vpack.c.b16 %v2061, %v2059
    %v2106 = vpack.c.b16 %v2064, %v2062
    %v2107 = vpack.c.b16 %v2065, %v2063
    %v2108 = vpack.c.b16 %v2068, %v2066
    %v2109 = vpack.c.b16 %v2069, %v2067
    %v2110 = vpack.c.b16 %v2072, %v2070
    %v2111 = vpack.c.b16 %v2073, %v2071
    %v2112 = vpack.c.b16 %v2076, %v2074
    %v2113 = vpack.c.b16 %v2077, %v2075
    %v2114 = vpack.c.b16 %v2080, %v2078
    %v2115 = vpack.c.b16 %v2081, %v2079
    %v2116 = vpack.c.b16 %v2084, %v2082
    %v2117 = vpack.c.b16 %v2085, %v2083
    %2150 = vmatprep.subr.bf16.mxu0 %v2101
    %2151 = vmatpush1.bf16.msra.mxu0 %v2100
    %2152 = vmatprep.subr.bf16.mxu0 %v2099
    %2153 = vmatpush1.bf16.msra.mxu0 %v2098
    %2154 = vmatprep.subr.bf16.mxu0 %v2097
    %2155 = vmatpush1.bf16.msra.mxu0 %v2096
    %2156 = vmatprep.subr.bf16.mxu0 %v2095
    %2157 = vmatpush1.bf16.msra.mxu0 %v2094
    %2158 = vmatprep.subr.bf16.mxu0 %v2093
    %2159 = vmatpush1.bf16.msra.mxu0 %v2092
    %2160 = vmatprep.subr.bf16.mxu0 %v2091
    %2161 = vmatpush1.bf16.msra.mxu0 %v2090
    %2162 = vmatprep.subr.bf16.mxu0 %v2089
    %2163 = vmatpush1.bf16.msra.mxu0 %v2088
    %2164 = vmatprep.subr.bf16.mxu0 %v2087
    %2165 = vmatpush1.bf16.msra.mxu0 %v2086
    %2166 = vmatprep.subr.bf16.mxu0 %v2117
    %2167 = vmatpush2.bf16.msra.mxu0 %v2116
    %2168 = vmatprep.subr.bf16.mxu0 %v2115
    %2169 = vmatpush2.bf16.msra.mxu0 %v2114
    %2170 = vmatprep.subr.bf16.mxu0 %v2113
    %2171 = vmatpush2.bf16.msra.mxu0 %v2112
    %2172 = vmatprep.subr.bf16.mxu0 %v2111
    %2173 = vmatpush2.bf16.msra.mxu0 %v2110
    %2174 = vmatprep.subr.bf16.mxu0 %v2109
    %2175 = vmatpush2.bf16.msra.mxu0 %v2108
    %2176 = vmatprep.subr.bf16.mxu0 %v2107
    %2177 = vmatpush2.bf16.msra.mxu0 %v2106
    %2178 = vmatprep.subr.bf16.mxu0 %v2105
    %2179 = vmatpush2.bf16.msra.mxu0 %v2104
    %2180 = vmatprep.subr.bf16.mxu0 %v2103
    %2181 = vmatpush2.bf16.msra.mxu0 %v2102
    %2182 = vmatprep.mubr.bf16.mxu0 %v1957
    %2183 = vmatmul.mubr.bf16.gmra.mxu0 %v1956
    %v2184 = vpop.f32.mrf.mxu0
    %v2185 = vadd.f32 0.0, %v2184
    %v2186 = vpop.f32.mrf.mxu0
    %v2187 = vadd.f32 0.0, %v2186
    %v2188 = vpop.f32.mrf.mxu0
    %v2189 = vpop.f32.mrf.mxu0
    %2190 = vdwg.mxu0
    %v2191 = vadd.f32 %v1446, %v2185
    %v2192 = vadd.f32 %v1447, %v2187
    %s2193 = scalar_lea.vmem %s3, 2
    %v2194 = vld [vmem:[%s2193] sm:$0x3]
    %v2195 = vmul.f32 %v2191, %v2191
    %v2196 = vmul.f32 %v2192, %v2192
    %v2197 = vadd.f32 %v2195, %v2196
    %2198 = vadd.xlane.f32.xlu0 %v2197
    %v2199 = vpop.xlane.xlu0 %2198
    %v2200 = vmul.f32 %v2199, %v126
    %v2201 = vadd.f32 %v2200, 1e-06
    %v2202 = vrsqrt.pop %v2201
    %v2203 = vmul.f32 %v2191, %v2202
    %v2204 = vmul.f32 %v2192, %v2202
    %v2206 = vlaneseq
    %v2207 = vshrl.u32 %v2206, 7
    %v2208 = vsub.s32 0, %v2207
    %v2209 = vrot.slane %v2194, %v2208
    %v2210 = vlaneseq
    %v2211 = vshrl.u32 %v2210, 7
    %v2212 = vsub.s32 1, %v2211
    %v2213 = vrot.slane %v2194, %v2212
    %v2216 = vmul.f32 %v2203, %v2209
    %v2217 = vmul.f32 %v2204, %v2213
    %v2218 = vpack.c.bf16 %v2216, %v2216
    %v2219 = vpack.c.bf16 %v2217, %v2217
    %s2220 = scalar_lea.vmem [#allocation2], 768
    %v2221 = vld [vmem:[%s2220] sm:$0xff]
    %v2222 = vld [vmem:[%s2220 + $0x8] sm:$0xff]
    %v2223 = vld [vmem:[%s2220 + $0x10] sm:$0xff]
    %v2224 = vld [vmem:[%s2220 + $0x18] sm:$0xff]
    %v2225 = vld [vmem:[%s2220 + $0x20] sm:$0xff]
    %v2226 = vld [vmem:[%s2220 + $0x28] sm:$0xff]
    %v2227 = vld [vmem:[%s2220 + $0x30] sm:$0xff]
    %v2228 = vld [vmem:[%s2220 + $0x38] sm:$0xff]
    %v2229 = vld [vmem:[%s2220 + $0x40] sm:$0xff]
    %v2230 = vld [vmem:[%s2220 + $0x48] sm:$0xff]
    %v2231 = vld [vmem:[%s2220 + $0x50] sm:$0xff]
    %v2232 = vld [vmem:[%s2220 + $0x58] sm:$0xff]
    %v2233 = vld [vmem:[%s2220 + $0x60] sm:$0xff]
    %v2234 = vld [vmem:[%s2220 + $0x68] sm:$0xff]
    %v2235 = vld [vmem:[%s2220 + $0x70] sm:$0xff]
    %v2236 = vld [vmem:[%s2220 + $0x78] sm:$0xff]
    %v2237 = vld [vmem:[%s2220 + $0x80] sm:$0xff]
    %v2238 = vld [vmem:[%s2220 + $0x88] sm:$0xff]
    %v2239 = vld [vmem:[%s2220 + $0x90] sm:$0xff]
    %v2240 = vld [vmem:[%s2220 + $0x98] sm:$0xff]
    %v2241 = vld [vmem:[%s2220 + $0xa0] sm:$0xff]
    %v2242 = vld [vmem:[%s2220 + $0xa8] sm:$0xff]
    %v2243 = vld [vmem:[%s2220 + $0xb0] sm:$0xff]
    %v2244 = vld [vmem:[%s2220 + $0xb8] sm:$0xff]
    %v2245 = vld [vmem:[%s2220 + $0xc0] sm:$0xff]
    %v2246 = vld [vmem:[%s2220 + $0xc8] sm:$0xff]
    %v2247 = vld [vmem:[%s2220 + $0xd0] sm:$0xff]
    %v2248 = vld [vmem:[%s2220 + $0xd8] sm:$0xff]
    %v2249 = vld [vmem:[%s2220 + $0xe0] sm:$0xff]
    %v2250 = vld [vmem:[%s2220 + $0xe8] sm:$0xff]
    %v2251 = vld [vmem:[%s2220 + $0xf0] sm:$0xff]
    %v2252 = vld [vmem:[%s2220 + $0xf8] sm:$0xff]
    %v2253 = vld [vmem:[%s2220 + $0x100] sm:$0xff]
    %v2254 = vld [vmem:[%s2220 + $0x108] sm:$0xff]
    %v2255 = vld [vmem:[%s2220 + $0x110] sm:$0xff]
    %v2256 = vld [vmem:[%s2220 + $0x118] sm:$0xff]
    %v2257 = vld [vmem:[%s2220 + $0x120] sm:$0xff]
    %v2258 = vld [vmem:[%s2220 + $0x128] sm:$0xff]
    %v2259 = vld [vmem:[%s2220 + $0x130] sm:$0xff]
    %v2260 = vld [vmem:[%s2220 + $0x138] sm:$0xff]
    %v2261 = vld [vmem:[%s2220 + $0x140] sm:$0xff]
    %v2262 = vld [vmem:[%s2220 + $0x148] sm:$0xff]
    %v2263 = vld [vmem:[%s2220 + $0x150] sm:$0xff]
    %v2264 = vld [vmem:[%s2220 + $0x158] sm:$0xff]
    %v2265 = vld [vmem:[%s2220 + $0x160] sm:$0xff]
    %v2266 = vld [vmem:[%s2220 + $0x168] sm:$0xff]
    %v2267 = vld [vmem:[%s2220 + $0x170] sm:$0xff]
    %v2268 = vld [vmem:[%s2220 + $0x178] sm:$0xff]
    %v2269 = vld [vmem:[%s2220 + $0x180] sm:$0xff]
    %v2270 = vld [vmem:[%s2220 + $0x188] sm:$0xff]
    %v2271 = vld [vmem:[%s2220 + $0x190] sm:$0xff]
    %v2272 = vld [vmem:[%s2220 + $0x198] sm:$0xff]
    %v2273 = vld [vmem:[%s2220 + $0x1a0] sm:$0xff]
    %v2274 = vld [vmem:[%s2220 + $0x1a8] sm:$0xff]
    %v2275 = vld [vmem:[%s2220 + $0x1b0] sm:$0xff]
    %v2276 = vld [vmem:[%s2220 + $0x1b8] sm:$0xff]
    %v2277 = vld [vmem:[%s2220 + $0x1c0] sm:$0xff]
    %v2278 = vld [vmem:[%s2220 + $0x1c8] sm:$0xff]
    %v2279 = vld [vmem:[%s2220 + $0x1d0] sm:$0xff]
    %v2280 = vld [vmem:[%s2220 + $0x1d8] sm:$0xff]
    %v2281 = vld [vmem:[%s2220 + $0x1e0] sm:$0xff]
    %v2282 = vld [vmem:[%s2220 + $0x1e8] sm:$0xff]
    %v2283 = vld [vmem:[%s2220 + $0x1f0] sm:$0xff]
    %v2284 = vld [vmem:[%s2220 + $0x1f8] sm:$0xff]
    %v2285 = vld [vmem:[%s2220 + $0x200] sm:$0xff]
    %v2286 = vld [vmem:[%s2220 + $0x208] sm:$0xff]
    %v2287 = vld [vmem:[%s2220 + $0x210] sm:$0xff]
    %v2288 = vld [vmem:[%s2220 + $0x218] sm:$0xff]
    %v2289 = vld [vmem:[%s2220 + $0x220] sm:$0xff]
    %v2290 = vld [vmem:[%s2220 + $0x228] sm:$0xff]
    %v2291 = vld [vmem:[%s2220 + $0x230] sm:$0xff]
    %v2292 = vld [vmem:[%s2220 + $0x238] sm:$0xff]
    %v2293 = vld [vmem:[%s2220 + $0x240] sm:$0xff]
    %v2294 = vld [vmem:[%s2220 + $0x248] sm:$0xff]
    %v2295 = vld [vmem:[%s2220 + $0x250] sm:$0xff]
    %v2296 = vld [vmem:[%s2220 + $0x258] sm:$0xff]
    %v2297 = vld [vmem:[%s2220 + $0x260] sm:$0xff]
    %v2298 = vld [vmem:[%s2220 + $0x268] sm:$0xff]
    %v2299 = vld [vmem:[%s2220 + $0x270] sm:$0xff]
    %v2300 = vld [vmem:[%s2220 + $0x278] sm:$0xff]
    %v2301 = vld [vmem:[%s2220 + $0x280] sm:$0xff]
    %v2302 = vld [vmem:[%s2220 + $0x288] sm:$0xff]
    %v2303 = vld [vmem:[%s2220 + $0x290] sm:$0xff]
    %v2304 = vld [vmem:[%s2220 + $0x298] sm:$0xff]
    %v2305 = vld [vmem:[%s2220 + $0x2a0] sm:$0xff]
    %v2306 = vld [vmem:[%s2220 + $0x2a8] sm:$0xff]
    %v2307 = vld [vmem:[%s2220 + $0x2b0] sm:$0xff]
    %v2308 = vld [vmem:[%s2220 + $0x2b8] sm:$0xff]
    %v2309 = vld [vmem:[%s2220 + $0x2c0] sm:$0xff]
    %v2310 = vld [vmem:[%s2220 + $0x2c8] sm:$0xff]
    %v2311 = vld [vmem:[%s2220 + $0x2d0] sm:$0xff]
    %v2312 = vld [vmem:[%s2220 + $0x2d8] sm:$0xff]
    %v2313 = vld [vmem:[%s2220 + $0x2e0] sm:$0xff]
    %v2314 = vld [vmem:[%s2220 + $0x2e8] sm:$0xff]
    %v2315 = vld [vmem:[%s2220 + $0x2f0] sm:$0xff]
    %v2316 = vld [vmem:[%s2220 + $0x2f8] sm:$0xff]
    %s2317 = scalar_lea.vmem %s5, 6
    %v2318 = vld [vmem:[%s2317] sm:$0x3f]
    %v2320 = vlaneseq
    %v2321 = vshrl.u32 %v2320, 7
    %v2322 = vsub.s32 0, %v2321
    %v2323 = vrot.slane %v2318, %v2322
    %v2324 = vlaneseq
    %v2325 = vshrl.u32 %v2324, 7
    %v2326 = vsub.s32 1, %v2325
    %v2327 = vrot.slane %v2318, %v2326
    %v2328 = vlaneseq
    %v2329 = vshrl.u32 %v2328, 7
    %v2330 = vsub.s32 2, %v2329
    %v2331 = vrot.slane %v2318, %v2330
    %v2332 = vlaneseq
    %v2333 = vshrl.u32 %v2332, 7
    %v2334 = vsub.s32 3, %v2333
    %v2335 = vrot.slane %v2318, %v2334
    %v2336 = vlaneseq
    %v2337 = vshrl.u32 %v2336, 7
    %v2338 = vsub.s32 4, %v2337
    %v2339 = vrot.slane %v2318, %v2338
    %v2340 = vlaneseq
    %v2341 = vshrl.u32 %v2340, 7
    %v2342 = vsub.s32 5, %v2341
    %v2343 = vrot.slane %v2318, %v2342
    %v2446 = vunpack.c.l.b16 %v2221
    %v2447 = vunpack.c.h.b16 %v2221
    %v2448 = vunpack.c.l.b16 %v2222
    %v2449 = vunpack.c.h.b16 %v2222
    %v2450 = vunpack.c.l.b16 %v2223
    %v2451 = vunpack.c.h.b16 %v2223
    %v2452 = vunpack.c.l.b16 %v2224
    %v2453 = vunpack.c.h.b16 %v2224
    %v2454 = vunpack.c.l.b16 %v2225
    %v2455 = vunpack.c.h.b16 %v2225
    %v2456 = vunpack.c.l.b16 %v2226
    %v2457 = vunpack.c.h.b16 %v2226
    %v2458 = vunpack.c.l.b16 %v2227
    %v2459 = vunpack.c.h.b16 %v2227
    %v2460 = vunpack.c.l.b16 %v2228
    %v2461 = vunpack.c.h.b16 %v2228
    %v2462 = vunpack.c.l.b16 %v2229
    %v2463 = vunpack.c.h.b16 %v2229
    %v2464 = vunpack.c.l.b16 %v2230
    %v2465 = vunpack.c.h.b16 %v2230
    %v2466 = vunpack.c.l.b16 %v2231
    %v2467 = vunpack.c.h.b16 %v2231
    %v2468 = vunpack.c.l.b16 %v2232
    %v2469 = vunpack.c.h.b16 %v2232
    %v2470 = vunpack.c.l.b16 %v2233
    %v2471 = vunpack.c.h.b16 %v2233
    %v2472 = vunpack.c.l.b16 %v2234
    %v2473 = vunpack.c.h.b16 %v2234
    %v2474 = vunpack.c.l.b16 %v2235
    %v2475 = vunpack.c.h.b16 %v2235
    %v2476 = vunpack.c.l.b16 %v2236
    %v2477 = vunpack.c.h.b16 %v2236
    %v2478 = vunpack.c.l.b16 %v2237
    %v2479 = vunpack.c.h.b16 %v2237
    %v2480 = vunpack.c.l.b16 %v2238
    %v2481 = vunpack.c.h.b16 %v2238
    %v2482 = vunpack.c.l.b16 %v2239
    %v2483 = vunpack.c.h.b16 %v2239
    %v2484 = vunpack.c.l.b16 %v2240
    %v2485 = vunpack.c.h.b16 %v2240
    %v2486 = vunpack.c.l.b16 %v2241
    %v2487 = vunpack.c.h.b16 %v2241
    %v2488 = vunpack.c.l.b16 %v2242
    %v2489 = vunpack.c.h.b16 %v2242
    %v2490 = vunpack.c.l.b16 %v2243
    %v2491 = vunpack.c.h.b16 %v2243
    %v2492 = vunpack.c.l.b16 %v2244
    %v2493 = vunpack.c.h.b16 %v2244
    %v2494 = vunpack.c.l.b16 %v2245
    %v2495 = vunpack.c.h.b16 %v2245
    %v2496 = vunpack.c.l.b16 %v2246
    %v2497 = vunpack.c.h.b16 %v2246
    %v2498 = vunpack.c.l.b16 %v2247
    %v2499 = vunpack.c.h.b16 %v2247
    %v2500 = vunpack.c.l.b16 %v2248
    %v2501 = vunpack.c.h.b16 %v2248
    %v2502 = vunpack.c.l.b16 %v2249
    %v2503 = vunpack.c.h.b16 %v2249
    %v2504 = vunpack.c.l.b16 %v2250
    %v2505 = vunpack.c.h.b16 %v2250
    %v2506 = vunpack.c.l.b16 %v2251
    %v2507 = vunpack.c.h.b16 %v2251
    %v2508 = vunpack.c.l.b16 %v2252
    %v2509 = vunpack.c.h.b16 %v2252
    %v2510 = vunpack.c.l.b16 %v2253
    %v2511 = vunpack.c.h.b16 %v2253
    %v2512 = vunpack.c.l.b16 %v2254
    %v2513 = vunpack.c.h.b16 %v2254
    %v2514 = vunpack.c.l.b16 %v2255
    %v2515 = vunpack.c.h.b16 %v2255
    %v2516 = vunpack.c.l.b16 %v2256
    %v2517 = vunpack.c.h.b16 %v2256
    %v2518 = vunpack.c.l.b16 %v2257
    %v2519 = vunpack.c.h.b16 %v2257
    %v2520 = vunpack.c.l.b16 %v2258
    %v2521 = vunpack.c.h.b16 %v2258
    %v2522 = vunpack.c.l.b16 %v2259
    %v2523 = vunpack.c.h.b16 %v2259
    %v2524 = vunpack.c.l.b16 %v2260
    %v2525 = vunpack.c.h.b16 %v2260
    %v2526 = vunpack.c.l.b16 %v2261
    %v2527 = vunpack.c.h.b16 %v2261
    %v2528 = vunpack.c.l.b16 %v2262
    %v2529 = vunpack.c.h.b16 %v2262
    %v2530 = vunpack.c.l.b16 %v2263
    %v2531 = vunpack.c.h.b16 %v2263
    %v2532 = vunpack.c.l.b16 %v2264
    %v2533 = vunpack.c.h.b16 %v2264
    %v2534 = vunpack.c.l.b16 %v2265
    %v2535 = vunpack.c.h.b16 %v2265
    %v2536 = vunpack.c.l.b16 %v2266
    %v2537 = vunpack.c.h.b16 %v2266
    %v2538 = vunpack.c.l.b16 %v2267
    %v2539 = vunpack.c.h.b16 %v2267
    %v2540 = vunpack.c.l.b16 %v2268
    %v2541 = vunpack.c.h.b16 %v2268
    %v2542 = vunpack.c.l.b16 %v2269
    %v2543 = vunpack.c.h.b16 %v2269
    %v2544 = vunpack.c.l.b16 %v2270
    %v2545 = vunpack.c.h.b16 %v2270
    %v2546 = vunpack.c.l.b16 %v2271
    %v2547 = vunpack.c.h.b16 %v2271
    %v2548 = vunpack.c.l.b16 %v2272
    %v2549 = vunpack.c.h.b16 %v2272
    %v2550 = vunpack.c.l.b16 %v2273
    %v2551 = vunpack.c.h.b16 %v2273
    %v2552 = vunpack.c.l.b16 %v2274
    %v2553 = vunpack.c.h.b16 %v2274
    %v2554 = vunpack.c.l.b16 %v2275
    %v2555 = vunpack.c.h.b16 %v2275
    %v2556 = vunpack.c.l.b16 %v2276
    %v2557 = vunpack.c.h.b16 %v2276
    %v2558 = vunpack.c.l.b16 %v2277
    %v2559 = vunpack.c.h.b16 %v2277
    %v2560 = vunpack.c.l.b16 %v2278
    %v2561 = vunpack.c.h.b16 %v2278
    %v2562 = vunpack.c.l.b16 %v2279
    %v2563 = vunpack.c.h.b16 %v2279
    %v2564 = vunpack.c.l.b16 %v2280
    %v2565 = vunpack.c.h.b16 %v2280
    %v2566 = vunpack.c.l.b16 %v2281
    %v2567 = vunpack.c.h.b16 %v2281
    %v2568 = vunpack.c.l.b16 %v2282
    %v2569 = vunpack.c.h.b16 %v2282
    %v2570 = vunpack.c.l.b16 %v2283
    %v2571 = vunpack.c.h.b16 %v2283
    %v2572 = vunpack.c.l.b16 %v2284
    %v2573 = vunpack.c.h.b16 %v2284
    %v2574 = vunpack.c.l.b16 %v2285
    %v2575 = vunpack.c.h.b16 %v2285
    %v2576 = vunpack.c.l.b16 %v2286
    %v2577 = vunpack.c.h.b16 %v2286
    %v2578 = vunpack.c.l.b16 %v2287
    %v2579 = vunpack.c.h.b16 %v2287
    %v2580 = vunpack.c.l.b16 %v2288
    %v2581 = vunpack.c.h.b16 %v2288
    %v2582 = vunpack.c.l.b16 %v2289
    %v2583 = vunpack.c.h.b16 %v2289
    %v2584 = vunpack.c.l.b16 %v2290
    %v2585 = vunpack.c.h.b16 %v2290
    %v2586 = vunpack.c.l.b16 %v2291
    %v2587 = vunpack.c.h.b16 %v2291
    %v2588 = vunpack.c.l.b16 %v2292
    %v2589 = vunpack.c.h.b16 %v2292
    %v2590 = vunpack.c.l.b16 %v2293
    %v2591 = vunpack.c.h.b16 %v2293
    %v2592 = vunpack.c.l.b16 %v2294
    %v2593 = vunpack.c.h.b16 %v2294
    %v2594 = vunpack.c.l.b16 %v2295
    %v2595 = vunpack.c.h.b16 %v2295
    %v2596 = vunpack.c.l.b16 %v2296
    %v2597 = vunpack.c.h.b16 %v2296
    %v2598 = vunpack.c.l.b16 %v2297
    %v2599 = vunpack.c.h.b16 %v2297
    %v2600 = vunpack.c.l.b16 %v2298
    %v2601 = vunpack.c.h.b16 %v2298
    %v2602 = vunpack.c.l.b16 %v2299
    %v2603 = vunpack.c.h.b16 %v2299
    %v2604 = vunpack.c.l.b16 %v2300
    %v2605 = vunpack.c.h.b16 %v2300
    %v2606 = vunpack.c.l.b16 %v2301
    %v2607 = vunpack.c.h.b16 %v2301
    %v2608 = vunpack.c.l.b16 %v2302
    %v2609 = vunpack.c.h.b16 %v2302
    %v2610 = vunpack.c.l.b16 %v2303
    %v2611 = vunpack.c.h.b16 %v2303
    %v2612 = vunpack.c.l.b16 %v2304
    %v2613 = vunpack.c.h.b16 %v2304
    %v2614 = vunpack.c.l.b16 %v2305
    %v2615 = vunpack.c.h.b16 %v2305
    %v2616 = vunpack.c.l.b16 %v2306
    %v2617 = vunpack.c.h.b16 %v2306
    %v2618 = vunpack.c.l.b16 %v2307
    %v2619 = vunpack.c.h.b16 %v2307
    %v2620 = vunpack.c.l.b16 %v2308
    %v2621 = vunpack.c.h.b16 %v2308
    %v2622 = vunpack.c.l.b16 %v2309
    %v2623 = vunpack.c.h.b16 %v2309
    %v2624 = vunpack.c.l.b16 %v2310
    %v2625 = vunpack.c.h.b16 %v2310
    %v2626 = vunpack.c.l.b16 %v2311
    %v2627 = vunpack.c.h.b16 %v2311
    %v2628 = vunpack.c.l.b16 %v2312
    %v2629 = vunpack.c.h.b16 %v2312
    %v2630 = vunpack.c.l.b16 %v2313
    %v2631 = vunpack.c.h.b16 %v2313
    %v2632 = vunpack.c.l.b16 %v2314
    %v2633 = vunpack.c.h.b16 %v2314
    %v2634 = vunpack.c.l.b16 %v2315
    %v2635 = vunpack.c.h.b16 %v2315
    %v2636 = vunpack.c.l.b16 %v2316
    %v2637 = vunpack.c.h.b16 %v2316
    %v2638 = vpack.c.b16 %v2452, %v2446
    %v2639 = vpack.c.b16 %v2453, %v2447
    %v2640 = vpack.c.b16 %v2454, %v2448
    %v2641 = vpack.c.b16 %v2455, %v2449
    %v2642 = vpack.c.b16 %v2456, %v2450
    %v2643 = vpack.c.b16 %v2457, %v2451
    %v2644 = vpack.c.b16 %v2464, %v2458
    %v2645 = vpack.c.b16 %v2465, %v2459
    %v2646 = vpack.c.b16 %v2466, %v2460
    %v2647 = vpack.c.b16 %v2467, %v2461
    %v2648 = vpack.c.b16 %v2468, %v2462
    %v2649 = vpack.c.b16 %v2469, %v2463
    %v2650 = vpack.c.b16 %v2476, %v2470
    %v2651 = vpack.c.b16 %v2477, %v2471
    %v2652 = vpack.c.b16 %v2478, %v2472
    %v2653 = vpack.c.b16 %v2479, %v2473
    %v2654 = vpack.c.b16 %v2480, %v2474
    %v2655 = vpack.c.b16 %v2481, %v2475
    %v2656 = vpack.c.b16 %v2488, %v2482
    %v2657 = vpack.c.b16 %v2489, %v2483
    %v2658 = vpack.c.b16 %v2490, %v2484
    %v2659 = vpack.c.b16 %v2491, %v2485
    %v2660 = vpack.c.b16 %v2492, %v2486
    %v2661 = vpack.c.b16 %v2493, %v2487
    %v2662 = vpack.c.b16 %v2500, %v2494
    %v2663 = vpack.c.b16 %v2501, %v2495
    %v2664 = vpack.c.b16 %v2502, %v2496
    %v2665 = vpack.c.b16 %v2503, %v2497
    %v2666 = vpack.c.b16 %v2504, %v2498
    %v2667 = vpack.c.b16 %v2505, %v2499
    %v2668 = vpack.c.b16 %v2512, %v2506
    %v2669 = vpack.c.b16 %v2513, %v2507
    %v2670 = vpack.c.b16 %v2514, %v2508
    %v2671 = vpack.c.b16 %v2515, %v2509
    %v2672 = vpack.c.b16 %v2516, %v2510
    %v2673 = vpack.c.b16 %v2517, %v2511
    %v2674 = vpack.c.b16 %v2524, %v2518
    %v2675 = vpack.c.b16 %v2525, %v2519
    %v2676 = vpack.c.b16 %v2526, %v2520
    %v2677 = vpack.c.b16 %v2527, %v2521
    %v2678 = vpack.c.b16 %v2528, %v2522
    %v2679 = vpack.c.b16 %v2529, %v2523
    %v2680 = vpack.c.b16 %v2536, %v2530
    %v2681 = vpack.c.b16 %v2537, %v2531
    %v2682 = vpack.c.b16 %v2538, %v2532
    %v2683 = vpack.c.b16 %v2539, %v2533
    %v2684 = vpack.c.b16 %v2540, %v2534
    %v2685 = vpack.c.b16 %v2541, %v2535
    %v2686 = vpack.c.b16 %v2548, %v2542
    %v2687 = vpack.c.b16 %v2549, %v2543
    %v2688 = vpack.c.b16 %v2550, %v2544
    %v2689 = vpack.c.b16 %v2551, %v2545
    %v2690 = vpack.c.b16 %v2552, %v2546
    %v2691 = vpack.c.b16 %v2553, %v2547
    %v2692 = vpack.c.b16 %v2560, %v2554
    %v2693 = vpack.c.b16 %v2561, %v2555
    %v2694 = vpack.c.b16 %v2562, %v2556
    %v2695 = vpack.c.b16 %v2563, %v2557
    %v2696 = vpack.c.b16 %v2564, %v2558
    %v2697 = vpack.c.b16 %v2565, %v2559
    %v2698 = vpack.c.b16 %v2572, %v2566
    %v2699 = vpack.c.b16 %v2573, %v2567
    %v2700 = vpack.c.b16 %v2574, %v2568
    %v2701 = vpack.c.b16 %v2575, %v2569
    %v2702 = vpack.c.b16 %v2576, %v2570
    %v2703 = vpack.c.b16 %v2577, %v2571
    %v2704 = vpack.c.b16 %v2584, %v2578
    %v2705 = vpack.c.b16 %v2585, %v2579
    %v2706 = vpack.c.b16 %v2586, %v2580
    %v2707 = vpack.c.b16 %v2587, %v2581
    %v2708 = vpack.c.b16 %v2588, %v2582
    %v2709 = vpack.c.b16 %v2589, %v2583
    %v2710 = vpack.c.b16 %v2596, %v2590
    %v2711 = vpack.c.b16 %v2597, %v2591
    %v2712 = vpack.c.b16 %v2598, %v2592
    %v2713 = vpack.c.b16 %v2599, %v2593
    %v2714 = vpack.c.b16 %v2600, %v2594
    %v2715 = vpack.c.b16 %v2601, %v2595
    %v2716 = vpack.c.b16 %v2608, %v2602
    %v2717 = vpack.c.b16 %v2609, %v2603
    %v2718 = vpack.c.b16 %v2610, %v2604
    %v2719 = vpack.c.b16 %v2611, %v2605
    %v2720 = vpack.c.b16 %v2612, %v2606
    %v2721 = vpack.c.b16 %v2613, %v2607
    %v2722 = vpack.c.b16 %v2620, %v2614
    %v2723 = vpack.c.b16 %v2621, %v2615
    %v2724 = vpack.c.b16 %v2622, %v2616
    %v2725 = vpack.c.b16 %v2623, %v2617
    %v2726 = vpack.c.b16 %v2624, %v2618
    %v2727 = vpack.c.b16 %v2625, %v2619
    %v2728 = vpack.c.b16 %v2632, %v2626
    %v2729 = vpack.c.b16 %v2633, %v2627
    %v2730 = vpack.c.b16 %v2634, %v2628
    %v2731 = vpack.c.b16 %v2635, %v2629
    %v2732 = vpack.c.b16 %v2636, %v2630
    %v2733 = vpack.c.b16 %v2637, %v2631
    %2830 = vmatprep.subr.bf16.mxu0 %v2681
    %2831 = vmatpush1.bf16.msra.mxu0 %v2680
    %2832 = vmatprep.subr.bf16.mxu0 %v2675
    %2833 = vmatpush1.bf16.msra.mxu0 %v2674
    %2834 = vmatprep.subr.bf16.mxu0 %v2669
    %2835 = vmatpush1.bf16.msra.mxu0 %v2668
    %2836 = vmatprep.subr.bf16.mxu0 %v2663
    %2837 = vmatpush1.bf16.msra.mxu0 %v2662
    %2838 = vmatprep.subr.bf16.mxu0 %v2657
    %2839 = vmatpush1.bf16.msra.mxu0 %v2656
    %2840 = vmatprep.subr.bf16.mxu0 %v2651
    %2841 = vmatpush1.bf16.msra.mxu0 %v2650
    %2842 = vmatprep.subr.bf16.mxu0 %v2645
    %2843 = vmatpush1.bf16.msra.mxu0 %v2644
    %2844 = vmatprep.subr.bf16.mxu0 %v2639
    %2845 = vmatpush1.bf16.msra.mxu0 %v2638
    %2846 = vmatprep.subr.bf16.mxu0 %v2729
    %2847 = vmatpush2.bf16.msra.mxu0 %v2728
    %2848 = vmatprep.subr.bf16.mxu0 %v2723
    %2849 = vmatpush2.bf16.msra.mxu0 %v2722
    %2850 = vmatprep.subr.bf16.mxu0 %v2717
    %2851 = vmatpush2.bf16.msra.mxu0 %v2716
    %2852 = vmatprep.subr.bf16.mxu0 %v2711
    %2853 = vmatpush2.bf16.msra.mxu0 %v2710
    %2854 = vmatprep.subr.bf16.mxu0 %v2705
    %2855 = vmatpush2.bf16.msra.mxu0 %v2704
    %2856 = vmatprep.subr.bf16.mxu0 %v2699
    %2857 = vmatpush2.bf16.msra.mxu0 %v2698
    %2858 = vmatprep.subr.bf16.mxu0 %v2693
    %2859 = vmatpush2.bf16.msra.mxu0 %v2692
    %2860 = vmatprep.subr.bf16.mxu0 %v2687
    %2861 = vmatpush2.bf16.msra.mxu0 %v2686
    %2862 = vmatprep.mubr.bf16.mxu0 %v2219
    %2863 = vmatmul.mubr.bf16.gmra.mxu0 %v2218
    %v2864 = vpop.f32.mrf.mxu0
    %v2865 = vadd.f32 %v2323, %v2864
    %v2866 = vpop.f32.mrf.mxu0
    %v2867 = vadd.f32 %v2327, %v2866
    %v2868 = vpop.f32.mrf.mxu0
    %v2869 = vpop.f32.mrf.mxu0
    %2870 = vdwg.mxu0
    %2871 = vmatprep.subr.bf16.mxu0 %v2683
    %2872 = vmatpush1.bf16.msra.mxu0 %v2682
    %2873 = vmatprep.subr.bf16.mxu0 %v2677
    %2874 = vmatpush1.bf16.msra.mxu0 %v2676
    %2875 = vmatprep.subr.bf16.mxu0 %v2671
    %2876 = vmatpush1.bf16.msra.mxu0 %v2670
    %2877 = vmatprep.subr.bf16.mxu0 %v2665
    %2878 = vmatpush1.bf16.msra.mxu0 %v2664
    %2879 = vmatprep.subr.bf16.mxu0 %v2659
    %2880 = vmatpush1.bf16.msra.mxu0 %v2658
    %2881 = vmatprep.subr.bf16.mxu0 %v2653
    %2882 = vmatpush1.bf16.msra.mxu0 %v2652
    %2883 = vmatprep.subr.bf16.mxu0 %v2647
    %2884 = vmatpush1.bf16.msra.mxu0 %v2646
    %2885 = vmatprep.subr.bf16.mxu0 %v2641
    %2886 = vmatpush1.bf16.msra.mxu0 %v2640
    %2887 = vmatprep.subr.bf16.mxu0 %v2731
    %2888 = vmatpush2.bf16.msra.mxu0 %v2730
    %2889 = vmatprep.subr.bf16.mxu0 %v2725
    %2890 = vmatpush2.bf16.msra.mxu0 %v2724
    %2891 = vmatprep.subr.bf16.mxu0 %v2719
    %2892 = vmatpush2.bf16.msra.mxu0 %v2718
    %2893 = vmatprep.subr.bf16.mxu0 %v2713
    %2894 = vmatpush2.bf16.msra.mxu0 %v2712
    %2895 = vmatprep.subr.bf16.mxu0 %v2707
    %2896 = vmatpush2.bf16.msra.mxu0 %v2706
    %2897 = vmatprep.subr.bf16.mxu0 %v2701
    %2898 = vmatpush2.bf16.msra.mxu0 %v2700
    %2899 = vmatprep.subr.bf16.mxu0 %v2695
    %2900 = vmatpush2.bf16.msra.mxu0 %v2694
    %2901 = vmatprep.subr.bf16.mxu0 %v2689
    %2902 = vmatpush2.bf16.msra.mxu0 %v2688
    %2903 = vmatprep.mubr.bf16.mxu0 %v2219
    %2904 = vmatmul.mubr.bf16.gmra.mxu0 %v2218
    %v2905 = vpop.f32.mrf.mxu0
    %v2906 = vadd.f32 %v2331, %v2905
    %v2907 = vpop.f32.mrf.mxu0
    %v2908 = vadd.f32 %v2335, %v2907
    %v2909 = vpop.f32.mrf.mxu0
    %v2910 = vpop.f32.mrf.mxu0
    %2911 = vdwg.mxu0
    %2912 = vmatprep.subr.bf16.mxu0 %v2685
    %2913 = vmatpush1.bf16.msra.mxu0 %v2684
    %2914 = vmatprep.subr.bf16.mxu0 %v2679
    %2915 = vmatpush1.bf16.msra.mxu0 %v2678
    %2916 = vmatprep.subr.bf16.mxu0 %v2673
    %2917 = vmatpush1.bf16.msra.mxu0 %v2672
    %2918 = vmatprep.subr.bf16.mxu0 %v2667
    %2919 = vmatpush1.bf16.msra.mxu0 %v2666
    %2920 = vmatprep.subr.bf16.mxu0 %v2661
    %2921 = vmatpush1.bf16.msra.mxu0 %v2660
    %2922 = vmatprep.subr.bf16.mxu0 %v2655
    %2923 = vmatpush1.bf16.msra.mxu0 %v2654
    %2924 = vmatprep.subr.bf16.mxu0 %v2649
    %2925 = vmatpush1.bf16.msra.mxu0 %v2648
    %2926 = vmatprep.subr.bf16.mxu0 %v2643
    %2927 = vmatpush1.bf16.msra.mxu0 %v2642
    %2928 = vmatprep.subr.bf16.mxu0 %v2733
    %2929 = vmatpush2.bf16.msra.mxu0 %v2732
    %2930 = vmatprep.subr.bf16.mxu0 %v2727
    %2931 = vmatpush2.bf16.msra.mxu0 %v2726
    %2932 = vmatprep.subr.bf16.mxu0 %v2721
    %2933 = vmatpush2.bf16.msra.mxu0 %v2720
    %2934 = vmatprep.subr.bf16.mxu0 %v2715
    %2935 = vmatpush2.bf16.msra.mxu0 %v2714
    %2936 = vmatprep.subr.bf16.mxu0 %v2709
    %2937 = vmatpush2.bf16.msra.mxu0 %v2708
    %2938 = vmatprep.subr.bf16.mxu0 %v2703
    %2939 = vmatpush2.bf16.msra.mxu0 %v2702
    %2940 = vmatprep.subr.bf16.mxu0 %v2697
    %2941 = vmatpush2.bf16.msra.mxu0 %v2696
    %2942 = vmatprep.subr.bf16.mxu0 %v2691
    %2943 = vmatpush2.bf16.msra.mxu0 %v2690
    %2944 = vmatprep.mubr.bf16.mxu0 %v2219
    %2945 = vmatmul.mubr.bf16.gmra.mxu0 %v2218
    %v2946 = vpop.f32.mrf.mxu0
    %v2947 = vadd.f32 %v2339, %v2946
    %v2948 = vpop.f32.mrf.mxu0
    %v2949 = vadd.f32 %v2343, %v2948
    %v2950 = vpop.f32.mrf.mxu0
    %v2951 = vpop.f32.mrf.mxu0
    %2952 = vdwg.mxu0
    %v2953 = vmul.f32 %v2865, %v112
    %2954 = vrot.lane.b32.xlu0 %v2865, 64
    %v2955 = vpop.permute.xlu0 %2954
    %v2956 = vmul.f32 %v2955, %v113
    %v2957 = vadd.f32 %v2953, %v2956
    %v2958 = vmul.f32 %v2906, %v112
    %2959 = vrot.lane.b32.xlu0 %v2906, 64
    %v2960 = vpop.permute.xlu0 %2959
    %v2961 = vmul.f32 %v2960, %v113
    %v2962 = vadd.f32 %v2958, %v2961
    %2963 = vmatprep.subr.mxu0 0.0
    %2964 = vmatpush1.xpose.msra.mxu0 0.0
    %2965 = vmatprep.subr.mxu0 0.0
    %2966 = vmatpush1.xpose.msra.mxu0 0.0
    %2967 = vmatprep.subr.mxu0 0.0
    %2968 = vmatpush1.xpose.msra.mxu0 0.0
    %2969 = vmatprep.subr.mxu0 0.0
    %2970 = vmatpush1.xpose.msra.mxu0 0.0
    %2971 = vmatprep.subr.mxu0 0.0
    %2972 = vmatpush1.xpose.msra.mxu0 0.0
    %2973 = vmatprep.subr.mxu0 0.0
    %2974 = vmatpush1.xpose.msra.mxu0 0.0
    %2975 = vmatprep.subr.mxu0 0.0
    %2976 = vmatpush1.xpose.msra.mxu0 0.0
    %2977 = vmatprep.subr.mxu0 0.0
    %2978 = vmatpush1.xpose.msra.mxu0 0.0
    %2979 = vmatprep.subr.mxu0 0.0
    %2980 = vmatpush1.xpose.msra.mxu0 0.0
    %2981 = vmatprep.subr.mxu0 0.0
    %2982 = vmatpush1.xpose.msra.mxu0 0.0
    %2983 = vmatprep.subr.mxu0 0.0
    %2984 = vmatpush1.xpose.msra.mxu0 0.0
    %2985 = vmatprep.subr.mxu0 0.0
    %2986 = vmatpush1.xpose.msra.mxu0 0.0
    %2987 = vmatprep.subr.mxu0 0.0
    %2988 = vmatpush1.xpose.msra.mxu0 0.0
    %2989 = vmatprep.subr.mxu0 0.0
    %2990 = vmatpush1.xpose.msra.mxu0 0.0
    %2991 = vmatprep.subr.mxu0 0.0
    %2992 = vmatpush1.xpose.msra.mxu0 0.0
    %2993 = vmatprep.subr.mxu0 0.0
    %2994 = vmatpush1.xpose.msra.mxu0 %v2962
    %2995 = vmatprep.subr.mxu0 0.0
    %2996 = vmatpush2.xpose.msra.mxu0 0.0
    %2997 = vmatprep.subr.mxu0 0.0
    %2998 = vmatpush2.xpose.msra.mxu0 0.0
    %2999 = vmatprep.subr.mxu0 0.0
    %3000 = vmatpush2.xpose.msra.mxu0 0.0
    %3001 = vmatprep.subr.mxu0 0.0
    %3002 = vmatpush2.xpose.msra.mxu0 0.0
    %3003 = vmatprep.subr.mxu0 0.0
    %3004 = vmatpush2.xpose.msra.mxu0 0.0
    %3005 = vmatprep.subr.mxu0 0.0
    %3006 = vmatpush2.xpose.msra.mxu0 0.0
    %3007 = vmatprep.subr.mxu0 0.0
    %3008 = vmatpush2.xpose.msra.mxu0 0.0
    %3009 = vmatprep.subr.mxu0 0.0
    %3010 = vmatpush2.xpose.msra.mxu0 0.0
    %3011 = vmatprep.subr.mxu0 0.0
    %3012 = vmatpush2.xpose.msra.mxu0 0.0
    %3013 = vmatprep.subr.mxu0 0.0
    %3014 = vmatpush2.xpose.msra.mxu0 0.0
    %3015 = vmatprep.subr.mxu0 0.0
    %3016 = vmatpush2.xpose.msra.mxu0 0.0
    %3017 = vmatprep.subr.mxu0 0.0
    %3018 = vmatpush2.xpose.msra.mxu0 0.0
    %3019 = vmatprep.subr.mxu0 0.0
    %3020 = vmatpush2.xpose.msra.mxu0 0.0
    %3021 = vmatprep.subr.mxu0 0.0
    %3022 = vmatpush2.xpose.msra.mxu0 0.0
    %3023 = vmatprep.subr.mxu0 0.0
    %3024 = vmatpush2.xpose.msra.mxu0 0.0
    %3025 = vmatprep.subr.mxu0 0.0
    %3026 = vmatpush2.xpose.msra.mxu0 0.0
    %3027 = vmatprep.mubr.f32.mxu0 0.0
    %3028 = vmatmul.mubr.f32.gmra.mxu0 %v2957
    %v3029 = vpop.f32.mrf.mxu0
    %v3030 = vadd.f32 0.0, %v3029
    %v3031 = vpop.f32.mrf.mxu0
    %3032 = vdwg.mxu0
    %v3033 = vmul.f32 %v3030, 0.088388346
    %v3034 = vadd.f32 %v3033, %v119
    %v3035 = vsel %vm960, %v3034, -inf
    %3036 = vmax.xlane.f32.xlu0 %v3035
    %v3037 = vpop.xlane.xlu0 %3036
    %v3038 = vsub.f32 %v3034, %v3037
    %v3039 = vmul.f32 %v3038, 1.442695
    %v3040 = vpow.pop %v3039
    %v3041 = vsel %vm960, %v3040, 0.0
    %3042 = vadd.xlane.f32.xlu0 %v3041
    %v3043 = vpop.xlane.xlu0 %3042
    %v3044 = vrcp.pop %v3043
    %v3045 = vmul.f32 %v3040, %v3044
    %v3047 = vsel %vm960, %v3045, 0
    %3049 = vmatprep.subr.mxu0 0.0
    %3050 = vmatpush1.msra.mxu0 0.0
    %3051 = vmatprep.subr.mxu0 0.0
    %3052 = vmatpush1.msra.mxu0 0.0
    %3053 = vmatprep.subr.mxu0 0.0
    %3054 = vmatpush1.msra.mxu0 0.0
    %3055 = vmatprep.subr.mxu0 0.0
    %3056 = vmatpush1.msra.mxu0 0.0
    %3057 = vmatprep.subr.mxu0 0.0
    %3058 = vmatpush1.msra.mxu0 0.0
    %3059 = vmatprep.subr.mxu0 0.0
    %3060 = vmatpush1.msra.mxu0 0.0
    %3061 = vmatprep.subr.mxu0 0.0
    %3062 = vmatpush1.msra.mxu0 0.0
    %3063 = vmatprep.subr.mxu0 0.0
    %3064 = vmatpush1.msra.mxu0 0.0
    %3065 = vmatprep.subr.mxu0 0.0
    %3066 = vmatpush1.msra.mxu0 0.0
    %3067 = vmatprep.subr.mxu0 0.0
    %3068 = vmatpush1.msra.mxu0 0.0
    %3069 = vmatprep.subr.mxu0 0.0
    %3070 = vmatpush1.msra.mxu0 0.0
    %3071 = vmatprep.subr.mxu0 0.0
    %3072 = vmatpush1.msra.mxu0 0.0
    %3073 = vmatprep.subr.mxu0 0.0
    %3074 = vmatpush1.msra.mxu0 0.0
    %3075 = vmatprep.subr.mxu0 0.0
    %3076 = vmatpush1.msra.mxu0 0.0
    %3077 = vmatprep.subr.mxu0 0.0
    %3078 = vmatpush1.msra.mxu0 0.0
    %3079 = vmatprep.subr.mxu0 0.0
    %3080 = vmatpush1.msra.mxu0 %v2947
    %3081 = vmatprep.subr.mxu0 0.0
    %3082 = vmatpush2.msra.mxu0 0.0
    %3083 = vmatprep.subr.mxu0 0.0
    %3084 = vmatpush2.msra.mxu0 0.0
    %3085 = vmatprep.subr.mxu0 0.0
    %3086 = vmatpush2.msra.mxu0 0.0
    %3087 = vmatprep.subr.mxu0 0.0
    %3088 = vmatpush2.msra.mxu0 0.0
    %3089 = vmatprep.subr.mxu0 0.0
    %3090 = vmatpush2.msra.mxu0 0.0
    %3091 = vmatprep.subr.mxu0 0.0
    %3092 = vmatpush2.msra.mxu0 0.0
    %3093 = vmatprep.subr.mxu0 0.0
    %3094 = vmatpush2.msra.mxu0 0.0
    %3095 = vmatprep.subr.mxu0 0.0
    %3096 = vmatpush2.msra.mxu0 0.0
    %3097 = vmatprep.subr.mxu0 0.0
    %3098 = vmatpush2.msra.mxu0 0.0
    %3099 = vmatprep.subr.mxu0 0.0
    %3100 = vmatpush2.msra.mxu0 0.0
    %3101 = vmatprep.subr.mxu0 0.0
    %3102 = vmatpush2.msra.mxu0 0.0
    %3103 = vmatprep.subr.mxu0 0.0
    %3104 = vmatpush2.msra.mxu0 0.0
    %3105 = vmatprep.subr.mxu0 0.0
    %3106 = vmatpush2.msra.mxu0 0.0
    %3107 = vmatprep.subr.mxu0 0.0
    %3108 = vmatpush2.msra.mxu0 0.0
    %3109 = vmatprep.subr.mxu0 0.0
    %3110 = vmatpush2.msra.mxu0 0.0
    %3111 = vmatprep.subr.mxu0 0.0
    %3112 = vmatpush2.msra.mxu0 0.0
    %3113 = vmatprep.mubr.f32.mxu0 0.0
    %3114 = vmatmul.mubr.f32.gmra.mxu0 %v3047
    %v3115 = vpop.f32.mrf.mxu0
    %v3116 = vadd.f32 0.0, %v3115
    %v3117 = vpop.f32.mrf.mxu0
    %3118 = vdwg.mxu0
    %v3119 = vmul.f32 %v2867, %v112
    %3120 = vrot.lane.b32.xlu0 %v2867, 64
    %v3121 = vpop.permute.xlu0 %3120
    %v3122 = vmul.f32 %v3121, %v113
    %v3123 = vadd.f32 %v3119, %v3122
    %v3124 = vmul.f32 %v2908, %v112
    %3125 = vrot.lane.b32.xlu0 %v2908, 64
    %v3126 = vpop.permute.xlu0 %3125
    %v3127 = vmul.f32 %v3126, %v113
    %v3128 = vadd.f32 %v3124, %v3127
    %3129 = vmatprep.subr.mxu0 0.0
    %3130 = vmatpush1.xpose.msra.mxu0 0.0
    %3131 = vmatprep.subr.mxu0 0.0
    %3132 = vmatpush1.xpose.msra.mxu0 0.0
    %3133 = vmatprep.subr.mxu0 0.0
    %3134 = vmatpush1.xpose.msra.mxu0 0.0
    %3135 = vmatprep.subr.mxu0 0.0
    %3136 = vmatpush1.xpose.msra.mxu0 0.0
    %3137 = vmatprep.subr.mxu0 0.0
    %3138 = vmatpush1.xpose.msra.mxu0 0.0
    %3139 = vmatprep.subr.mxu0 0.0
    %3140 = vmatpush1.xpose.msra.mxu0 0.0
    %3141 = vmatprep.subr.mxu0 0.0
    %3142 = vmatpush1.xpose.msra.mxu0 0.0
    %3143 = vmatprep.subr.mxu0 0.0
    %3144 = vmatpush1.xpose.msra.mxu0 0.0
    %3145 = vmatprep.subr.mxu0 0.0
    %3146 = vmatpush1.xpose.msra.mxu0 0.0
    %3147 = vmatprep.subr.mxu0 0.0
    %3148 = vmatpush1.xpose.msra.mxu0 0.0
    %3149 = vmatprep.subr.mxu0 0.0
    %3150 = vmatpush1.xpose.msra.mxu0 0.0
    %3151 = vmatprep.subr.mxu0 0.0
    %3152 = vmatpush1.xpose.msra.mxu0 0.0
    %3153 = vmatprep.subr.mxu0 0.0
    %3154 = vmatpush1.xpose.msra.mxu0 0.0
    %3155 = vmatprep.subr.mxu0 0.0
    %3156 = vmatpush1.xpose.msra.mxu0 0.0
    %3157 = vmatprep.subr.mxu0 0.0
    %3158 = vmatpush1.xpose.msra.mxu0 0.0
    %3159 = vmatprep.subr.mxu0 0.0
    %3160 = vmatpush1.xpose.msra.mxu0 %v3128
    %3161 = vmatprep.subr.mxu0 0.0
    %3162 = vmatpush2.xpose.msra.mxu0 0.0
    %3163 = vmatprep.subr.mxu0 0.0
    %3164 = vmatpush2.xpose.msra.mxu0 0.0
    %3165 = vmatprep.subr.mxu0 0.0
    %3166 = vmatpush2.xpose.msra.mxu0 0.0
    %3167 = vmatprep.subr.mxu0 0.0
    %3168 = vmatpush2.xpose.msra.mxu0 0.0
    %3169 = vmatprep.subr.mxu0 0.0
    %3170 = vmatpush2.xpose.msra.mxu0 0.0
    %3171 = vmatprep.subr.mxu0 0.0
    %3172 = vmatpush2.xpose.msra.mxu0 0.0
    %3173 = vmatprep.subr.mxu0 0.0
    %3174 = vmatpush2.xpose.msra.mxu0 0.0
    %3175 = vmatprep.subr.mxu0 0.0
    %3176 = vmatpush2.xpose.msra.mxu0 0.0
    %3177 = vmatprep.subr.mxu0 0.0
    %3178 = vmatpush2.xpose.msra.mxu0 0.0
    %3179 = vmatprep.subr.mxu0 0.0
    %3180 = vmatpush2.xpose.msra.mxu0 0.0
    %3181 = vmatprep.subr.mxu0 0.0
    %3182 = vmatpush2.xpose.msra.mxu0 0.0
    %3183 = vmatprep.subr.mxu0 0.0
    %3184 = vmatpush2.xpose.msra.mxu0 0.0
    %3185 = vmatprep.subr.mxu0 0.0
    %3186 = vmatpush2.xpose.msra.mxu0 0.0
    %3187 = vmatprep.subr.mxu0 0.0
    %3188 = vmatpush2.xpose.msra.mxu0 0.0
    %3189 = vmatprep.subr.mxu0 0.0
    %3190 = vmatpush2.xpose.msra.mxu0 0.0
    %3191 = vmatprep.subr.mxu0 0.0
    %3192 = vmatpush2.xpose.msra.mxu0 0.0
    %3193 = vmatprep.mubr.f32.mxu0 0.0
    %3194 = vmatmul.mubr.f32.gmra.mxu0 %v3123
    %v3195 = vpop.f32.mrf.mxu0
    %v3196 = vadd.f32 0.0, %v3195
    %v3197 = vpop.f32.mrf.mxu0
    %3198 = vdwg.mxu0
    %v3199 = vmul.f32 %v3196, 0.088388346
    %v3200 = vadd.f32 %v3199, %v119
    %v3201 = vsel %vm960, %v3200, -inf
    %3202 = vmax.xlane.f32.xlu0 %v3201
    %v3203 = vpop.xlane.xlu0 %3202
    %v3204 = vsub.f32 %v3200, %v3203
    %v3205 = vmul.f32 %v3204, 1.442695
    %v3206 = vpow.pop %v3205
    %v3207 = vsel %vm960, %v3206, 0.0
    %3208 = vadd.xlane.f32.xlu0 %v3207
    %v3209 = vpop.xlane.xlu0 %3208
    %v3210 = vrcp.pop %v3209
    %v3211 = vmul.f32 %v3206, %v3210
    %v3213 = vsel %vm960, %v3211, 0
    %3215 = vmatprep.subr.mxu0 0.0
    %3216 = vmatpush1.msra.mxu0 0.0
    %3217 = vmatprep.subr.mxu0 0.0
    %3218 = vmatpush1.msra.mxu0 0.0
    %3219 = vmatprep.subr.mxu0 0.0
    %3220 = vmatpush1.msra.mxu0 0.0
    %3221 = vmatprep.subr.mxu0 0.0
    %3222 = vmatpush1.msra.mxu0 0.0
    %3223 = vmatprep.subr.mxu0 0.0
    %3224 = vmatpush1.msra.mxu0 0.0
    %3225 = vmatprep.subr.mxu0 0.0
    %3226 = vmatpush1.msra.mxu0 0.0
    %3227 = vmatprep.subr.mxu0 0.0
    %3228 = vmatpush1.msra.mxu0 0.0
    %3229 = vmatprep.subr.mxu0 0.0
    %3230 = vmatpush1.msra.mxu0 0.0
    %3231 = vmatprep.subr.mxu0 0.0
    %3232 = vmatpush1.msra.mxu0 0.0
    %3233 = vmatprep.subr.mxu0 0.0
    %3234 = vmatpush1.msra.mxu0 0.0
    %3235 = vmatprep.subr.mxu0 0.0
    %3236 = vmatpush1.msra.mxu0 0.0
    %3237 = vmatprep.subr.mxu0 0.0
    %3238 = vmatpush1.msra.mxu0 0.0
    %3239 = vmatprep.subr.mxu0 0.0
    %3240 = vmatpush1.msra.mxu0 0.0
    %3241 = vmatprep.subr.mxu0 0.0
    %3242 = vmatpush1.msra.mxu0 0.0
    %3243 = vmatprep.subr.mxu0 0.0
    %3244 = vmatpush1.msra.mxu0 0.0
    %3245 = vmatprep.subr.mxu0 0.0
    %3246 = vmatpush1.msra.mxu0 %v2949
    %3247 = vmatprep.subr.mxu0 0.0
    %3248 = vmatpush2.msra.mxu0 0.0
    %3249 = vmatprep.subr.mxu0 0.0
    %3250 = vmatpush2.msra.mxu0 0.0
    %3251 = vmatprep.subr.mxu0 0.0
    %3252 = vmatpush2.msra.mxu0 0.0
    %3253 = vmatprep.subr.mxu0 0.0
    %3254 = vmatpush2.msra.mxu0 0.0
    %3255 = vmatprep.subr.mxu0 0.0
    %3256 = vmatpush2.msra.mxu0 0.0
    %3257 = vmatprep.subr.mxu0 0.0
    %3258 = vmatpush2.msra.mxu0 0.0
    %3259 = vmatprep.subr.mxu0 0.0
    %3260 = vmatpush2.msra.mxu0 0.0
    %3261 = vmatprep.subr.mxu0 0.0
    %3262 = vmatpush2.msra.mxu0 0.0
    %3263 = vmatprep.subr.mxu0 0.0
    %3264 = vmatpush2.msra.mxu0 0.0
    %3265 = vmatprep.subr.mxu0 0.0
    %3266 = vmatpush2.msra.mxu0 0.0
    %3267 = vmatprep.subr.mxu0 0.0
    %3268 = vmatpush2.msra.mxu0 0.0
    %3269 = vmatprep.subr.mxu0 0.0
    %3270 = vmatpush2.msra.mxu0 0.0
    %3271 = vmatprep.subr.mxu0 0.0
    %3272 = vmatpush2.msra.mxu0 0.0
    %3273 = vmatprep.subr.mxu0 0.0
    %3274 = vmatpush2.msra.mxu0 0.0
    %3275 = vmatprep.subr.mxu0 0.0
    %3276 = vmatpush2.msra.mxu0 0.0
    %3277 = vmatprep.subr.mxu0 0.0
    %3278 = vmatpush2.msra.mxu0 0.0
    %3279 = vmatprep.mubr.f32.mxu0 0.0
    %3280 = vmatmul.mubr.f32.gmra.mxu0 %v3213
    %v3281 = vpop.f32.mrf.mxu0
    %v3282 = vadd.f32 0.0, %v3281
    %v3283 = vpop.f32.mrf.mxu0
    %3284 = vdwg.mxu0
    %v3285 = vpack.c.bf16 %v3116, %v3116
    %v3286 = vpack.c.bf16 %v3282, %v3282
    %s3287 = scalar_lea.vmem [#allocation5], 256
    %v3288 = vld [vmem:[%s3287] sm:$0xff]
    %v3289 = vld [vmem:[%s3287 + $0x8] sm:$0xff]
    %v3290 = vld [vmem:[%s3287 + $0x10] sm:$0xff]
    %v3291 = vld [vmem:[%s3287 + $0x18] sm:$0xff]
    %v3292 = vld [vmem:[%s3287 + $0x20] sm:$0xff]
    %v3293 = vld [vmem:[%s3287 + $0x28] sm:$0xff]
    %v3294 = vld [vmem:[%s3287 + $0x30] sm:$0xff]
    %v3295 = vld [vmem:[%s3287 + $0x38] sm:$0xff]
    %v3296 = vld [vmem:[%s3287 + $0x40] sm:$0xff]
    %v3297 = vld [vmem:[%s3287 + $0x48] sm:$0xff]
    %v3298 = vld [vmem:[%s3287 + $0x50] sm:$0xff]
    %v3299 = vld [vmem:[%s3287 + $0x58] sm:$0xff]
    %v3300 = vld [vmem:[%s3287 + $0x60] sm:$0xff]
    %v3301 = vld [vmem:[%s3287 + $0x68] sm:$0xff]
    %v3302 = vld [vmem:[%s3287 + $0x70] sm:$0xff]
    %v3303 = vld [vmem:[%s3287 + $0x78] sm:$0xff]
    %v3304 = vld [vmem:[%s3287 + $0x80] sm:$0xff]
    %v3305 = vld [vmem:[%s3287 + $0x88] sm:$0xff]
    %v3306 = vld [vmem:[%s3287 + $0x90] sm:$0xff]
    %v3307 = vld [vmem:[%s3287 + $0x98] sm:$0xff]
    %v3308 = vld [vmem:[%s3287 + $0xa0] sm:$0xff]
    %v3309 = vld [vmem:[%s3287 + $0xa8] sm:$0xff]
    %v3310 = vld [vmem:[%s3287 + $0xb0] sm:$0xff]
    %v3311 = vld [vmem:[%s3287 + $0xb8] sm:$0xff]
    %v3312 = vld [vmem:[%s3287 + $0xc0] sm:$0xff]
    %v3313 = vld [vmem:[%s3287 + $0xc8] sm:$0xff]
    %v3314 = vld [vmem:[%s3287 + $0xd0] sm:$0xff]
    %v3315 = vld [vmem:[%s3287 + $0xd8] sm:$0xff]
    %v3316 = vld [vmem:[%s3287 + $0xe0] sm:$0xff]
    %v3317 = vld [vmem:[%s3287 + $0xe8] sm:$0xff]
    %v3318 = vld [vmem:[%s3287 + $0xf0] sm:$0xff]
    %v3319 = vld [vmem:[%s3287 + $0xf8] sm:$0xff]
    %v3352 = vunpack.c.l.b16 %v3288
    %v3353 = vunpack.c.h.b16 %v3288
    %v3354 = vunpack.c.l.b16 %v3289
    %v3355 = vunpack.c.h.b16 %v3289
    %v3356 = vunpack.c.l.b16 %v3290
    %v3357 = vunpack.c.h.b16 %v3290
    %v3358 = vunpack.c.l.b16 %v3291
    %v3359 = vunpack.c.h.b16 %v3291
    %v3360 = vunpack.c.l.b16 %v3292
    %v3361 = vunpack.c.h.b16 %v3292
    %v3362 = vunpack.c.l.b16 %v3293
    %v3363 = vunpack.c.h.b16 %v3293
    %v3364 = vunpack.c.l.b16 %v3294
    %v3365 = vunpack.c.h.b16 %v3294
    %v3366 = vunpack.c.l.b16 %v3295
    %v3367 = vunpack.c.h.b16 %v3295
    %v3368 = vunpack.c.l.b16 %v3296
    %v3369 = vunpack.c.h.b16 %v3296
    %v3370 = vunpack.c.l.b16 %v3297
    %v3371 = vunpack.c.h.b16 %v3297
    %v3372 = vunpack.c.l.b16 %v3298
    %v3373 = vunpack.c.h.b16 %v3298
    %v3374 = vunpack.c.l.b16 %v3299
    %v3375 = vunpack.c.h.b16 %v3299
    %v3376 = vunpack.c.l.b16 %v3300
    %v3377 = vunpack.c.h.b16 %v3300
    %v3378 = vunpack.c.l.b16 %v3301
    %v3379 = vunpack.c.h.b16 %v3301
    %v3380 = vunpack.c.l.b16 %v3302
    %v3381 = vunpack.c.h.b16 %v3302
    %v3382 = vunpack.c.l.b16 %v3303
    %v3383 = vunpack.c.h.b16 %v3303
    %v3384 = vunpack.c.l.b16 %v3304
    %v3385 = vunpack.c.h.b16 %v3304
    %v3386 = vunpack.c.l.b16 %v3305
    %v3387 = vunpack.c.h.b16 %v3305
    %v3388 = vunpack.c.l.b16 %v3306
    %v3389 = vunpack.c.h.b16 %v3306
    %v3390 = vunpack.c.l.b16 %v3307
    %v3391 = vunpack.c.h.b16 %v3307
    %v3392 = vunpack.c.l.b16 %v3308
    %v3393 = vunpack.c.h.b16 %v3308
    %v3394 = vunpack.c.l.b16 %v3309
    %v3395 = vunpack.c.h.b16 %v3309
    %v3396 = vunpack.c.l.b16 %v3310
    %v3397 = vunpack.c.h.b16 %v3310
    %v3398 = vunpack.c.l.b16 %v3311
    %v3399 = vunpack.c.h.b16 %v3311
    %v3400 = vunpack.c.l.b16 %v3312
    %v3401 = vunpack.c.h.b16 %v3312
    %v3402 = vunpack.c.l.b16 %v3313
    %v3403 = vunpack.c.h.b16 %v3313
    %v3404 = vunpack.c.l.b16 %v3314
    %v3405 = vunpack.c.h.b16 %v3314
    %v3406 = vunpack.c.l.b16 %v3315
    %v3407 = vunpack.c.h.b16 %v3315
    %v3408 = vunpack.c.l.b16 %v3316
    %v3409 = vunpack.c.h.b16 %v3316
    %v3410 = vunpack.c.l.b16 %v3317
    %v3411 = vunpack.c.h.b16 %v3317
    %v3412 = vunpack.c.l.b16 %v3318
    %v3413 = vunpack.c.h.b16 %v3318
    %v3414 = vunpack.c.l.b16 %v3319
    %v3415 = vunpack.c.h.b16 %v3319
    %v3416 = vpack.c.b16 %v3354, %v3352
    %v3417 = vpack.c.b16 %v3355, %v3353
    %v3418 = vpack.c.b16 %v3358, %v3356
    %v3419 = vpack.c.b16 %v3359, %v3357
    %v3420 = vpack.c.b16 %v3362, %v3360
    %v3421 = vpack.c.b16 %v3363, %v3361
    %v3422 = vpack.c.b16 %v3366, %v3364
    %v3423 = vpack.c.b16 %v3367, %v3365
    %v3424 = vpack.c.b16 %v3370, %v3368
    %v3425 = vpack.c.b16 %v3371, %v3369
    %v3426 = vpack.c.b16 %v3374, %v3372
    %v3427 = vpack.c.b16 %v3375, %v3373
    %v3428 = vpack.c.b16 %v3378, %v3376
    %v3429 = vpack.c.b16 %v3379, %v3377
    %v3430 = vpack.c.b16 %v3382, %v3380
    %v3431 = vpack.c.b16 %v3383, %v3381
    %v3432 = vpack.c.b16 %v3386, %v3384
    %v3433 = vpack.c.b16 %v3387, %v3385
    %v3434 = vpack.c.b16 %v3390, %v3388
    %v3435 = vpack.c.b16 %v3391, %v3389
    %v3436 = vpack.c.b16 %v3394, %v3392
    %v3437 = vpack.c.b16 %v3395, %v3393
    %v3438 = vpack.c.b16 %v3398, %v3396
    %v3439 = vpack.c.b16 %v3399, %v3397
    %v3440 = vpack.c.b16 %v3402, %v3400
    %v3441 = vpack.c.b16 %v3403, %v3401
    %v3442 = vpack.c.b16 %v3406, %v3404
    %v3443 = vpack.c.b16 %v3407, %v3405
    %v3444 = vpack.c.b16 %v3410, %v3408
    %v3445 = vpack.c.b16 %v3411, %v3409
    %v3446 = vpack.c.b16 %v3414, %v3412
    %v3447 = vpack.c.b16 %v3415, %v3413
    %3480 = vmatprep.subr.bf16.mxu0 %v3431
    %3481 = vmatpush1.bf16.msra.mxu0 %v3430
    %3482 = vmatprep.subr.bf16.mxu0 %v3429
    %3483 = vmatpush1.bf16.msra.mxu0 %v3428
    %3484 = vmatprep.subr.bf16.mxu0 %v3427
    %3485 = vmatpush1.bf16.msra.mxu0 %v3426
    %3486 = vmatprep.subr.bf16.mxu0 %v3425
    %3487 = vmatpush1.bf16.msra.mxu0 %v3424
    %3488 = vmatprep.subr.bf16.mxu0 %v3423
    %3489 = vmatpush1.bf16.msra.mxu0 %v3422
    %3490 = vmatprep.subr.bf16.mxu0 %v3421
    %3491 = vmatpush1.bf16.msra.mxu0 %v3420
    %3492 = vmatprep.subr.bf16.mxu0 %v3419
    %3493 = vmatpush1.bf16.msra.mxu0 %v3418
    %3494 = vmatprep.subr.bf16.mxu0 %v3417
    %3495 = vmatpush1.bf16.msra.mxu0 %v3416
    %3496 = vmatprep.subr.bf16.mxu0 %v3447
    %3497 = vmatpush2.bf16.msra.mxu0 %v3446
    %3498 = vmatprep.subr.bf16.mxu0 %v3445
    %3499 = vmatpush2.bf16.msra.mxu0 %v3444
    %3500 = vmatprep.subr.bf16.mxu0 %v3443
    %3501 = vmatpush2.bf16.msra.mxu0 %v3442
    %3502 = vmatprep.subr.bf16.mxu0 %v3441
    %3503 = vmatpush2.bf16.msra.mxu0 %v3440
    %3504 = vmatprep.subr.bf16.mxu0 %v3439
    %3505 = vmatpush2.bf16.msra.mxu0 %v3438
    %3506 = vmatprep.subr.bf16.mxu0 %v3437
    %3507 = vmatpush2.bf16.msra.mxu0 %v3436
    %3508 = vmatprep.subr.bf16.mxu0 %v3435
    %3509 = vmatpush2.bf16.msra.mxu0 %v3434
    %3510 = vmatprep.subr.bf16.mxu0 %v3433
    %3511 = vmatpush2.bf16.msra.mxu0 %v3432
    %3512 = vmatprep.mubr.bf16.mxu0 %v3286
    %3513 = vmatmul.mubr.bf16.gmra.mxu0 %v3285
    %v3514 = vpop.f32.mrf.mxu0
    %v3515 = vadd.f32 0.0, %v3514
    %v3516 = vpop.f32.mrf.mxu0
    %v3517 = vadd.f32 0.0, %v3516
    %v3518 = vpop.f32.mrf.mxu0
    %v3519 = vpop.f32.mrf.mxu0
    %3520 = vdwg.mxu0
    %v3521 = vadd.f32 %v2191, %v3515
    %v3522 = vadd.f32 %v2192, %v3517
    %s3523 = scalar_lea.vmem %s7, 2
    %v3524 = vld [vmem:[%s3523] sm:$0x3]
    %v3525 = vmul.f32 %v3521, %v3521
    %v3526 = vmul.f32 %v3522, %v3522
    %v3527 = vadd.f32 %v3525, %v3526
    %3528 = vadd.xlane.f32.xlu0 %v3527
    %v3529 = vpop.xlane.xlu0 %3528
    %v3530 = vmul.f32 %v3529, %v126
    %v3531 = vadd.f32 %v3530, 1e-06
    %v3532 = vrsqrt.pop %v3531
    %v3533 = vmul.f32 %v3521, %v3532
    %v3534 = vmul.f32 %v3522, %v3532
    %v3536 = vlaneseq
    %v3537 = vshrl.u32 %v3536, 7
    %v3538 = vsub.s32 0, %v3537
    %v3539 = vrot.slane %v3524, %v3538
    %v3540 = vlaneseq
    %v3541 = vshrl.u32 %v3540, 7
    %v3542 = vsub.s32 1, %v3541
    %v3543 = vrot.slane %v3524, %v3542
    %v3546 = vmul.f32 %v3533, %v3539
    %v3547 = vmul.f32 %v3534, %v3543
    %v3548 = vpack.c.bf16 %v3546, %v3546
    %v3549 = vpack.c.bf16 %v3547, %v3547
    %s3550 = scalar_lea.vmem [#allocation7], 512
    %v3551 = vld [vmem:[%s3550] sm:$0xff]
    %v3552 = vld [vmem:[%s3550 + $0x8] sm:$0xff]
    %v3553 = vld [vmem:[%s3550 + $0x10] sm:$0xff]
    %v3554 = vld [vmem:[%s3550 + $0x18] sm:$0xff]
    %v3555 = vld [vmem:[%s3550 + $0x20] sm:$0xff]
    %v3556 = vld [vmem:[%s3550 + $0x28] sm:$0xff]
    %v3557 = vld [vmem:[%s3550 + $0x30] sm:$0xff]
    %v3558 = vld [vmem:[%s3550 + $0x38] sm:$0xff]
    %v3559 = vld [vmem:[%s3550 + $0x40] sm:$0xff]
    %v3560 = vld [vmem:[%s3550 + $0x48] sm:$0xff]
    %v3561 = vld [vmem:[%s3550 + $0x50] sm:$0xff]
    %v3562 = vld [vmem:[%s3550 + $0x58] sm:$0xff]
    %v3563 = vld [vmem:[%s3550 + $0x60] sm:$0xff]
    %v3564 = vld [vmem:[%s3550 + $0x68] sm:$0xff]
    %v3565 = vld [vmem:[%s3550 + $0x70] sm:$0xff]
    %v3566 = vld [vmem:[%s3550 + $0x78] sm:$0xff]
    %v3567 = vld [vmem:[%s3550 + $0x80] sm:$0xff]
    %v3568 = vld [vmem:[%s3550 + $0x88] sm:$0xff]
    %v3569 = vld [vmem:[%s3550 + $0x90] sm:$0xff]
    %v3570 = vld [vmem:[%s3550 + $0x98] sm:$0xff]
    %v3571 = vld [vmem:[%s3550 + $0xa0] sm:$0xff]
    %v3572 = vld [vmem:[%s3550 + $0xa8] sm:$0xff]
    %v3573 = vld [vmem:[%s3550 + $0xb0] sm:$0xff]
    %v3574 = vld [vmem:[%s3550 + $0xb8] sm:$0xff]
    %v3575 = vld [vmem:[%s3550 + $0xc0] sm:$0xff]
    %v3576 = vld [vmem:[%s3550 + $0xc8] sm:$0xff]
    %v3577 = vld [vmem:[%s3550 + $0xd0] sm:$0xff]
    %v3578 = vld [vmem:[%s3550 + $0xd8] sm:$0xff]
    %v3579 = vld [vmem:[%s3550 + $0xe0] sm:$0xff]
    %v3580 = vld [vmem:[%s3550 + $0xe8] sm:$0xff]
    %v3581 = vld [vmem:[%s3550 + $0xf0] sm:$0xff]
    %v3582 = vld [vmem:[%s3550 + $0xf8] sm:$0xff]
    %v3583 = vld [vmem:[%s3550 + $0x100] sm:$0xff]
    %v3584 = vld [vmem:[%s3550 + $0x108] sm:$0xff]
    %v3585 = vld [vmem:[%s3550 + $0x110] sm:$0xff]
    %v3586 = vld [vmem:[%s3550 + $0x118] sm:$0xff]
    %v3587 = vld [vmem:[%s3550 + $0x120] sm:$0xff]
    %v3588 = vld [vmem:[%s3550 + $0x128] sm:$0xff]
    %v3589 = vld [vmem:[%s3550 + $0x130] sm:$0xff]
    %v3590 = vld [vmem:[%s3550 + $0x138] sm:$0xff]
    %v3591 = vld [vmem:[%s3550 + $0x140] sm:$0xff]
    %v3592 = vld [vmem:[%s3550 + $0x148] sm:$0xff]
    %v3593 = vld [vmem:[%s3550 + $0x150] sm:$0xff]
    %v3594 = vld [vmem:[%s3550 + $0x158] sm:$0xff]
    %v3595 = vld [vmem:[%s3550 + $0x160] sm:$0xff]
    %v3596 = vld [vmem:[%s3550 + $0x168] sm:$0xff]
    %v3597 = vld [vmem:[%s3550 + $0x170] sm:$0xff]
    %v3598 = vld [vmem:[%s3550 + $0x178] sm:$0xff]
    %v3599 = vld [vmem:[%s3550 + $0x180] sm:$0xff]
    %v3600 = vld [vmem:[%s3550 + $0x188] sm:$0xff]
    %v3601 = vld [vmem:[%s3550 + $0x190] sm:$0xff]
    %v3602 = vld [vmem:[%s3550 + $0x198] sm:$0xff]
    %v3603 = vld [vmem:[%s3550 + $0x1a0] sm:$0xff]
    %v3604 = vld [vmem:[%s3550 + $0x1a8] sm:$0xff]
    %v3605 = vld [vmem:[%s3550 + $0x1b0] sm:$0xff]
    %v3606 = vld [vmem:[%s3550 + $0x1b8] sm:$0xff]
    %v3607 = vld [vmem:[%s3550 + $0x1c0] sm:$0xff]
    %v3608 = vld [vmem:[%s3550 + $0x1c8] sm:$0xff]
    %v3609 = vld [vmem:[%s3550 + $0x1d0] sm:$0xff]
    %v3610 = vld [vmem:[%s3550 + $0x1d8] sm:$0xff]
    %v3611 = vld [vmem:[%s3550 + $0x1e0] sm:$0xff]
    %v3612 = vld [vmem:[%s3550 + $0x1e8] sm:$0xff]
    %v3613 = vld [vmem:[%s3550 + $0x1f0] sm:$0xff]
    %v3614 = vld [vmem:[%s3550 + $0x1f8] sm:$0xff]
    %v3679 = vunpack.c.l.b16 %v3551
    %v3680 = vunpack.c.h.b16 %v3551
    %v3681 = vunpack.c.l.b16 %v3552
    %v3682 = vunpack.c.h.b16 %v3552
    %v3683 = vunpack.c.l.b16 %v3553
    %v3684 = vunpack.c.h.b16 %v3553
    %v3685 = vunpack.c.l.b16 %v3554
    %v3686 = vunpack.c.h.b16 %v3554
    %v3687 = vunpack.c.l.b16 %v3555
    %v3688 = vunpack.c.h.b16 %v3555
    %v3689 = vunpack.c.l.b16 %v3556
    %v3690 = vunpack.c.h.b16 %v3556
    %v3691 = vunpack.c.l.b16 %v3557
    %v3692 = vunpack.c.h.b16 %v3557
    %v3693 = vunpack.c.l.b16 %v3558
    %v3694 = vunpack.c.h.b16 %v3558
    %v3695 = vunpack.c.l.b16 %v3559
    %v3696 = vunpack.c.h.b16 %v3559
    %v3697 = vunpack.c.l.b16 %v3560
    %v3698 = vunpack.c.h.b16 %v3560
    %v3699 = vunpack.c.l.b16 %v3561
    %v3700 = vunpack.c.h.b16 %v3561
    %v3701 = vunpack.c.l.b16 %v3562
    %v3702 = vunpack.c.h.b16 %v3562
    %v3703 = vunpack.c.l.b16 %v3563
    %v3704 = vunpack.c.h.b16 %v3563
    %v3705 = vunpack.c.l.b16 %v3564
    %v3706 = vunpack.c.h.b16 %v3564
    %v3707 = vunpack.c.l.b16 %v3565
    %v3708 = vunpack.c.h.b16 %v3565
    %v3709 = vunpack.c.l.b16 %v3566
    %v3710 = vunpack.c.h.b16 %v3566
    %v3711 = vunpack.c.l.b16 %v3567
    %v3712 = vunpack.c.h.b16 %v3567
    %v3713 = vunpack.c.l.b16 %v3568
    %v3714 = vunpack.c.h.b16 %v3568
    %v3715 = vunpack.c.l.b16 %v3569
    %v3716 = vunpack.c.h.b16 %v3569
    %v3717 = vunpack.c.l.b16 %v3570
    %v3718 = vunpack.c.h.b16 %v3570
    %v3719 = vunpack.c.l.b16 %v3571
    %v3720 = vunpack.c.h.b16 %v3571
    %v3721 = vunpack.c.l.b16 %v3572
    %v3722 = vunpack.c.h.b16 %v3572
    %v3723 = vunpack.c.l.b16 %v3573
    %v3724 = vunpack.c.h.b16 %v3573
    %v3725 = vunpack.c.l.b16 %v3574
    %v3726 = vunpack.c.h.b16 %v3574
    %v3727 = vunpack.c.l.b16 %v3575
    %v3728 = vunpack.c.h.b16 %v3575
    %v3729 = vunpack.c.l.b16 %v3576
    %v3730 = vunpack.c.h.b16 %v3576
    %v3731 = vunpack.c.l.b16 %v3577
    %v3732 = vunpack.c.h.b16 %v3577
    %v3733 = vunpack.c.l.b16 %v3578
    %v3734 = vunpack.c.h.b16 %v3578
    %v3735 = vunpack.c.l.b16 %v3579
    %v3736 = vunpack.c.h.b16 %v3579
    %v3737 = vunpack.c.l.b16 %v3580
    %v3738 = vunpack.c.h.b16 %v3580
    %v3739 = vunpack.c.l.b16 %v3581
    %v3740 = vunpack.c.h.b16 %v3581
    %v3741 = vunpack.c.l.b16 %v3582
    %v3742 = vunpack.c.h.b16 %v3582
    %v3743 = vunpack.c.l.b16 %v3583
    %v3744 = vunpack.c.h.b16 %v3583
    %v3745 = vunpack.c.l.b16 %v3584
    %v3746 = vunpack.c.h.b16 %v3584
    %v3747 = vunpack.c.l.b16 %v3585
    %v3748 = vunpack.c.h.b16 %v3585
    %v3749 = vunpack.c.l.b16 %v3586
    %v3750 = vunpack.c.h.b16 %v3586
    %v3751 = vunpack.c.l.b16 %v3587
    %v3752 = vunpack.c.h.b16 %v3587
    %v3753 = vunpack.c.l.b16 %v3588
    %v3754 = vunpack.c.h.b16 %v3588
    %v3755 = vunpack.c.l.b16 %v3589
    %v3756 = vunpack.c.h.b16 %v3589
    %v3757 = vunpack.c.l.b16 %v3590
    %v3758 = vunpack.c.h.b16 %v3590
    %v3759 = vunpack.c.l.b16 %v3591
    %v3760 = vunpack.c.h.b16 %v3591
    %v3761 = vunpack.c.l.b16 %v3592
    %v3762 = vunpack.c.h.b16 %v3592
    %v3763 = vunpack.c.l.b16 %v3593
    %v3764 = vunpack.c.h.b16 %v3593
    %v3765 = vunpack.c.l.b16 %v3594
    %v3766 = vunpack.c.h.b16 %v3594
    %v3767 = vunpack.c.l.b16 %v3595
    %v3768 = vunpack.c.h.b16 %v3595
    %v3769 = vunpack.c.l.b16 %v3596
    %v3770 = vunpack.c.h.b16 %v3596
    %v3771 = vunpack.c.l.b16 %v3597
    %v3772 = vunpack.c.h.b16 %v3597
    %v3773 = vunpack.c.l.b16 %v3598
    %v3774 = vunpack.c.h.b16 %v3598
    %v3775 = vunpack.c.l.b16 %v3599
    %v3776 = vunpack.c.h.b16 %v3599
    %v3777 = vunpack.c.l.b16 %v3600
    %v3778 = vunpack.c.h.b16 %v3600
    %v3779 = vunpack.c.l.b16 %v3601
    %v3780 = vunpack.c.h.b16 %v3601
    %v3781 = vunpack.c.l.b16 %v3602
    %v3782 = vunpack.c.h.b16 %v3602
    %v3783 = vunpack.c.l.b16 %v3603
    %v3784 = vunpack.c.h.b16 %v3603
    %v3785 = vunpack.c.l.b16 %v3604
    %v3786 = vunpack.c.h.b16 %v3604
    %v3787 = vunpack.c.l.b16 %v3605
    %v3788 = vunpack.c.h.b16 %v3605
    %v3789 = vunpack.c.l.b16 %v3606
    %v3790 = vunpack.c.h.b16 %v3606
    %v3791 = vunpack.c.l.b16 %v3607
    %v3792 = vunpack.c.h.b16 %v3607
    %v3793 = vunpack.c.l.b16 %v3608
    %v3794 = vunpack.c.h.b16 %v3608
    %v3795 = vunpack.c.l.b16 %v3609
    %v3796 = vunpack.c.h.b16 %v3609
    %v3797 = vunpack.c.l.b16 %v3610
    %v3798 = vunpack.c.h.b16 %v3610
    %v3799 = vunpack.c.l.b16 %v3611
    %v3800 = vunpack.c.h.b16 %v3611
    %v3801 = vunpack.c.l.b16 %v3612
    %v3802 = vunpack.c.h.b16 %v3612
    %v3803 = vunpack.c.l.b16 %v3613
    %v3804 = vunpack.c.h.b16 %v3613
    %v3805 = vunpack.c.l.b16 %v3614
    %v3806 = vunpack.c.h.b16 %v3614
    %v3807 = vpack.c.b16 %v3683, %v3679
    %v3808 = vpack.c.b16 %v3684, %v3680
    %v3809 = vpack.c.b16 %v3685, %v3681
    %v3810 = vpack.c.b16 %v3686, %v3682
    %v3811 = vpack.c.b16 %v3691, %v3687
    %v3812 = vpack.c.b16 %v3692, %v3688
    %v3813 = vpack.c.b16 %v3693, %v3689
    %v3814 = vpack.c.b16 %v3694, %v3690
    %v3815 = vpack.c.b16 %v3699, %v3695
    %v3816 = vpack.c.b16 %v3700, %v3696
    %v3817 = vpack.c.b16 %v3701, %v3697
    %v3818 = vpack.c.b16 %v3702, %v3698
    %v3819 = vpack.c.b16 %v3707, %v3703
    %v3820 = vpack.c.b16 %v3708, %v3704
    %v3821 = vpack.c.b16 %v3709, %v3705
    %v3822 = vpack.c.b16 %v3710, %v3706
    %v3823 = vpack.c.b16 %v3715, %v3711
    %v3824 = vpack.c.b16 %v3716, %v3712
    %v3825 = vpack.c.b16 %v3717, %v3713
    %v3826 = vpack.c.b16 %v3718, %v3714
    %v3827 = vpack.c.b16 %v3723, %v3719
    %v3828 = vpack.c.b16 %v3724, %v3720
    %v3829 = vpack.c.b16 %v3725, %v3721
    %v3830 = vpack.c.b16 %v3726, %v3722
    %v3831 = vpack.c.b16 %v3731, %v3727
    %v3832 = vpack.c.b16 %v3732, %v3728
    %v3833 = vpack.c.b16 %v3733, %v3729
    %v3834 = vpack.c.b16 %v3734, %v3730
    %v3835 = vpack.c.b16 %v3739, %v3735
    %v3836 = vpack.c.b16 %v3740, %v3736
    %v3837 = vpack.c.b16 %v3741, %v3737
    %v3838 = vpack.c.b16 %v3742, %v3738
    %v3839 = vpack.c.b16 %v3747, %v3743
    %v3840 = vpack.c.b16 %v3748, %v3744
    %v3841 = vpack.c.b16 %v3749, %v3745
    %v3842 = vpack.c.b16 %v3750, %v3746
    %v3843 = vpack.c.b16 %v3755, %v3751
    %v3844 = vpack.c.b16 %v3756, %v3752
    %v3845 = vpack.c.b16 %v3757, %v3753
    %v3846 = vpack.c.b16 %v3758, %v3754
    %v3847 = vpack.c.b16 %v3763, %v3759
    %v3848 = vpack.c.b16 %v3764, %v3760
    %v3849 = vpack.c.b16 %v3765, %v3761
    %v3850 = vpack.c.b16 %v3766, %v3762
    %v3851 = vpack.c.b16 %v3771, %v3767
    %v3852 = vpack.c.b16 %v3772, %v3768
    %v3853 = vpack.c.b16 %v3773, %v3769
    %v3854 = vpack.c.b16 %v3774, %v3770
    %v3855 = vpack.c.b16 %v3779, %v3775
    %v3856 = vpack.c.b16 %v3780, %v3776
    %v3857 = vpack.c.b16 %v3781, %v3777
    %v3858 = vpack.c.b16 %v3782, %v3778
    %v3859 = vpack.c.b16 %v3787, %v3783
    %v3860 = vpack.c.b16 %v3788, %v3784
    %v3861 = vpack.c.b16 %v3789, %v3785
    %v3862 = vpack.c.b16 %v3790, %v3786
    %v3863 = vpack.c.b16 %v3795, %v3791
    %v3864 = vpack.c.b16 %v3796, %v3792
    %v3865 = vpack.c.b16 %v3797, %v3793
    %v3866 = vpack.c.b16 %v3798, %v3794
    %v3867 = vpack.c.b16 %v3803, %v3799
    %v3868 = vpack.c.b16 %v3804, %v3800
    %v3869 = vpack.c.b16 %v3805, %v3801
    %v3870 = vpack.c.b16 %v3806, %v3802
    %3935 = vmatprep.subr.bf16.mxu0 %v3836
    %3936 = vmatpush1.bf16.msra.mxu0 %v3835
    %3937 = vmatprep.subr.bf16.mxu0 %v3832
    %3938 = vmatpush1.bf16.msra.mxu0 %v3831
    %3939 = vmatprep.subr.bf16.mxu0 %v3828
    %3940 = vmatpush1.bf16.msra.mxu0 %v3827
    %3941 = vmatprep.subr.bf16.mxu0 %v3824
    %3942 = vmatpush1.bf16.msra.mxu0 %v3823
    %3943 = vmatprep.subr.bf16.mxu0 %v3820
    %3944 = vmatpush1.bf16.msra.mxu0 %v3819
    %3945 = vmatprep.subr.bf16.mxu0 %v3816
    %3946 = vmatpush1.bf16.msra.mxu0 %v3815
    %3947 = vmatprep.subr.bf16.mxu0 %v3812
    %3948 = vmatpush1.bf16.msra.mxu0 %v3811
    %3949 = vmatprep.subr.bf16.mxu0 %v3808
    %3950 = vmatpush1.bf16.msra.mxu0 %v3807
    %3951 = vmatprep.subr.bf16.mxu0 %v3868
    %3952 = vmatpush2.bf16.msra.mxu0 %v3867
    %3953 = vmatprep.subr.bf16.mxu0 %v3864
    %3954 = vmatpush2.bf16.msra.mxu0 %v3863
    %3955 = vmatprep.subr.bf16.mxu0 %v3860
    %3956 = vmatpush2.bf16.msra.mxu0 %v3859
    %3957 = vmatprep.subr.bf16.mxu0 %v3856
    %3958 = vmatpush2.bf16.msra.mxu0 %v3855
    %3959 = vmatprep.subr.bf16.mxu0 %v3852
    %3960 = vmatpush2.bf16.msra.mxu0 %v3851
    %3961 = vmatprep.subr.bf16.mxu0 %v3848
    %3962 = vmatpush2.bf16.msra.mxu0 %v3847
    %3963 = vmatprep.subr.bf16.mxu0 %v3844
    %3964 = vmatpush2.bf16.msra.mxu0 %v3843
    %3965 = vmatprep.subr.bf16.mxu0 %v3840
    %3966 = vmatpush2.bf16.msra.mxu0 %v3839
    %3967 = vmatprep.mubr.bf16.mxu0 %v3549
    %3968 = vmatmul.mubr.bf16.gmra.mxu0 %v3548
    %v3969 = vpop.f32.mrf.mxu0
    %v3970 = vadd.f32 0.0, %v3969
    %v3971 = vpop.f32.mrf.mxu0
    %v3972 = vadd.f32 0.0, %v3971
    %v3973 = vpop.f32.mrf.mxu0
    %v3974 = vpop.f32.mrf.mxu0
    %3975 = vdwg.mxu0
    %3976 = vmatprep.subr.bf16.mxu0 %v3838
    %3977 = vmatpush1.bf16.msra.mxu0 %v3837
    %3978 = vmatprep.subr.bf16.mxu0 %v3834
    %3979 = vmatpush1.bf16.msra.mxu0 %v3833
    %3980 = vmatprep.subr.bf16.mxu0 %v3830
    %3981 = vmatpush1.bf16.msra.mxu0 %v3829
    %3982 = vmatprep.subr.bf16.mxu0 %v3826
    %3983 = vmatpush1.bf16.msra.mxu0 %v3825
    %3984 = vmatprep.subr.bf16.mxu0 %v3822
    %3985 = vmatpush1.bf16.msra.mxu0 %v3821
    %3986 = vmatprep.subr.bf16.mxu0 %v3818
    %3987 = vmatpush1.bf16.msra.mxu0 %v3817
    %3988 = vmatprep.subr.bf16.mxu0 %v3814
    %3989 = vmatpush1.bf16.msra.mxu0 %v3813
    %3990 = vmatprep.subr.bf16.mxu0 %v3810
    %3991 = vmatpush1.bf16.msra.mxu0 %v3809
    %3992 = vmatprep.subr.bf16.mxu0 %v3870
    %3993 = vmatpush2.bf16.msra.mxu0 %v3869
    %3994 = vmatprep.subr.bf16.mxu0 %v3866
    %3995 = vmatpush2.bf16.msra.mxu0 %v3865
    %3996 = vmatprep.subr.bf16.mxu0 %v3862
    %3997 = vmatpush2.bf16.msra.mxu0 %v3861
    %3998 = vmatprep.subr.bf16.mxu0 %v3858
    %3999 = vmatpush2.bf16.msra.mxu0 %v3857
    %4000 = vmatprep.subr.bf16.mxu0 %v3854
    %4001 = vmatpush2.bf16.msra.mxu0 %v3853
    %4002 = vmatprep.subr.bf16.mxu0 %v3850
    %4003 = vmatpush2.bf16.msra.mxu0 %v3849
    %4004 = vmatprep.subr.bf16.mxu0 %v3846
    %4005 = vmatpush2.bf16.msra.mxu0 %v3845
    %4006 = vmatprep.subr.bf16.mxu0 %v3842
    %4007 = vmatpush2.bf16.msra.mxu0 %v3841
    %4008 = vmatprep.mubr.bf16.mxu0 %v3549
    %4009 = vmatmul.mubr.bf16.gmra.mxu0 %v3548
    %v4010 = vpop.f32.mrf.mxu0
    %v4011 = vadd.f32 0.0, %v4010
    %v4012 = vpop.f32.mrf.mxu0
    %v4013 = vadd.f32 0.0, %v4012
    %v4014 = vpop.f32.mrf.mxu0
    %v4015 = vpop.f32.mrf.mxu0
    %4016 = vdwg.mxu0
    %v4017 = vxor.u32 %v3970, 2147483648
    %v4018 = vxor.u32 %v3972, 2147483648
    %v4019 = vmul.f32 %v4017, 1.442695
    %v4020 = vpow.pop %v4019
    %v4021 = vmul.f32 %v4018, 1.442695
    %v4022 = vpow.pop %v4021
    %v4023 = vadd.f32 %v4020, 1.0
    %v4024 = vadd.f32 %v4022, 1.0
    %v4025 = vrcp.pop %v4023
    %v4026 = vmul.f32 1.0, %v4025
    %v4027 = vrcp.pop %v4024
    %v4028 = vmul.f32 1.0, %v4027
    %v4029 = vmul.f32 %v3970, %v4026
    %v4030 = vmul.f32 %v3972, %v4028
    %v4031 = vmul.f32 %v4029, %v4011
    %v4032 = vmul.f32 %v4030, %v4013
    %v4033 = vpack.c.bf16 %v4031, %v4031
    %v4034 = vpack.c.bf16 %v4032, %v4032
    %s4035 = scalar_lea.vmem [#allocation8], 256
    %v4036 = vld [vmem:[%s4035] sm:$0xff]
    %v4037 = vld [vmem:[%s4035 + $0x8] sm:$0xff]
    %v4038 = vld [vmem:[%s4035 + $0x10] sm:$0xff]
    %v4039 = vld [vmem:[%s4035 + $0x18] sm:$0xff]
    %v4040 = vld [vmem:[%s4035 + $0x20] sm:$0xff]
    %v4041 = vld [vmem:[%s4035 + $0x28] sm:$0xff]
    %v4042 = vld [vmem:[%s4035 + $0x30] sm:$0xff]
    %v4043 = vld [vmem:[%s4035 + $0x38] sm:$0xff]
    %v4044 = vld [vmem:[%s4035 + $0x40] sm:$0xff]
    %v4045 = vld [vmem:[%s4035 + $0x48] sm:$0xff]
    %v4046 = vld [vmem:[%s4035 + $0x50] sm:$0xff]
    %v4047 = vld [vmem:[%s4035 + $0x58] sm:$0xff]
    %v4048 = vld [vmem:[%s4035 + $0x60] sm:$0xff]
    %v4049 = vld [vmem:[%s4035 + $0x68] sm:$0xff]
    %v4050 = vld [vmem:[%s4035 + $0x70] sm:$0xff]
    %v4051 = vld [vmem:[%s4035 + $0x78] sm:$0xff]
    %v4052 = vld [vmem:[%s4035 + $0x80] sm:$0xff]
    %v4053 = vld [vmem:[%s4035 + $0x88] sm:$0xff]
    %v4054 = vld [vmem:[%s4035 + $0x90] sm:$0xff]
    %v4055 = vld [vmem:[%s4035 + $0x98] sm:$0xff]
    %v4056 = vld [vmem:[%s4035 + $0xa0] sm:$0xff]
    %v4057 = vld [vmem:[%s4035 + $0xa8] sm:$0xff]
    %v4058 = vld [vmem:[%s4035 + $0xb0] sm:$0xff]
    %v4059 = vld [vmem:[%s4035 + $0xb8] sm:$0xff]
    %v4060 = vld [vmem:[%s4035 + $0xc0] sm:$0xff]
    %v4061 = vld [vmem:[%s4035 + $0xc8] sm:$0xff]
    %v4062 = vld [vmem:[%s4035 + $0xd0] sm:$0xff]
    %v4063 = vld [vmem:[%s4035 + $0xd8] sm:$0xff]
    %v4064 = vld [vmem:[%s4035 + $0xe0] sm:$0xff]
    %v4065 = vld [vmem:[%s4035 + $0xe8] sm:$0xff]
    %v4066 = vld [vmem:[%s4035 + $0xf0] sm:$0xff]
    %v4067 = vld [vmem:[%s4035 + $0xf8] sm:$0xff]
    %v4100 = vunpack.c.l.b16 %v4036
    %v4101 = vunpack.c.h.b16 %v4036
    %v4102 = vunpack.c.l.b16 %v4037
    %v4103 = vunpack.c.h.b16 %v4037
    %v4104 = vunpack.c.l.b16 %v4038
    %v4105 = vunpack.c.h.b16 %v4038
    %v4106 = vunpack.c.l.b16 %v4039
    %v4107 = vunpack.c.h.b16 %v4039
    %v4108 = vunpack.c.l.b16 %v4040
    %v4109 = vunpack.c.h.b16 %v4040
    %v4110 = vunpack.c.l.b16 %v4041
    %v4111 = vunpack.c.h.b16 %v4041
    %v4112 = vunpack.c.l.b16 %v4042
    %v4113 = vunpack.c.h.b16 %v4042
    %v4114 = vunpack.c.l.b16 %v4043
    %v4115 = vunpack.c.h.b16 %v4043
    %v4116 = vunpack.c.l.b16 %v4044
    %v4117 = vunpack.c.h.b16 %v4044
    %v4118 = vunpack.c.l.b16 %v4045
    %v4119 = vunpack.c.h.b16 %v4045
    %v4120 = vunpack.c.l.b16 %v4046
    %v4121 = vunpack.c.h.b16 %v4046
    %v4122 = vunpack.c.l.b16 %v4047
    %v4123 = vunpack.c.h.b16 %v4047
    %v4124 = vunpack.c.l.b16 %v4048
    %v4125 = vunpack.c.h.b16 %v4048
    %v4126 = vunpack.c.l.b16 %v4049
    %v4127 = vunpack.c.h.b16 %v4049
    %v4128 = vunpack.c.l.b16 %v4050
    %v4129 = vunpack.c.h.b16 %v4050
    %v4130 = vunpack.c.l.b16 %v4051
    %v4131 = vunpack.c.h.b16 %v4051
    %v4132 = vunpack.c.l.b16 %v4052
    %v4133 = vunpack.c.h.b16 %v4052
    %v4134 = vunpack.c.l.b16 %v4053
    %v4135 = vunpack.c.h.b16 %v4053
    %v4136 = vunpack.c.l.b16 %v4054
    %v4137 = vunpack.c.h.b16 %v4054
    %v4138 = vunpack.c.l.b16 %v4055
    %v4139 = vunpack.c.h.b16 %v4055
    %v4140 = vunpack.c.l.b16 %v4056
    %v4141 = vunpack.c.h.b16 %v4056
    %v4142 = vunpack.c.l.b16 %v4057
    %v4143 = vunpack.c.h.b16 %v4057
    %v4144 = vunpack.c.l.b16 %v4058
    %v4145 = vunpack.c.h.b16 %v4058
    %v4146 = vunpack.c.l.b16 %v4059
    %v4147 = vunpack.c.h.b16 %v4059
    %v4148 = vunpack.c.l.b16 %v4060
    %v4149 = vunpack.c.h.b16 %v4060
    %v4150 = vunpack.c.l.b16 %v4061
    %v4151 = vunpack.c.h.b16 %v4061
    %v4152 = vunpack.c.l.b16 %v4062
    %v4153 = vunpack.c.h.b16 %v4062
    %v4154 = vunpack.c.l.b16 %v4063
    %v4155 = vunpack.c.h.b16 %v4063
    %v4156 = vunpack.c.l.b16 %v4064
    %v4157 = vunpack.c.h.b16 %v4064
    %v4158 = vunpack.c.l.b16 %v4065
    %v4159 = vunpack.c.h.b16 %v4065
    %v4160 = vunpack.c.l.b16 %v4066
    %v4161 = vunpack.c.h.b16 %v4066
    %v4162 = vunpack.c.l.b16 %v4067
    %v4163 = vunpack.c.h.b16 %v4067
    %v4164 = vpack.c.b16 %v4102, %v4100
    %v4165 = vpack.c.b16 %v4103, %v4101
    %v4166 = vpack.c.b16 %v4106, %v4104
    %v4167 = vpack.c.b16 %v4107, %v4105
    %v4168 = vpack.c.b16 %v4110, %v4108
    %v4169 = vpack.c.b16 %v4111, %v4109
    %v4170 = vpack.c.b16 %v4114, %v4112
    %v4171 = vpack.c.b16 %v4115, %v4113
    %v4172 = vpack.c.b16 %v4118, %v4116
    %v4173 = vpack.c.b16 %v4119, %v4117
    %v4174 = vpack.c.b16 %v4122, %v4120
    %v4175 = vpack.c.b16 %v4123, %v4121
    %v4176 = vpack.c.b16 %v4126, %v4124
    %v4177 = vpack.c.b16 %v4127, %v4125
    %v4178 = vpack.c.b16 %v4130, %v4128
    %v4179 = vpack.c.b16 %v4131, %v4129
    %v4180 = vpack.c.b16 %v4134, %v4132
    %v4181 = vpack.c.b16 %v4135, %v4133
    %v4182 = vpack.c.b16 %v4138, %v4136
    %v4183 = vpack.c.b16 %v4139, %v4137
    %v4184 = vpack.c.b16 %v4142, %v4140
    %v4185 = vpack.c.b16 %v4143, %v4141
    %v4186 = vpack.c.b16 %v4146, %v4144
    %v4187 = vpack.c.b16 %v4147, %v4145
    %v4188 = vpack.c.b16 %v4150, %v4148
    %v4189 = vpack.c.b16 %v4151, %v4149
    %v4190 = vpack.c.b16 %v4154, %v4152
    %v4191 = vpack.c.b16 %v4155, %v4153
    %v4192 = vpack.c.b16 %v4158, %v4156
    %v4193 = vpack.c.b16 %v4159, %v4157
    %v4194 = vpack.c.b16 %v4162, %v4160
    %v4195 = vpack.c.b16 %v4163, %v4161
    %4228 = vmatprep.subr.bf16.mxu0 %v4179
    %4229 = vmatpush1.bf16.msra.mxu0 %v4178
    %4230 = vmatprep.subr.bf16.mxu0 %v4177
    %4231 = vmatpush1.bf16.msra.mxu0 %v4176
    %4232 = vmatprep.subr.bf16.mxu0 %v4175
    %4233 = vmatpush1.bf16.msra.mxu0 %v4174
    %4234 = vmatprep.subr.bf16.mxu0 %v4173
    %4235 = vmatpush1.bf16.msra.mxu0 %v4172
    %4236 = vmatprep.subr.bf16.mxu0 %v4171
    %4237 = vmatpush1.bf16.msra.mxu0 %v4170
    %4238 = vmatprep.subr.bf16.mxu0 %v4169
    %4239 = vmatpush1.bf16.msra.mxu0 %v4168
    %4240 = vmatprep.subr.bf16.mxu0 %v4167
    %4241 = vmatpush1.bf16.msra.mxu0 %v4166
    %4242 = vmatprep.subr.bf16.mxu0 %v4165
    %4243 = vmatpush1.bf16.msra.mxu0 %v4164
    %4244 = vmatprep.subr.bf16.mxu0 %v4195
    %4245 = vmatpush2.bf16.msra.mxu0 %v4194
    %4246 = vmatprep.subr.bf16.mxu0 %v4193
    %4247 = vmatpush2.bf16.msra.mxu0 %v4192
    %4248 = vmatprep.subr.bf16.mxu0 %v4191
    %4249 = vmatpush2.bf16.msra.mxu0 %v4190
    %4250 = vmatprep.subr.bf16.mxu0 %v4189
    %4251 = vmatpush2.bf16.msra.mxu0 %v4188
    %4252 = vmatprep.subr.bf16.mxu0 %v4187
    %4253 = vmatpush2.bf16.msra.mxu0 %v4186
    %4254 = vmatprep.subr.bf16.mxu0 %v4185
    %4255 = vmatpush2.bf16.msra.mxu0 %v4184
    %4256 = vmatprep.subr.bf16.mxu0 %v4183
    %4257 = vmatpush2.bf16.msra.mxu0 %v4182
    %4258 = vmatprep.subr.bf16.mxu0 %v4181
    %4259 = vmatpush2.bf16.msra.mxu0 %v4180
    %4260 = vmatprep.mubr.bf16.mxu0 %v4034
    %4261 = vmatmul.mubr.bf16.gmra.mxu0 %v4033
    %v4262 = vpop.f32.mrf.mxu0
    %v4263 = vadd.f32 0.0, %v4262
    %v4264 = vpop.f32.mrf.mxu0
    %v4265 = vadd.f32 0.0, %v4264
    %v4266 = vpop.f32.mrf.mxu0
    %v4267 = vpop.f32.mrf.mxu0
    %4268 = vdwg.mxu0
    %v4269 = vadd.f32 %v3521, %v4263
    %v4270 = vadd.f32 %v3522, %v4265
    %v4271 = vld [vmem:[%s10] sm:$0x3]
    %v4272 = vmul.f32 %v4269, %v4269
    %v4273 = vmul.f32 %v4270, %v4270
    %v4274 = vadd.f32 %v4272, %v4273
    %4275 = vadd.xlane.f32.xlu0 %v4274
    %v4276 = vpop.xlane.xlu0 %4275
    %v4277 = vmul.f32 %v4276, %v126
    %v4278 = vadd.f32 %v4277, 1e-06
    %v4279 = vrsqrt.pop %v4278
    %v4280 = vmul.f32 %v4269, %v4279
    %v4281 = vmul.f32 %v4270, %v4279
    %v4283 = vlaneseq
    %v4284 = vshrl.u32 %v4283, 7
    %v4285 = vsub.s32 0, %v4284
    %v4286 = vrot.slane %v4271, %v4285
    %v4287 = vlaneseq
    %v4288 = vshrl.u32 %v4287, 7
    %v4289 = vsub.s32 1, %v4288
    %v4290 = vrot.slane %v4271, %v4289
    %v4293 = vmul.f32 %v4280, %v4286
    %v4294 = vmul.f32 %v4281, %v4290
    %v4295 = vpack.c.bf16 %v4293, %v4293
    %v4296 = vpack.c.bf16 %v4294, %v4294
    %v4297 = vld [vmem:[#allocation10] sm:$0xff]
    %v4298 = vld [vmem:[#allocation10 + $0x8] sm:$0xff]
    %v4299 = vld [vmem:[#allocation10 + $0x10] sm:$0xff]
    %v4300 = vld [vmem:[#allocation10 + $0x18] sm:$0xff]
    %v4301 = vld [vmem:[#allocation10 + $0x20] sm:$0xff]
    %v4302 = vld [vmem:[#allocation10 + $0x28] sm:$0xff]
    %v4303 = vld [vmem:[#allocation10 + $0x30] sm:$0xff]
    %v4304 = vld [vmem:[#allocation10 + $0x38] sm:$0xff]
    %v4305 = vld [vmem:[#allocation10 + $0x40] sm:$0xff]
    %v4306 = vld [vmem:[#allocation10 + $0x48] sm:$0xff]
    %v4307 = vld [vmem:[#allocation10 + $0x50] sm:$0xff]
    %v4308 = vld [vmem:[#allocation10 + $0x58] sm:$0xff]
    %v4309 = vld [vmem:[#allocation10 + $0x60] sm:$0xff]
    %v4310 = vld [vmem:[#allocation10 + $0x68] sm:$0xff]
    %v4311 = vld [vmem:[#allocation10 + $0x70] sm:$0xff]
    %v4312 = vld [vmem:[#allocation10 + $0x78] sm:$0xff]
    %v4313 = vld [vmem:[#allocation10 + $0x80] sm:$0xff]
    %v4314 = vld [vmem:[#allocation10 + $0x88] sm:$0xff]
    %v4315 = vld [vmem:[#allocation10 + $0x90] sm:$0xff]
    %v4316 = vld [vmem:[#allocation10 + $0x98] sm:$0xff]
    %v4317 = vld [vmem:[#allocation10 + $0xa0] sm:$0xff]
    %v4318 = vld [vmem:[#allocation10 + $0xa8] sm:$0xff]
    %v4319 = vld [vmem:[#allocation10 + $0xb0] sm:$0xff]
    %v4320 = vld [vmem:[#allocation10 + $0xb8] sm:$0xff]
    %v4321 = vld [vmem:[#allocation10 + $0xc0] sm:$0xff]
    %v4322 = vld [vmem:[#allocation10 + $0xc8] sm:$0xff]
    %v4323 = vld [vmem:[#allocation10 + $0xd0] sm:$0xff]
    %v4324 = vld [vmem:[#allocation10 + $0xd8] sm:$0xff]
    %v4325 = vld [vmem:[#allocation10 + $0xe0] sm:$0xff]
    %v4326 = vld [vmem:[#allocation10 + $0xe8] sm:$0xff]
    %v4327 = vld [vmem:[#allocation10 + $0xf0] sm:$0xff]
    %v4328 = vld [vmem:[#allocation10 + $0xf8] sm:$0xff]
    %v4361 = vunpack.c.l.b16 %v4297
    %v4362 = vunpack.c.h.b16 %v4297
    %v4363 = vunpack.c.l.b16 %v4298
    %v4364 = vunpack.c.h.b16 %v4298
    %v4365 = vunpack.c.l.b16 %v4299
    %v4366 = vunpack.c.h.b16 %v4299
    %v4367 = vunpack.c.l.b16 %v4300
    %v4368 = vunpack.c.h.b16 %v4300
    %v4369 = vunpack.c.l.b16 %v4301
    %v4370 = vunpack.c.h.b16 %v4301
    %v4371 = vunpack.c.l.b16 %v4302
    %v4372 = vunpack.c.h.b16 %v4302
    %v4373 = vunpack.c.l.b16 %v4303
    %v4374 = vunpack.c.h.b16 %v4303
    %v4375 = vunpack.c.l.b16 %v4304
    %v4376 = vunpack.c.h.b16 %v4304
    %v4377 = vunpack.c.l.b16 %v4305
    %v4378 = vunpack.c.h.b16 %v4305
    %v4379 = vunpack.c.l.b16 %v4306
    %v4380 = vunpack.c.h.b16 %v4306
    %v4381 = vunpack.c.l.b16 %v4307
    %v4382 = vunpack.c.h.b16 %v4307
    %v4383 = vunpack.c.l.b16 %v4308
    %v4384 = vunpack.c.h.b16 %v4308
    %v4385 = vunpack.c.l.b16 %v4309
    %v4386 = vunpack.c.h.b16 %v4309
    %v4387 = vunpack.c.l.b16 %v4310
    %v4388 = vunpack.c.h.b16 %v4310
    %v4389 = vunpack.c.l.b16 %v4311
    %v4390 = vunpack.c.h.b16 %v4311
    %v4391 = vunpack.c.l.b16 %v4312
    %v4392 = vunpack.c.h.b16 %v4312
    %v4393 = vunpack.c.l.b16 %v4313
    %v4394 = vunpack.c.h.b16 %v4313
    %v4395 = vunpack.c.l.b16 %v4314
    %v4396 = vunpack.c.h.b16 %v4314
    %v4397 = vunpack.c.l.b16 %v4315
    %v4398 = vunpack.c.h.b16 %v4315
    %v4399 = vunpack.c.l.b16 %v4316
    %v4400 = vunpack.c.h.b16 %v4316
    %v4401 = vunpack.c.l.b16 %v4317
    %v4402 = vunpack.c.h.b16 %v4317
    %v4403 = vunpack.c.l.b16 %v4318
    %v4404 = vunpack.c.h.b16 %v4318
    %v4405 = vunpack.c.l.b16 %v4319
    %v4406 = vunpack.c.h.b16 %v4319
    %v4407 = vunpack.c.l.b16 %v4320
    %v4408 = vunpack.c.h.b16 %v4320
    %v4409 = vunpack.c.l.b16 %v4321
    %v4410 = vunpack.c.h.b16 %v4321
    %v4411 = vunpack.c.l.b16 %v4322
    %v4412 = vunpack.c.h.b16 %v4322
    %v4413 = vunpack.c.l.b16 %v4323
    %v4414 = vunpack.c.h.b16 %v4323
    %v4415 = vunpack.c.l.b16 %v4324
    %v4416 = vunpack.c.h.b16 %v4324
    %v4417 = vunpack.c.l.b16 %v4325
    %v4418 = vunpack.c.h.b16 %v4325
    %v4419 = vunpack.c.l.b16 %v4326
    %v4420 = vunpack.c.h.b16 %v4326
    %v4421 = vunpack.c.l.b16 %v4327
    %v4422 = vunpack.c.h.b16 %v4327
    %v4423 = vunpack.c.l.b16 %v4328
    %v4424 = vunpack.c.h.b16 %v4328
    %v4425 = vpack.c.b16 %v4363, %v4361
    %v4426 = vpack.c.b16 %v4364, %v4362
    %v4427 = vpack.c.b16 %v4367, %v4365
    %v4428 = vpack.c.b16 %v4368, %v4366
    %v4429 = vpack.c.b16 %v4371, %v4369
    %v4430 = vpack.c.b16 %v4372, %v4370
    %v4431 = vpack.c.b16 %v4375, %v4373
    %v4432 = vpack.c.b16 %v4376, %v4374
    %v4433 = vpack.c.b16 %v4379, %v4377
    %v4434 = vpack.c.b16 %v4380, %v4378
    %v4435 = vpack.c.b16 %v4383, %v4381
    %v4436 = vpack.c.b16 %v4384, %v4382
    %v4437 = vpack.c.b16 %v4387, %v4385
    %v4438 = vpack.c.b16 %v4388, %v4386
    %v4439 = vpack.c.b16 %v4391, %v4389
    %v4440 = vpack.c.b16 %v4392, %v4390
    %v4441 = vpack.c.b16 %v4395, %v4393
    %v4442 = vpack.c.b16 %v4396, %v4394
    %v4443 = vpack.c.b16 %v4399, %v4397
    %v4444 = vpack.c.b16 %v4400, %v4398
    %v4445 = vpack.c.b16 %v4403, %v4401
    %v4446 = vpack.c.b16 %v4404, %v4402
    %v4447 = vpack.c.b16 %v4407, %v4405
    %v4448 = vpack.c.b16 %v4408, %v4406
    %v4449 = vpack.c.b16 %v4411, %v4409
    %v4450 = vpack.c.b16 %v4412, %v4410
    %v4451 = vpack.c.b16 %v4415, %v4413
    %v4452 = vpack.c.b16 %v4416, %v4414
    %v4453 = vpack.c.b16 %v4419, %v4417
    %v4454 = vpack.c.b16 %v4420, %v4418
    %v4455 = vpack.c.b16 %v4423, %v4421
    %v4456 = vpack.c.b16 %v4424, %v4422
    %4489 = vmatprep.subr.bf16.mxu0 %v4440
    %4490 = vmatpush1.bf16.msra.mxu0 %v4439
    %4491 = vmatprep.subr.bf16.mxu0 %v4438
    %4492 = vmatpush1.bf16.msra.mxu0 %v4437
    %4493 = vmatprep.subr.bf16.mxu0 %v4436
    %4494 = vmatpush1.bf16.msra.mxu0 %v4435
    %4495 = vmatprep.subr.bf16.mxu0 %v4434
    %4496 = vmatpush1.bf16.msra.mxu0 %v4433
    %4497 = vmatprep.subr.bf16.mxu0 %v4432
    %4498 = vmatpush1.bf16.msra.mxu0 %v4431
    %4499 = vmatprep.subr.bf16.mxu0 %v4430
    %4500 = vmatpush1.bf16.msra.mxu0 %v4429
    %4501 = vmatprep.subr.bf16.mxu0 %v4428
    %4502 = vmatpush1.bf16.msra.mxu0 %v4427
    %4503 = vmatprep.subr.bf16.mxu0 %v4426
    %4504 = vmatpush1.bf16.msra.mxu0 %v4425
    %4505 = vmatprep.subr.bf16.mxu0 %v4456
    %4506 = vmatpush2.bf16.msra.mxu0 %v4455
    %4507 = vmatprep.subr.bf16.mxu0 %v4454
    %4508 = vmatpush2.bf16.msra.mxu0 %v4453
    %4509 = vmatprep.subr.bf16.mxu0 %v4452
    %4510 = vmatpush2.bf16.msra.mxu0 %v4451
    %4511 = vmatprep.subr.bf16.mxu0 %v4450
    %4512 = vmatpush2.bf16.msra.mxu0 %v4449
    %4513 = vmatprep.subr.bf16.mxu0 %v4448
    %4514 = vmatpush2.bf16.msra.mxu0 %v4447
    %4515 = vmatprep.subr.bf16.mxu0 %v4446
    %4516 = vmatpush2.bf16.msra.mxu0 %v4445
    %4517 = vmatprep.subr.bf16.mxu0 %v4444
    %4518 = vmatpush2.bf16.msra.mxu0 %v4443
    %4519 = vmatprep.subr.bf16.mxu0 %v4442
    %4520 = vmatpush2.bf16.msra.mxu0 %v4441
    %4521 = vmatprep.mubr.bf16.mxu0 %v4296
    %4522 = vmatmul.mubr.bf16.gmra.mxu0 %v4295
    %v4523 = vpop.f32.mrf.mxu0
    %v4524 = vadd.f32 0.0, %v4523
    %v4525 = vpop.f32.mrf.mxu0
    %v4526 = vadd.f32 0.0, %v4525
    %v4527 = vpop.f32.mrf.mxu0
    %v4528 = vpop.f32.mrf.mxu0
    %4529 = vdwg.mxu0
    %4530 = vst [vmem:[#allocation11] sm:$0xff] %v4524
    %4531 = vst [vmem:[#allocation11 + $0x8] sm:$0xff] %v4526
    // Predicated region
    $region70: #{qwen_forward.1} parent=1 // pred_check
      _
    $region71: #{qwen_forward.1} parent=1 // pred_check_branch
      %4533 = sbr.rel (0) target = $region73
    $region72: #{qwen_forward.1} parent=1 // pred_region
      %s4535 = ssub.s32 256, 256
      %4536 = vsyncadd [#allocation4], %s4535
      %s4538 = sshll.u32 [#allocation11], 4
      %s4539 = int_to_ptr.vmem [resolvable:$true] %s4538
      %4541 = dma.vmem_to_hbm [thread:$0]  %s4539, 256, %s12, [#allocation4]
    $region73: #{qwen_forward.1} parent=1 // pred_fallthru
      _
    // Predicated region
    $region74: #{qwen_forward.1} parent=1 // pred_check
      _
    $region75: #{qwen_forward.1} parent=1 // pred_check_branch
      %4543 = sbr.rel (0) target = $region77
    $region76: #{qwen_forward.1} parent=1 // pred_region
      %4544 = dma.done [#allocation4], 256
    $region77: #{qwen_forward.1} parent=1 // pred_fallthru
      _
    %4545 = vsyncpa [#allocation3], 1
    %4546 = vsyncpa [#allocation6], 1
    %4547 = vsyncpa [#allocation9], 1
    %4548 = vsyncpa [#allocation4], 1

</llo_original>
